<compile_context>
chip_gen: v7x
topology: tpu7x:2x2x1
jax: 0.10.0
libtpu: 0.0.40
codegen_flags: <defaults>
</compile_context>

<pallas_src>
import functools

import jax
import jax.numpy as jnp
from jax.experimental import pallas as pl
from jax.experimental.pallas import tpu as pltpu

_LANES = 128


# ----------------------------------------------------------------------------
# Pallas kernels
# ----------------------------------------------------------------------------
def _conv_relu_pool_kernel(x_ref, w_ref, b_ref, o_ref, y_ref):
    """Fused im2col-matmul + bias + ReLU + 2x2 stride-2 max-pool.

    x_ref: (bt*OH*OW, Kp)     im2col patches (K zero-padded)
    w_ref: (Kp, 128)          weight matrix (N zero-padded to 128 lanes)
    b_ref: (1, 128)           bias (zero-padded)
    o_ref: (bt*OH//2, OW//2, 128) pooled output block
    y_ref: (bt*OH, OW, 128)   VMEM scratch holding the pre-pool activation
    """
    y = jnp.dot(x_ref[...], w_ref[...], preferred_element_type=jnp.float32)
    y = jnp.maximum(y + b_ref[...], 0.0)

    rows, ow, n = y_ref.shape
    # OW is a multiple of 8 here (24 / 8), so this reshape is tile-aligned.
    y_ref[...] = y.reshape(rows, ow, n)

    hp, wp = o_ref.shape[0], o_ref.shape[1]       # rows // 2, ow // 2
    p00 = y_ref[pl.ds(0, hp, 2), pl.ds(0, wp, 2), :]
    p01 = y_ref[pl.ds(0, hp, 2), pl.ds(1, wp, 2), :]
    p10 = y_ref[pl.ds(1, hp, 2), pl.ds(0, wp, 2), :]
    p11 = y_ref[pl.ds(1, hp, 2), pl.ds(1, wp, 2), :]
    o_ref[...] = jnp.maximum(jnp.maximum(p00, p01), jnp.maximum(p10, p11))


def _tail_kernel(x_ref, w3_ref, b3_ref, w4_ref, b4_ref, w5_ref, b5_ref, o_ref,
                 *, n_classes):
    """Fused conv3 (== FC over the flattened 4x4x128) + ReLU + fc1 + ReLU
    + fc2 + softmax.  All intermediates stay in VMEM/registers."""
    h = jnp.dot(x_ref[...], w3_ref[...], preferred_element_type=jnp.float32)
    h = jnp.maximum(h + b3_ref[...], 0.0)
    h = jnp.dot(h, w4_ref[...], preferred_element_type=jnp.float32)
    h = jnp.maximum(h + b4_ref[...], 0.0)
    y = jnp.dot(h, w5_ref[...], preferred_element_type=jnp.float32) + b5_ref[...]

    # Mask the padded logit lanes so they do not corrupt the normalization.
    lane = jax.lax.broadcasted_iota(jnp.int32, y.shape, 1)
    y = jnp.where(lane < n_classes, y, -jnp.inf)
    y = y - jnp.max(y, axis=-1, keepdims=True)
    e = jnp.exp(y)
    denom = jnp.sum(e, axis=-1, keepdims=True)
    o_ref[...] = e * pl.reciprocal(denom, approx=True)


# ----------------------------------------------------------------------------
# Pallas wrappers (grid / BlockSpec plumbing)
# ----------------------------------------------------------------------------
def _largest_divisor(n, target):
    t = min(n, target)
    while t > 1 and n % t != 0:
        t -= 1
    return max(t, 1)


def _row_tile(n, target):
    # Second-minor block dim must be a multiple of 8 or equal the full dim.
    t = min(n, target)
    t -= t % 8
    while t >= 8:
        if n % t == 0:
            return t
        t -= 8
    return n


def _conv_relu_pool(patches, w, b, *, batch, bt, oh, ow):
    k = patches.shape[1]
    hp, wp = oh // 2, ow // 2
    return pl.pallas_call(
        _conv_relu_pool_kernel,
        out_shape=jax.ShapeDtypeStruct((batch * hp, wp, _LANES), jnp.float32),
        grid=(batch // bt,),
        in_specs=[
            pl.BlockSpec((bt * oh * ow, k), lambda i: (i, 0)),
            pl.BlockSpec((k, _LANES), lambda i: (0, 0)),
            pl.BlockSpec((1, _LANES), lambda i: (0, 0)),
        ],
        out_specs=pl.BlockSpec((bt * hp, wp, _LANES), lambda i: (i, 0, 0)),
        scratch_shapes=[pltpu.VMEM((bt * oh, ow, _LANES), jnp.float32)],
        compiler_params=pltpu.CompilerParams(
            dimension_semantics=("parallel",)),
    )(patches, w, b)


def _tail(feats, p, *, batch, bt, n_classes=10):
    kin = feats.shape[1]
    kernel = functools.partial(_tail_kernel, n_classes=n_classes)
    return pl.pallas_call(
        kernel,
        out_shape=jax.ShapeDtypeStruct((batch, _LANES), jnp.float32),
        grid=(batch // bt,),
        in_specs=[
            pl.BlockSpec((bt, kin), lambda i: (i, 0)),
            pl.BlockSpec((kin, _LANES), lambda i: (0, 0)),
            pl.BlockSpec((1, _LANES), lambda i: (0, 0)),
            pl.BlockSpec((_LANES, _LANES), lambda i: (0, 0)),
            pl.BlockSpec((1, _LANES), lambda i: (0, 0)),
            pl.BlockSpec((_LANES, _LANES), lambda i: (0, 0)),
            pl.BlockSpec((1, _LANES), lambda i: (0, 0)),
        ],
        out_specs=pl.BlockSpec((bt, _LANES), lambda i: (i, 0)),
        compiler_params=pltpu.CompilerParams(
            dimension_semantics=("parallel",)),
    )(feats, p["w3"], p["b3"], p["w4"], p["b4"], p["w5"], p["b5"])


# ----------------------------------------------------------------------------
# Glue: im2col, padding, parameter preparation
# ----------------------------------------------------------------------------
def _im2col(x, k, cin=None):
    # TODO(synk): patch extraction stays as XLA glue; moving im2col fully into
    # the conv kernel (DMA the NHWC block, slice in VMEM) would cut the
    # patch-matrix HBM round trip further.
    bsz, h, w, c = x.shape
    cin = c if cin is None else cin
    oh, ow = h - k + 1, w - k + 1
    cols = []
    for dy in range(k):
        for dx in range(k):
            cols.append(x[:, dy:dy + oh, dx:dx + ow, :cin])
    patches = jnp.concatenate(cols, axis=-1)          # (B, OH, OW, k*k*cin)
    return patches.reshape(bsz * oh * ow, k * k * cin)


def _pad_last(x, n):
    pad = n - x.shape[-1]
    if pad <= 0:
        return x
    return jnp.pad(x, [(0, 0)] * (x.ndim - 1) + [(0, pad)])


def init_params(key):
    """Deterministic parameters, PyTorch-style shapes and uniform init."""
    def unif(k, shape, fan_in):
        bound = 1.0 / jnp.sqrt(float(fan_in))
        return jax.random.uniform(k, shape, jnp.float32, -bound, bound)

    ks = jax.random.split(key, 10)
    return {
        "conv1_w": unif(ks[0], (16, 1, 5, 5), 1 * 5 * 5),
        "conv1_b": unif(ks[1], (16,), 1 * 5 * 5),
        "conv2_w": unif(ks[2], (32, 16, 5, 5), 16 * 5 * 5),
        "conv2_b": unif(ks[3], (32,), 16 * 5 * 5),
        "conv3_w": unif(ks[4], (100, 32, 4, 4), 32 * 4 * 4),
        "conv3_b": unif(ks[5], (100,), 32 * 4 * 4),
        "fc1_w": unif(ks[6], (100, 100), 100),     # (out, in), PyTorch layout
        "fc1_b": unif(ks[7], (100,), 100),
        "fc2_w": unif(ks[8], (10, 100), 100),
        "fc2_b": unif(ks[9], (10,), 100),
    }


def prepare_params(params):
    """One-time conversion of PyTorch-layout weights into padded, lane-dense
    matmul operands (kept outside the jitted forward)."""
    def pad2(m, rows, cols):
        return jnp.pad(m, ((0, rows - m.shape[0]), (0, cols - m.shape[1])))

    def bias(v):
        return _pad_last(v, _LANES).reshape(1, _LANES)

    # Conv weights: (Cout, Cin, K, K) -> (K, K, Cin, Cout) -> (K*K*Cin, Cout),
    # (dy, dx, cin) row order matches _im2col's patch layout.
    w1 = jnp.transpose(params["conv1_w"], (2, 3, 1, 0)).reshape(25, 16)
    w2 = jnp.transpose(params["conv2_w"], (2, 3, 1, 0)).reshape(400, 32)
    # conv3: pad Cin 32 -> 128 so its rows line up with the 128-channel-padded
    # activations coming out of the conv2 kernel (flattened 4x4x128).
    w3 = jnp.transpose(params["conv3_w"], (2, 3, 1, 0))            # (4,4,32,100)
    w3 = jnp.pad(w3, ((0, 0), (0, 0), (0, _LANES - 32), (0, 0)))
    w3 = w3.reshape(4 * 4 * _LANES, 100)

    return {
        "w1": pad2(w1, 32, _LANES), "b1": bias(params["conv1_b"]),
        "w2": pad2(w2, 512, _LANES), "b2": bias(params["conv2_b"]),
        "w3": pad2(w3, 4 * 4 * _LANES, _LANES), "b3": bias(params["conv3_b"]),
        "w4": pad2(params["fc1_w"].T, _LANES, _LANES), "b4": bias(params["fc1_b"]),
        "w5": pad2(params["fc2_w"].T, _LANES, _LANES), "b5": bias(params["fc2_b"]),
    }


# ----------------------------------------------------------------------------
# Forward pass (Pallas hot path)
# ----------------------------------------------------------------------------
@jax.jit
def dnn_forward(x_nchw, p):
    bsz = x_nchw.shape[0]
    x = jnp.transpose(x_nchw, (0, 2, 3, 1))                # (B, 28, 28, 1)

    # conv1 (1->16, k5) + ReLU + pool 2x2    [K 25->32, N 16->128]
    pat = _pad_last(_im2col(x, 5), 32)                     # (B*576, 32)
    bt1 = _largest_divisor(bsz, 8)
    x = _conv_relu_pool(pat, p["w1"], p["b1"], batch=bsz, bt=bt1, oh=24, ow=24)
    x = x.reshape(bsz, 12, 12, _LANES)                     # channels 16.. are 0

    # conv2 (16->32, k5) + ReLU + pool 2x2   [K 400->512, N 32->128]
    pat = _pad_last(_im2col(x, 5, cin=16), 512)            # (B*64, 512)
    bt2 = _largest_divisor(bsz, 16)
    x = _conv_relu_pool(pat, p["w2"], p["b2"], batch=bsz, bt=bt2, oh=8, ow=8)

    # conv3 (4x4 full-extent) + fc1 + fc2 + softmax, fused in one kernel.
    feats = x.reshape(bsz, 4 * 4 * _LANES)                 # contiguous reshape
    btt = _row_tile(bsz, 256)
    probs = _tail(feats, p, batch=bsz, bt=btt)             # (B, 128)
    return probs[:, :10]


# ----------------------------------------------------------------------------
# Pure-JAX reference (sanity check)
# ----------------------------------------------------------------------------
def dnn_reference(x, params):
    dn = ("NCHW", "OIHW", "NCHW")
    conv = functools.partial(jax.lax.conv_general_dilated,
                             window_strides=(1, 1), padding="VALID",
                             dimension_numbers=dn,
                             precision=jax.lax.Precision.HIGHEST)
    x = jax.nn.relu(conv(x, params["conv1_w"]) + params["conv1_b"][None, :, None, None])
    x = jax.lax.reduce_window(x, -jnp.inf, jax.lax.max, (1, 1, 2, 2), (1, 1, 2, 2), "VALID")
    x = jax.nn.relu(conv(x, params["conv2_w"]) + params["conv2_b"][None, :, None, None])
    x = jax.lax.reduce_window(x, -jnp.inf, jax.lax.max, (1, 1, 2, 2), (1, 1, 2, 2), "VALID")
    x = jax.nn.relu(conv(x, params["conv3_w"]) + params["conv3_b"][None, :, None, None])
    x = x.reshape(-1, 100)
    x = jax.nn.relu(x @ params["fc1_w"].T + params["fc1_b"])
    x = x @ params["fc2_w"].T + params["fc2_b"]
    return jax.nn.softmax(x, axis=1)


if __name__ == "__main__":
    key = jax.random.PRNGKey(0)
    k_params, k_x = jax.random.split(key)
    params = init_params(k_params)
    prepped = prepare_params(params)        # weight layouts prepared once

    # MNIST-shaped input (the `view(-1, 100)` forces 28x28x1 inputs).
    x = jax.random.normal(k_x, (2, 1, 28, 28), dtype=jnp.float32)

    out = jax.block_until_ready(dnn_forward(x, prepped))
    ref = dnn_reference(x, params)

    assert out.shape == (2, 10)
    assert jnp.allclose(jnp.sum(out, axis=1), 1.0, atol=5e-3)
    assert jnp.allclose(out, ref, atol=5e-3, rtol=5e-3)

    print("KERNEL_OK")
</pallas_src>

<mosaic_0001>
module attributes {stable_mosaic.version = 11 : i64} {
  func.func @_conv_relu_pool_kernel(%arg0: i32, %arg1: memref<1152x32xf32, #tpu.memory_space<vmem>>, %arg2: memref<32x128xf32, #tpu.memory_space<vmem>>, %arg3: memref<1x128xf32, #tpu.memory_space<vmem>>, %arg4: memref<24x12x128xf32, #tpu.memory_space<vmem>>, %arg5: memref<48x24x128xf32, #tpu.memory_space<vmem>>) attributes {dimension_semantics = [#tpu.dimension_semantics<parallel>], iteration_bounds = array<i64: 1>, scalar_prefetch = 0 : i64, scratch_operands = 1 : i64, tpu.core_type = #tpu.core_type<tc>, window_params = [{transform_indices = @transform_0, window_bounds = array<i64: 1152, 32>}, {pipeline_mode = #tpu.pipeline_mode<synchronous>, transform_indices = @transform_1, window_bounds = array<i64: 32, 128>}, {pipeline_mode = #tpu.pipeline_mode<synchronous>, transform_indices = @transform_2, window_bounds = array<i64: 1, 128>}, {transform_indices = @transform_3, window_bounds = array<i64: 24, 12, 128>}]} {
    %c0 = arith.constant 0 : index
    %c0_0 = arith.constant 0 : index
    %0 = vector.load %arg1[%c0, %c0_0] : memref<1152x32xf32, #tpu.memory_space<vmem>>, vector<1152x32xf32>
    %c0_1 = arith.constant 0 : index
    %c0_2 = arith.constant 0 : index
    %1 = vector.load %arg2[%c0_1, %c0_2] : memref<32x128xf32, #tpu.memory_space<vmem>>, vector<32x128xf32>
    %cst = arith.constant dense<0.000000e+00> : vector<1152x128xf32>
    %2 = tpu.matmul %0, %1, %cst {dimension_numbers = #tpu.dot_dimension_numbers<[1], [0], [0], [1], [0, 0, 1, 1], [], []>} : vector<1152x32xf32>, vector<32x128xf32>, vector<1152x128xf32> -> vector<1152x128xf32>
    %c0_3 = arith.constant 0 : index
    %c0_4 = arith.constant 0 : index
    %3 = vector.load %arg3[%c0_3, %c0_4] : memref<1x128xf32, #tpu.memory_space<vmem>>, vector<1x128xf32>
    %4 = vector.broadcast %3 : vector<1x128xf32> to vector<1152x128xf32>
    %5 = arith.addf %2, %4 : vector<1152x128xf32>
    %cst_5 = arith.constant 0.000000e+00 : f32
    %6 = vector.broadcast %cst_5 : f32 to vector<1152x128xf32>
    %7 = arith.maximumf %5, %6 : vector<1152x128xf32>
    %8 = vector.shape_cast %7 : vector<1152x128xf32> to vector<48x24x128xf32>
    %c0_6 = arith.constant 0 : index
    %c0_7 = arith.constant 0 : index
    %c0_8 = arith.constant 0 : index
    %9 = vector.load %arg5[%c0_6, %c0_7, %c0_8] : memref<48x24x128xf32, #tpu.memory_space<vmem>>, vector<48x24x128xf32>
    tpu.vector_store %arg5[%c0_6, %c0_7, %c0_8], %8 {strides = array<i32>} : memref<48x24x128xf32, #tpu.memory_space<vmem>>, vector<48x24x128xf32>,
    %c0_9 = arith.constant 0 : index
    %c0_10 = arith.constant 0 : index
    %c0_11 = arith.constant 0 : index
    %10 = tpu.strided_load %arg5[%c0_9, %c0_10, %c0_11] {strides = array<i32: 2, 2, 1>} : memref<48x24x128xf32, #tpu.memory_space<vmem>>, vector<24x12x128xf32>
    %c0_12 = arith.constant 0 : index
    %c1 = arith.constant 1 : index
    %c0_13 = arith.constant 0 : index
    %11 = tpu.strided_load %arg5[%c0_12, %c1, %c0_13] {strides = array<i32: 2, 2, 1>} : memref<48x24x128xf32, #tpu.memory_space<vmem>>, vector<24x12x128xf32>
    %c1_14 = arith.constant 1 : index
    %c0_15 = arith.constant 0 : index
    %c0_16 = arith.constant 0 : index
    %12 = tpu.strided_load %arg5[%c1_14, %c0_15, %c0_16] {strides = array<i32: 2, 2, 1>} : memref<48x24x128xf32, #tpu.memory_space<vmem>>, vector<24x12x128xf32>
    %c1_17 = arith.constant 1 : index
    %c1_18 = arith.constant 1 : index
    %c0_19 = arith.constant 0 : index
    %13 = tpu.strided_load %arg5[%c1_17, %c1_18, %c0_19] {strides = array<i32: 2, 2, 1>} : memref<48x24x128xf32, #tpu.memory_space<vmem>>, vector<24x12x128xf32>
    %14 = arith.maximumf %10, %11 : vector<24x12x128xf32>
    %15 = arith.maximumf %12, %13 : vector<24x12x128xf32>
    %16 = arith.maximumf %14, %15 : vector<24x12x128xf32>
    %c0_20 = arith.constant 0 : index
    %c0_21 = arith.constant 0 : index
    %c0_22 = arith.constant 0 : index
    %17 = vector.load %arg4[%c0_20, %c0_21, %c0_22] : memref<24x12x128xf32, #tpu.memory_space<vmem>>, vector<24x12x128xf32>
    tpu.vector_store %arg4[%c0_20, %c0_21, %c0_22], %16 {strides = array<i32>} : memref<24x12x128xf32, #tpu.memory_space<vmem>>, vector<24x12x128xf32>,
    return
  }
  func.func @transform_0(%arg0: i32) -> (i32, i32) {
    %c0_i32 = arith.constant 0 : i32
    %c0_i32_0 = arith.constant 0 : i32
    return %arg0, %c0_i32 : i32, i32
  }
  func.func @transform_1(%arg0: i32) -> (i32, i32) {
    %c0_i32 = arith.constant 0 : i32
    %c0_i32_0 = arith.constant 0 : i32
    %c0_i32_1 = arith.constant 0 : i32
    return %c0_i32, %c0_i32_0 : i32, i32
  }
  func.func @transform_2(%arg0: i32) -> (i32, i32) {
    %c0_i32 = arith.constant 0 : i32
    %c0_i32_0 = arith.constant 0 : i32
    %c0_i32_1 = arith.constant 0 : i32
    return %c0_i32, %c0_i32_0 : i32, i32
  }
  func.func @transform_3(%arg0: i32) -> (i32, i32, i32) {
    %c0_i32 = arith.constant 0 : i32
    %c0_i32_0 = arith.constant 0 : i32
    %c0_i32_1 = arith.constant 0 : i32
    return %arg0, %c0_i32, %c0_i32_0 : i32, i32, i32
  }
}

module attributes {stable_mosaic.version = 11 : i64} {
  func.func @_conv_relu_pool_kernel(%arg0: i32, %arg1: memref<128x512xf32, #tpu.memory_space<vmem>>, %arg2: memref<512x128xf32, #tpu.memory_space<vmem>>, %arg3: memref<1x128xf32, #tpu.memory_space<vmem>>, %arg4: memref<8x4x128xf32, #tpu.memory_space<vmem>>, %arg5: memref<16x8x128xf32, #tpu.memory_space<vmem>>) attributes {dimension_semantics = [#tpu.dimension_semantics<parallel>], iteration_bounds = array<i64: 1>, scalar_prefetch = 0 : i64, scratch_operands = 1 : i64, tpu.core_type = #tpu.core_type<tc>, window_params = [{transform_indices = @transform_0, window_bounds = array<i64: 128, 512>}, {pipeline_mode = #tpu.pipeline_mode<synchronous>, transform_indices = @transform_1, window_bounds = array<i64: 512, 128>}, {pipeline_mode = #tpu.pipeline_mode<synchronous>, transform_indices = @transform_2, window_bounds = array<i64: 1, 128>}, {transform_indices = @transform_3, window_bounds = array<i64: 8, 4, 128>}]} {
    %c0 = arith.constant 0 : index
    %c0_0 = arith.constant 0 : index
    %0 = vector.load %arg1[%c0, %c0_0] : memref<128x512xf32, #tpu.memory_space<vmem>>, vector<128x512xf32>
    %c0_1 = arith.constant 0 : index
    %c0_2 = arith.constant 0 : index
    %1 = vector.load %arg2[%c0_1, %c0_2] : memref<512x128xf32, #tpu.memory_space<vmem>>, vector<512x128xf32>
    %cst = arith.constant dense<0.000000e+00> : vector<128x128xf32>
    %2 = tpu.matmul %0, %1, %cst {dimension_numbers = #tpu.dot_dimension_numbers<[1], [0], [0], [1], [0, 0, 1, 1], [], []>} : vector<128x512xf32>, vector<512x128xf32>, vector<128x128xf32> -> vector<128x128xf32>
    %c0_3 = arith.constant 0 : index
    %c0_4 = arith.constant 0 : index
    %3 = vector.load %arg3[%c0_3, %c0_4] : memref<1x128xf32, #tpu.memory_space<vmem>>, vector<1x128xf32>
    %4 = vector.broadcast %3 : vector<1x128xf32> to vector<128x128xf32>
    %5 = arith.addf %2, %4 : vector<128x128xf32>
    %cst_5 = arith.constant 0.000000e+00 : f32
    %6 = vector.broadcast %cst_5 : f32 to vector<128x128xf32>
    %7 = arith.maximumf %5, %6 : vector<128x128xf32>
    %8 = vector.shape_cast %7 : vector<128x128xf32> to vector<16x8x128xf32>
    %c0_6 = arith.constant 0 : index
    %c0_7 = arith.constant 0 : index
    %c0_8 = arith.constant 0 : index
    %9 = vector.load %arg5[%c0_6, %c0_7, %c0_8] : memref<16x8x128xf32, #tpu.memory_space<vmem>>, vector<16x8x128xf32>
    tpu.vector_store %arg5[%c0_6, %c0_7, %c0_8], %8 {strides = array<i32>} : memref<16x8x128xf32, #tpu.memory_space<vmem>>, vector<16x8x128xf32>,
    %c0_9 = arith.constant 0 : index
    %c0_10 = arith.constant 0 : index
    %c0_11 = arith.constant 0 : index
    %10 = tpu.strided_load %arg5[%c0_9, %c0_10, %c0_11] {strides = array<i32: 2, 2, 1>} : memref<16x8x128xf32, #tpu.memory_space<vmem>>, vector<8x4x128xf32>
    %c0_12 = arith.constant 0 : index
    %c1 = arith.constant 1 : index
    %c0_13 = arith.constant 0 : index
    %11 = tpu.strided_load %arg5[%c0_12, %c1, %c0_13] {strides = array<i32: 2, 2, 1>} : memref<16x8x128xf32, #tpu.memory_space<vmem>>, vector<8x4x128xf32>
    %c1_14 = arith.constant 1 : index
    %c0_15 = arith.constant 0 : index
    %c0_16 = arith.constant 0 : index
    %12 = tpu.strided_load %arg5[%c1_14, %c0_15, %c0_16] {strides = array<i32: 2, 2, 1>} : memref<16x8x128xf32, #tpu.memory_space<vmem>>, vector<8x4x128xf32>
    %c1_17 = arith.constant 1 : index
    %c1_18 = arith.constant 1 : index
    %c0_19 = arith.constant 0 : index
    %13 = tpu.strided_load %arg5[%c1_17, %c1_18, %c0_19] {strides = array<i32: 2, 2, 1>} : memref<16x8x128xf32, #tpu.memory_space<vmem>>, vector<8x4x128xf32>
    %14 = arith.maximumf %10, %11 : vector<8x4x128xf32>
    %15 = arith.maximumf %12, %13 : vector<8x4x128xf32>
    %16 = arith.maximumf %14, %15 : vector<8x4x128xf32>
    %c0_20 = arith.constant 0 : index
    %c0_21 = arith.constant 0 : index
    %c0_22 = arith.constant 0 : index
    %17 = vector.load %arg4[%c0_20, %c0_21, %c0_22] : memref<8x4x128xf32, #tpu.memory_space<vmem>>, vector<8x4x128xf32>
    tpu.vector_store %arg4[%c0_20, %c0_21, %c0_22], %16 {strides = array<i32>} : memref<8x4x128xf32, #tpu.memory_space<vmem>>, vector<8x4x128xf32>,
    return
  }
  func.func @transform_0(%arg0: i32) -> (i32, i32) {
    %c0_i32 = arith.constant 0 : i32
    %c0_i32_0 = arith.constant 0 : i32
    return %arg0, %c0_i32 : i32, i32
  }
  func.func @transform_1(%arg0: i32) -> (i32, i32) {
    %c0_i32 = arith.constant 0 : i32
    %c0_i32_0 = arith.constant 0 : i32
    %c0_i32_1 = arith.constant 0 : i32
    return %c0_i32, %c0_i32_0 : i32, i32
  }
  func.func @transform_2(%arg0: i32) -> (i32, i32) {
    %c0_i32 = arith.constant 0 : i32
    %c0_i32_0 = arith.constant 0 : i32
    %c0_i32_1 = arith.constant 0 : i32
    return %c0_i32, %c0_i32_0 : i32, i32
  }
  func.func @transform_3(%arg0: i32) -> (i32, i32, i32) {
    %c0_i32 = arith.constant 0 : i32
    %c0_i32_0 = arith.constant 0 : i32
    %c0_i32_1 = arith.constant 0 : i32
    return %arg0, %c0_i32, %c0_i32_0 : i32, i32, i32
  }
}

module attributes {stable_mosaic.version = 11 : i64} {
  func.func @_tail_kernel(%arg0: i32, %arg1: memref<2x2048xf32, #tpu.memory_space<vmem>>, %arg2: memref<2048x128xf32, #tpu.memory_space<vmem>>, %arg3: memref<1x128xf32, #tpu.memory_space<vmem>>, %arg4: memref<128x128xf32, #tpu.memory_space<vmem>>, %arg5: memref<1x128xf32, #tpu.memory_space<vmem>>, %arg6: memref<128x128xf32, #tpu.memory_space<vmem>>, %arg7: memref<1x128xf32, #tpu.memory_space<vmem>>, %arg8: memref<2x128xf32, #tpu.memory_space<vmem>>) attributes {dimension_semantics = [#tpu.dimension_semantics<parallel>], iteration_bounds = array<i64: 1>, scalar_prefetch = 0 : i64, scratch_operands = 0 : i64, tpu.core_type = #tpu.core_type<tc>, window_params = [{transform_indices = @transform_0, window_bounds = array<i64: 2, 2048>}, {pipeline_mode = #tpu.pipeline_mode<synchronous>, transform_indices = @transform_1, window_bounds = array<i64: 2048, 128>}, {pipeline_mode = #tpu.pipeline_mode<synchronous>, transform_indices = @transform_2, window_bounds = array<i64: 1, 128>}, {pipeline_mode = #tpu.pipeline_mode<synchronous>, transform_indices = @transform_3, window_bounds = array<i64: 128, 128>}, {pipeline_mode = #tpu.pipeline_mode<synchronous>, transform_indices = @transform_4, window_bounds = array<i64: 1, 128>}, {pipeline_mode = #tpu.pipeline_mode<synchronous>, transform_indices = @transform_5, window_bounds = array<i64: 128, 128>}, {pipeline_mode = #tpu.pipeline_mode<synchronous>, transform_indices = @transform_6, window_bounds = array<i64: 1, 128>}, {transform_indices = @transform_7, window_bounds = array<i64: 2, 128>}]} {
    %c0 = arith.constant 0 : index
    %c0_0 = arith.constant 0 : index
    %0 = vector.load %arg1[%c0, %c0_0] : memref<2x2048xf32, #tpu.memory_space<vmem>>, vector<2x2048xf32>
    %c0_1 = arith.constant 0 : index
    %c0_2 = arith.constant 0 : index
    %1 = vector.load %arg2[%c0_1, %c0_2] : memref<2048x128xf32, #tpu.memory_space<vmem>>, vector<2048x128xf32>
    %cst = arith.constant dense<0.000000e+00> : vector<2x128xf32>
    %2 = tpu.matmul %0, %1, %cst {dimension_numbers = #tpu.dot_dimension_numbers<[1], [0], [0], [1], [0, 0, 1, 1], [], []>} : vector<2x2048xf32>, vector<2048x128xf32>, vector<2x128xf32> -> vector<2x128xf32>
    %c0_3 = arith.constant 0 : index
    %c0_4 = arith.constant 0 : index
    %3 = vector.load %arg3[%c0_3, %c0_4] : memref<1x128xf32, #tpu.memory_space<vmem>>, vector<1x128xf32>
    %4 = vector.broadcast %3 : vector<1x128xf32> to vector<2x128xf32>
    %5 = arith.addf %2, %4 : vector<2x128xf32>
    %cst_5 = arith.constant 0.000000e+00 : f32
    %6 = vector.broadcast %cst_5 : f32 to vector<2x128xf32>
    %7 = arith.maximumf %5, %6 : vector<2x128xf32>
    %c0_6 = arith.constant 0 : index
    %c0_7 = arith.constant 0 : index
    %8 = vector.load %arg4[%c0_6, %c0_7] : memref<128x128xf32, #tpu.memory_space<vmem>>, vector<128x128xf32>
    %cst_8 = arith.constant dense<0.000000e+00> : vector<2x128xf32>
    %9 = tpu.matmul %7, %8, %cst_8 {dimension_numbers = #tpu.dot_dimension_numbers<[1], [0], [0], [1], [0, 0, 1, 1], [], []>} : vector<2x128xf32>, vector<128x128xf32>, vector<2x128xf32> -> vector<2x128xf32>
    %c0_9 = arith.constant 0 : index
    %c0_10 = arith.constant 0 : index
    %10 = vector.load %arg5[%c0_9, %c0_10] : memref<1x128xf32, #tpu.memory_space<vmem>>, vector<1x128xf32>
    %11 = vector.broadcast %10 : vector<1x128xf32> to vector<2x128xf32>
    %12 = arith.addf %9, %11 : vector<2x128xf32>
    %cst_11 = arith.constant 0.000000e+00 : f32
    %13 = vector.broadcast %cst_11 : f32 to vector<2x128xf32>
    %14 = arith.maximumf %12, %13 : vector<2x128xf32>
    %c0_12 = arith.constant 0 : index
    %c0_13 = arith.constant 0 : index
    %15 = vector.load %arg6[%c0_12, %c0_13] : memref<128x128xf32, #tpu.memory_space<vmem>>, vector<128x128xf32>
    %cst_14 = arith.constant dense<0.000000e+00> : vector<2x128xf32>
    %16 = tpu.matmul %14, %15, %cst_14 {dimension_numbers = #tpu.dot_dimension_numbers<[1], [0], [0], [1], [0, 0, 1, 1], [], []>} : vector<2x128xf32>, vector<128x128xf32>, vector<2x128xf32> -> vector<2x128xf32>
    %c0_15 = arith.constant 0 : index
    %c0_16 = arith.constant 0 : index
    %17 = vector.load %arg7[%c0_15, %c0_16] : memref<1x128xf32, #tpu.memory_space<vmem>>, vector<1x128xf32>
    %18 = vector.broadcast %17 : vector<1x128xf32> to vector<2x128xf32>
    %19 = arith.addf %16, %18 : vector<2x128xf32>
    %20 = tpu.iota {dimensions = array<i32: 1>} : vector<2x128xi32>
    %c10_i32 = arith.constant 10 : i32
    %21 = vector.broadcast %c10_i32 : i32 to vector<2x128xi32>
    %22 = arith.cmpi slt, %20, %21 : vector<2x128xi32>
    %cst_17 = arith.constant 0xFF800000 : f32
    %23 = vector.broadcast %cst_17 : f32 to vector<2x128xf32>
    %24 = arith.select %22, %19, %23 : vector<2x128xi1>, vector<2x128xf32>
    %cst_18 = arith.constant dense<0xFF800000> : vector<2xf32>
    %25 = vector.multi_reduction <maximumf>, %24, %cst_18 [1] : vector<2x128xf32> to vector<2xf32>
    %26 = vector.shape_cast %25 : vector<2xf32> to vector<2x1xf32>
    %27 = vector.broadcast %26 : vector<2x1xf32> to vector<2x128xf32>
    %28 = arith.subf %24, %27 : vector<2x128xf32>
    %29 = math.exp %28 : vector<2x128xf32>
    %cst_19 = arith.constant dense<0.000000e+00> : vector<2xf32>
    %30 = vector.multi_reduction <add>, %29, %cst_19 [1] : vector<2x128xf32> to vector<2xf32>
    %31 = vector.shape_cast %30 : vector<2xf32> to vector<2x1xf32>
    %32 = tpu.reciprocal %31 {approx = true} : vector<2x1xf32> -> vector<2x1xf32>
    %33 = vector.broadcast %32 : vector<2x1xf32> to vector<2x128xf32>
    %34 = arith.mulf %29, %33 : vector<2x128xf32>
    %c0_20 = arith.constant 0 : index
    %c0_21 = arith.constant 0 : index
    %35 = vector.load %arg8[%c0_20, %c0_21] : memref<2x128xf32, #tpu.memory_space<vmem>>, vector<2x128xf32>
    tpu.vector_store %arg8[%c0_20, %c0_21], %34 {strides = array<i32>} : memref<2x128xf32, #tpu.memory_space<vmem>>, vector<2x128xf32>,
    return
  }
  func.func @transform_0(%arg0: i32) -> (i32, i32) {
    %c0_i32 = arith.constant 0 : i32
    %c0_i32_0 = arith.constant 0 : i32
    return %arg0, %c0_i32 : i32, i32
  }
  func.func @transform_1(%arg0: i32) -> (i32, i32) {
    %c0_i32 = arith.constant 0 : i32
    %c0_i32_0 = arith.constant 0 : i32
    %c0_i32_1 = arith.constant 0 : i32
    return %c0_i32, %c0_i32_0 : i32, i32
  }
  func.func @transform_2(%arg0: i32) -> (i32, i32) {
    %c0_i32 = arith.constant 0 : i32
    %c0_i32_0 = arith.constant 0 : i32
    %c0_i32_1 = arith.constant 0 : i32
    return %c0_i32, %c0_i32_0 : i32, i32
  }
  func.func @transform_3(%arg0: i32) -> (i32, i32) {
    %c0_i32 = arith.constant 0 : i32
    %c0_i32_0 = arith.constant 0 : i32
    %c0_i32_1 = arith.constant 0 : i32
    return %c0_i32, %c0_i32_0 : i32, i32
  }
  func.func @transform_4(%arg0: i32) -> (i32, i32) {
    %c0_i32 = arith.constant 0 : i32
    %c0_i32_0 = arith.constant 0 : i32
    %c0_i32_1 = arith.constant 0 : i32
    return %c0_i32, %c0_i32_0 : i32, i32
  }
  func.func @transform_5(%arg0: i32) -> (i32, i32) {
    %c0_i32 = arith.constant 0 : i32
    %c0_i32_0 = arith.constant 0 : i32
    %c0_i32_1 = arith.constant 0 : i32
    return %c0_i32, %c0_i32_0 : i32, i32
  }
  func.func @transform_6(%arg0: i32) -> (i32, i32) {
    %c0_i32 = arith.constant 0 : i32
    %c0_i32_0 = arith.constant 0 : i32
    %c0_i32_1 = arith.constant 0 : i32
    return %c0_i32, %c0_i32_0 : i32, i32
  }
  func.func @transform_7(%arg0: i32) -> (i32, i32) {
    %c0_i32 = arith.constant 0 : i32
    %c0_i32_0 = arith.constant 0 : i32
    return %arg0, %c0_i32 : i32, i32
  }
}

</mosaic_0001>

<llo_original>
// kernel: dnn_forward.3
$region0: #{dnn_forward.3}
  #allocation0 [shape = 'u32[]', space=smem, size = 0x4, offset = 0x4, fixed_abs, tag = 'smem constant byte address 0x4 - core index']
  #allocation1 [shape = 'u32[144,128]{1,0:T(1,128)}', space=vmem, size = 0x12000, scoped, tag = 'internal scratch']
  #allocation2 [shape = 'f32[48,24,128]{2,1,0:T(8,128)}', space=vmem, size = 0x90000, scoped, tag = 'scratch operand']
  %s0 = inlined_call_operand.vmem [shape: f32[1152,32], index: 0, kind: input, shape index: {}]
  %s1 = inlined_call_operand.vmem [shape: f32[32,128], index: 1, kind: input, shape index: {}]
  %s2 = inlined_call_operand.vmem [shape: f32[1,128], index: 2, kind: input, shape index: {}]
  %s3 = inlined_call_operand.vmem [shape: f32[24,12,128], index: 3, kind: output, shape index: {}]
  %s4 = sld [smem:[#allocation0]]
  $region22: #{dnn_forward.3} parent=0
    _
  %s6 = ssub.s32 1, %s4
  %s7 = scalar_select 0, %s6, %s4
  // Predicated region
  $region2: #{dnn_forward.3} parent=0 // pred_check
    _
  $region3: #{dnn_forward.3} parent=0 // pred_check_branch
    %9 = sbr.rel (0) target = $region5
  $region4: #{dnn_forward.3} parent=0 // pred_region
    _
  $region5: #{dnn_forward.3} parent=0 // pred_fallthru
    _
  // Predicated region
  $region6: #{dnn_forward.3} parent=0 // pred_check
    _
  $region7: #{dnn_forward.3} parent=0 // pred_check_branch
    %11 = sbr.rel (0) target = $region9
  $region8: #{dnn_forward.3} parent=0 // pred_region
    _
  $region9: #{dnn_forward.3} parent=0 // pred_fallthru
    _
  // Predicated region
  $region10: #{dnn_forward.3} parent=0 // pred_check
    _
  $region11: #{dnn_forward.3} parent=0 // pred_check_branch
    %13 = sbr.rel (0) target = $region13
  $region12: #{dnn_forward.3} parent=0 // pred_region
    _
  $region13: #{dnn_forward.3} parent=0 // pred_fallthru
    _
  %v14 = vld [vmem:[%s0] sm:$0xff]
  %v15 = vld [vmem:[%s0 + $0x8] sm:$0xff]
  %v16 = vld [vmem:[%s0 + $0x10] sm:$0xff]
  %v17 = vld [vmem:[%s0 + $0x18] sm:$0xff]
  %v18 = vld [vmem:[%s0 + $0x20] sm:$0xff]
  %v19 = vld [vmem:[%s0 + $0x28] sm:$0xff]
  %v20 = vld [vmem:[%s0 + $0x30] sm:$0xff]
  %v21 = vld [vmem:[%s0 + $0x38] sm:$0xff]
  %v22 = vld [vmem:[%s0 + $0x40] sm:$0xff]
  %v23 = vld [vmem:[%s0 + $0x48] sm:$0xff]
  %v24 = vld [vmem:[%s0 + $0x50] sm:$0xff]
  %v25 = vld [vmem:[%s0 + $0x58] sm:$0xff]
  %v26 = vld [vmem:[%s0 + $0x60] sm:$0xff]
  %v27 = vld [vmem:[%s0 + $0x68] sm:$0xff]
  %v28 = vld [vmem:[%s0 + $0x70] sm:$0xff]
  %v29 = vld [vmem:[%s0 + $0x78] sm:$0xff]
  %v30 = vld [vmem:[%s0 + $0x80] sm:$0xff]
  %v31 = vld [vmem:[%s0 + $0x88] sm:$0xff]
  %v32 = vld [vmem:[%s0 + $0x90] sm:$0xff]
  %v33 = vld [vmem:[%s0 + $0x98] sm:$0xff]
  %v34 = vld [vmem:[%s0 + $0xa0] sm:$0xff]
  %v35 = vld [vmem:[%s0 + $0xa8] sm:$0xff]
  %v36 = vld [vmem:[%s0 + $0xb0] sm:$0xff]
  %v37 = vld [vmem:[%s0 + $0xb8] sm:$0xff]
  %v38 = vld [vmem:[%s0 + $0xc0] sm:$0xff]
  %v39 = vld [vmem:[%s0 + $0xc8] sm:$0xff]
  %v40 = vld [vmem:[%s0 + $0xd0] sm:$0xff]
  %v41 = vld [vmem:[%s0 + $0xd8] sm:$0xff]
  %v42 = vld [vmem:[%s0 + $0xe0] sm:$0xff]
  %v43 = vld [vmem:[%s0 + $0xe8] sm:$0xff]
  %v44 = vld [vmem:[%s0 + $0xf0] sm:$0xff]
  %v45 = vld [vmem:[%s0 + $0xf8] sm:$0xff]
  %v46 = vld [vmem:[%s0 + $0x100] sm:$0xff]
  %v47 = vld [vmem:[%s0 + $0x108] sm:$0xff]
  %v48 = vld [vmem:[%s0 + $0x110] sm:$0xff]
  %v49 = vld [vmem:[%s0 + $0x118] sm:$0xff]
  %v50 = vld [vmem:[%s0 + $0x120] sm:$0xff]
  %v51 = vld [vmem:[%s0 + $0x128] sm:$0xff]
  %v52 = vld [vmem:[%s0 + $0x130] sm:$0xff]
  %v53 = vld [vmem:[%s0 + $0x138] sm:$0xff]
  %v54 = vld [vmem:[%s0 + $0x140] sm:$0xff]
  %v55 = vld [vmem:[%s0 + $0x148] sm:$0xff]
  %v56 = vld [vmem:[%s0 + $0x150] sm:$0xff]
  %v57 = vld [vmem:[%s0 + $0x158] sm:$0xff]
  %v58 = vld [vmem:[%s0 + $0x160] sm:$0xff]
  %v59 = vld [vmem:[%s0 + $0x168] sm:$0xff]
  %v60 = vld [vmem:[%s0 + $0x170] sm:$0xff]
  %v61 = vld [vmem:[%s0 + $0x178] sm:$0xff]
  %v62 = vld [vmem:[%s0 + $0x180] sm:$0xff]
  %v63 = vld [vmem:[%s0 + $0x188] sm:$0xff]
  %v64 = vld [vmem:[%s0 + $0x190] sm:$0xff]
  %v65 = vld [vmem:[%s0 + $0x198] sm:$0xff]
  %v66 = vld [vmem:[%s0 + $0x1a0] sm:$0xff]
  %v67 = vld [vmem:[%s0 + $0x1a8] sm:$0xff]
  %v68 = vld [vmem:[%s0 + $0x1b0] sm:$0xff]
  %v69 = vld [vmem:[%s0 + $0x1b8] sm:$0xff]
  %v70 = vld [vmem:[%s0 + $0x1c0] sm:$0xff]
  %v71 = vld [vmem:[%s0 + $0x1c8] sm:$0xff]
  %v72 = vld [vmem:[%s0 + $0x1d0] sm:$0xff]
  %v73 = vld [vmem:[%s0 + $0x1d8] sm:$0xff]
  %v74 = vld [vmem:[%s0 + $0x1e0] sm:$0xff]
  %v75 = vld [vmem:[%s0 + $0x1e8] sm:$0xff]
  %v76 = vld [vmem:[%s0 + $0x1f0] sm:$0xff]
  %v77 = vld [vmem:[%s0 + $0x1f8] sm:$0xff]
  %v78 = vld [vmem:[%s0 + $0x200] sm:$0xff]
  %v79 = vld [vmem:[%s0 + $0x208] sm:$0xff]
  %v80 = vld [vmem:[%s0 + $0x210] sm:$0xff]
  %v81 = vld [vmem:[%s0 + $0x218] sm:$0xff]
  %v82 = vld [vmem:[%s0 + $0x220] sm:$0xff]
  %v83 = vld [vmem:[%s0 + $0x228] sm:$0xff]
  %v84 = vld [vmem:[%s0 + $0x230] sm:$0xff]
  %v85 = vld [vmem:[%s0 + $0x238] sm:$0xff]
  %v86 = vld [vmem:[%s0 + $0x240] sm:$0xff]
  %v87 = vld [vmem:[%s0 + $0x248] sm:$0xff]
  %v88 = vld [vmem:[%s0 + $0x250] sm:$0xff]
  %v89 = vld [vmem:[%s0 + $0x258] sm:$0xff]
  %v90 = vld [vmem:[%s0 + $0x260] sm:$0xff]
  %v91 = vld [vmem:[%s0 + $0x268] sm:$0xff]
  %v92 = vld [vmem:[%s0 + $0x270] sm:$0xff]
  %v93 = vld [vmem:[%s0 + $0x278] sm:$0xff]
  %v94 = vld [vmem:[%s0 + $0x280] sm:$0xff]
  %v95 = vld [vmem:[%s0 + $0x288] sm:$0xff]
  %v96 = vld [vmem:[%s0 + $0x290] sm:$0xff]
  %v97 = vld [vmem:[%s0 + $0x298] sm:$0xff]
  %v98 = vld [vmem:[%s0 + $0x2a0] sm:$0xff]
  %v99 = vld [vmem:[%s0 + $0x2a8] sm:$0xff]
  %v100 = vld [vmem:[%s0 + $0x2b0] sm:$0xff]
  %v101 = vld [vmem:[%s0 + $0x2b8] sm:$0xff]
  %v102 = vld [vmem:[%s0 + $0x2c0] sm:$0xff]
  %v103 = vld [vmem:[%s0 + $0x2c8] sm:$0xff]
  %v104 = vld [vmem:[%s0 + $0x2d0] sm:$0xff]
  %v105 = vld [vmem:[%s0 + $0x2d8] sm:$0xff]
  %v106 = vld [vmem:[%s0 + $0x2e0] sm:$0xff]
  %v107 = vld [vmem:[%s0 + $0x2e8] sm:$0xff]
  %v108 = vld [vmem:[%s0 + $0x2f0] sm:$0xff]
  %v109 = vld [vmem:[%s0 + $0x2f8] sm:$0xff]
  %v110 = vld [vmem:[%s0 + $0x300] sm:$0xff]
  %v111 = vld [vmem:[%s0 + $0x308] sm:$0xff]
  %v112 = vld [vmem:[%s0 + $0x310] sm:$0xff]
  %v113 = vld [vmem:[%s0 + $0x318] sm:$0xff]
  %v114 = vld [vmem:[%s0 + $0x320] sm:$0xff]
  %v115 = vld [vmem:[%s0 + $0x328] sm:$0xff]
  %v116 = vld [vmem:[%s0 + $0x330] sm:$0xff]
  %v117 = vld [vmem:[%s0 + $0x338] sm:$0xff]
  %v118 = vld [vmem:[%s0 + $0x340] sm:$0xff]
  %v119 = vld [vmem:[%s0 + $0x348] sm:$0xff]
  %v120 = vld [vmem:[%s0 + $0x350] sm:$0xff]
  %v121 = vld [vmem:[%s0 + $0x358] sm:$0xff]
  %v122 = vld [vmem:[%s0 + $0x360] sm:$0xff]
  %v123 = vld [vmem:[%s0 + $0x368] sm:$0xff]
  %v124 = vld [vmem:[%s0 + $0x370] sm:$0xff]
  %v125 = vld [vmem:[%s0 + $0x378] sm:$0xff]
  %v126 = vld [vmem:[%s0 + $0x380] sm:$0xff]
  %v127 = vld [vmem:[%s0 + $0x388] sm:$0xff]
  %v128 = vld [vmem:[%s0 + $0x390] sm:$0xff]
  %v129 = vld [vmem:[%s0 + $0x398] sm:$0xff]
  %v130 = vld [vmem:[%s0 + $0x3a0] sm:$0xff]
  %v131 = vld [vmem:[%s0 + $0x3a8] sm:$0xff]
  %v132 = vld [vmem:[%s0 + $0x3b0] sm:$0xff]
  %v133 = vld [vmem:[%s0 + $0x3b8] sm:$0xff]
  %v134 = vld [vmem:[%s0 + $0x3c0] sm:$0xff]
  %v135 = vld [vmem:[%s0 + $0x3c8] sm:$0xff]
  %v136 = vld [vmem:[%s0 + $0x3d0] sm:$0xff]
  %v137 = vld [vmem:[%s0 + $0x3d8] sm:$0xff]
  %v138 = vld [vmem:[%s0 + $0x3e0] sm:$0xff]
  %v139 = vld [vmem:[%s0 + $0x3e8] sm:$0xff]
  %v140 = vld [vmem:[%s0 + $0x3f0] sm:$0xff]
  %v141 = vld [vmem:[%s0 + $0x3f8] sm:$0xff]
  %v142 = vld [vmem:[%s0 + $0x400] sm:$0xff]
  %v143 = vld [vmem:[%s0 + $0x408] sm:$0xff]
  %v144 = vld [vmem:[%s0 + $0x410] sm:$0xff]
  %v145 = vld [vmem:[%s0 + $0x418] sm:$0xff]
  %v146 = vld [vmem:[%s0 + $0x420] sm:$0xff]
  %v147 = vld [vmem:[%s0 + $0x428] sm:$0xff]
  %v148 = vld [vmem:[%s0 + $0x430] sm:$0xff]
  %v149 = vld [vmem:[%s0 + $0x438] sm:$0xff]
  %v150 = vld [vmem:[%s0 + $0x440] sm:$0xff]
  %v151 = vld [vmem:[%s0 + $0x448] sm:$0xff]
  %v152 = vld [vmem:[%s0 + $0x450] sm:$0xff]
  %v153 = vld [vmem:[%s0 + $0x458] sm:$0xff]
  %v154 = vld [vmem:[%s0 + $0x460] sm:$0xff]
  %v155 = vld [vmem:[%s0 + $0x468] sm:$0xff]
  %v156 = vld [vmem:[%s0 + $0x470] sm:$0xff]
  %v157 = vld [vmem:[%s0 + $0x478] sm:$0xff]
  %v158 = vld [vmem:[%s1] sm:$0xff]
  %v159 = vld [vmem:[%s1 + $0x8] sm:$0xff]
  %v160 = vld [vmem:[%s1 + $0x10] sm:$0xff]
  %v161 = vld [vmem:[%s1 + $0x18] sm:$0xff]
  %v162 = vld [vmem:[%s2] sm:$0x1]
  %v164 = vlaneseq
  %v165 = vshrl.u32 %v164, 7
  %v166 = vsub.s32 0, %v165
  %v167 = vrot.slane %v162, %v166
  %vm169 = vcmask 261120
  %v171 = vsel %vm169, %v14, 0
  %v174 = vsel %vm169, %v15, 0
  %v177 = vsel %vm169, %v16, 0
  %v180 = vsel %vm169, %v17, 0
  %v183 = vsel %vm169, %v18, 0
  %v186 = vsel %vm169, %v19, 0
  %v189 = vsel %vm169, %v20, 0
  %v192 = vsel %vm169, %v21, 0
  %v195 = vsel %vm169, %v22, 0
  %v198 = vsel %vm169, %v23, 0
  %v201 = vsel %vm169, %v24, 0
  %v204 = vsel %vm169, %v25, 0
  %v207 = vsel %vm169, %v26, 0
  %v210 = vsel %vm169, %v27, 0
  %v213 = vsel %vm169, %v28, 0
  %v216 = vsel %vm169, %v29, 0
  %v219 = vsel %vm169, %v30, 0
  %v222 = vsel %vm169, %v31, 0
  %v225 = vsel %vm169, %v32, 0
  %v228 = vsel %vm169, %v33, 0
  %v231 = vsel %vm169, %v34, 0
  %v234 = vsel %vm169, %v35, 0
  %v237 = vsel %vm169, %v36, 0
  %v240 = vsel %vm169, %v37, 0
  %v243 = vsel %vm169, %v38, 0
  %v246 = vsel %vm169, %v39, 0
  %v249 = vsel %vm169, %v40, 0
  %v252 = vsel %vm169, %v41, 0
  %v255 = vsel %vm169, %v42, 0
  %v258 = vsel %vm169, %v43, 0
  %v261 = vsel %vm169, %v44, 0
  %v264 = vsel %vm169, %v45, 0
  %v267 = vsel %vm169, %v46, 0
  %v270 = vsel %vm169, %v47, 0
  %v273 = vsel %vm169, %v48, 0
  %v276 = vsel %vm169, %v49, 0
  %v279 = vsel %vm169, %v50, 0
  %v282 = vsel %vm169, %v51, 0
  %v285 = vsel %vm169, %v52, 0
  %v288 = vsel %vm169, %v53, 0
  %v291 = vsel %vm169, %v54, 0
  %v294 = vsel %vm169, %v55, 0
  %v297 = vsel %vm169, %v56, 0
  %v300 = vsel %vm169, %v57, 0
  %v303 = vsel %vm169, %v58, 0
  %v306 = vsel %vm169, %v59, 0
  %v309 = vsel %vm169, %v60, 0
  %v312 = vsel %vm169, %v61, 0
  %v315 = vsel %vm169, %v62, 0
  %v318 = vsel %vm169, %v63, 0
  %v321 = vsel %vm169, %v64, 0
  %v324 = vsel %vm169, %v65, 0
  %v327 = vsel %vm169, %v66, 0
  %v330 = vsel %vm169, %v67, 0
  %v333 = vsel %vm169, %v68, 0
  %v336 = vsel %vm169, %v69, 0
  %v339 = vsel %vm169, %v70, 0
  %v342 = vsel %vm169, %v71, 0
  %v345 = vsel %vm169, %v72, 0
  %v348 = vsel %vm169, %v73, 0
  %v351 = vsel %vm169, %v74, 0
  %v354 = vsel %vm169, %v75, 0
  %v357 = vsel %vm169, %v76, 0
  %v360 = vsel %vm169, %v77, 0
  %v363 = vsel %vm169, %v78, 0
  %v366 = vsel %vm169, %v79, 0
  %v369 = vsel %vm169, %v80, 0
  %v372 = vsel %vm169, %v81, 0
  %v375 = vsel %vm169, %v82, 0
  %v378 = vsel %vm169, %v83, 0
  %v381 = vsel %vm169, %v84, 0
  %v384 = vsel %vm169, %v85, 0
  %v387 = vsel %vm169, %v86, 0
  %v390 = vsel %vm169, %v87, 0
  %v393 = vsel %vm169, %v88, 0
  %v396 = vsel %vm169, %v89, 0
  %v399 = vsel %vm169, %v90, 0
  %v402 = vsel %vm169, %v91, 0
  %v405 = vsel %vm169, %v92, 0
  %v408 = vsel %vm169, %v93, 0
  %v411 = vsel %vm169, %v94, 0
  %v414 = vsel %vm169, %v95, 0
  %v417 = vsel %vm169, %v96, 0
  %v420 = vsel %vm169, %v97, 0
  %v423 = vsel %vm169, %v98, 0
  %v426 = vsel %vm169, %v99, 0
  %v429 = vsel %vm169, %v100, 0
  %v432 = vsel %vm169, %v101, 0
  %v435 = vsel %vm169, %v102, 0
  %v438 = vsel %vm169, %v103, 0
  %v441 = vsel %vm169, %v104, 0
  %v444 = vsel %vm169, %v105, 0
  %v447 = vsel %vm169, %v106, 0
  %v450 = vsel %vm169, %v107, 0
  %v453 = vsel %vm169, %v108, 0
  %v456 = vsel %vm169, %v109, 0
  %v459 = vsel %vm169, %v110, 0
  %v462 = vsel %vm169, %v111, 0
  %v465 = vsel %vm169, %v112, 0
  %v468 = vsel %vm169, %v113, 0
  %v471 = vsel %vm169, %v114, 0
  %v474 = vsel %vm169, %v115, 0
  %v477 = vsel %vm169, %v116, 0
  %v480 = vsel %vm169, %v117, 0
  %v483 = vsel %vm169, %v118, 0
  %v486 = vsel %vm169, %v119, 0
  %v489 = vsel %vm169, %v120, 0
  %v492 = vsel %vm169, %v121, 0
  %v495 = vsel %vm169, %v122, 0
  %v498 = vsel %vm169, %v123, 0
  %v501 = vsel %vm169, %v124, 0
  %v504 = vsel %vm169, %v125, 0
  %v507 = vsel %vm169, %v126, 0
  %v510 = vsel %vm169, %v127, 0
  %v513 = vsel %vm169, %v128, 0
  %v516 = vsel %vm169, %v129, 0
  %v519 = vsel %vm169, %v130, 0
  %v522 = vsel %vm169, %v131, 0
  %v525 = vsel %vm169, %v132, 0
  %v528 = vsel %vm169, %v133, 0
  %v531 = vsel %vm169, %v134, 0
  %v534 = vsel %vm169, %v135, 0
  %v537 = vsel %vm169, %v136, 0
  %v540 = vsel %vm169, %v137, 0
  %v543 = vsel %vm169, %v138, 0
  %v546 = vsel %vm169, %v139, 0
  %v549 = vsel %vm169, %v140, 0
  %v552 = vsel %vm169, %v141, 0
  %v555 = vsel %vm169, %v142, 0
  %v558 = vsel %vm169, %v143, 0
  %v561 = vsel %vm169, %v144, 0
  %v564 = vsel %vm169, %v145, 0
  %v567 = vsel %vm169, %v146, 0
  %v570 = vsel %vm169, %v147, 0
  %v573 = vsel %vm169, %v148, 0
  %v576 = vsel %vm169, %v149, 0
  %v579 = vsel %vm169, %v150, 0
  %v582 = vsel %vm169, %v151, 0
  %v585 = vsel %vm169, %v152, 0
  %v588 = vsel %vm169, %v153, 0
  %v591 = vsel %vm169, %v154, 0
  %v594 = vsel %vm169, %v155, 0
  %v597 = vsel %vm169, %v156, 0
  %v600 = vsel %vm169, %v157, 0
  %602 = vmatprep.subr.mxu0 0.0
  %603 = vmatpush1.msra.mxu0 %v158
  %604 = vmatprep.subr.mxu0 0.0
  %605 = vmatpush1.msra.mxu0 %v159
  %606 = vmatprep.subr.mxu0 0.0
  %607 = vmatpush1.msra.mxu0 %v160
  %608 = vmatprep.subr.mxu0 0.0
  %609 = vmatpush1.msra.mxu0 %v161
  %610 = vmatprep.subr.mxu0 0.0
  %611 = vmatpush1.msra.mxu0 0.0
  %612 = vmatprep.subr.mxu0 0.0
  %613 = vmatpush1.msra.mxu0 0.0
  %614 = vmatprep.subr.mxu0 0.0
  %615 = vmatpush1.msra.mxu0 0.0
  %616 = vmatprep.subr.mxu0 0.0
  %617 = vmatpush1.msra.mxu0 0.0
  %618 = vmatprep.subr.mxu0 0.0
  %619 = vmatpush1.msra.mxu0 0.0
  %620 = vmatprep.subr.mxu0 0.0
  %621 = vmatpush1.msra.mxu0 0.0
  %622 = vmatprep.subr.mxu0 0.0
  %623 = vmatpush1.msra.mxu0 0.0
  %624 = vmatprep.subr.mxu0 0.0
  %625 = vmatpush1.msra.mxu0 0.0
  %626 = vmatprep.subr.mxu0 0.0
  %627 = vmatpush1.msra.mxu0 0.0
  %628 = vmatprep.subr.mxu0 0.0
  %629 = vmatpush1.msra.mxu0 0.0
  %630 = vmatprep.subr.mxu0 0.0
  %631 = vmatpush1.msra.mxu0 0.0
  %632 = vmatprep.subr.mxu0 0.0
  %633 = vmatpush1.msra.mxu0 0.0
  %634 = vmatprep.subr.mxu0 0.0
  %635 = vmatpush1.msra.mxu0 0.0
  %636 = vmatprep.subr.mxu0 0.0
  %637 = vmatpush1.msra.mxu0 0.0
  %638 = vmatprep.subr.mxu0 0.0
  %639 = vmatpush1.msra.mxu0 0.0
  %640 = vmatprep.subr.mxu0 0.0
  %641 = vmatpush1.msra.mxu0 0.0
  %642 = vmatprep.subr.mxu0 0.0
  %643 = vmatpush1.msra.mxu0 0.0
  %644 = vmatprep.subr.mxu0 0.0
  %645 = vmatpush1.msra.mxu0 0.0
  %646 = vmatprep.subr.mxu0 0.0
  %647 = vmatpush1.msra.mxu0 0.0
  %648 = vmatprep.subr.mxu0 0.0
  %649 = vmatpush1.msra.mxu0 0.0
  %650 = vmatprep.subr.mxu0 0.0
  %651 = vmatpush1.msra.mxu0 0.0
  %652 = vmatprep.subr.mxu0 0.0
  %653 = vmatpush1.msra.mxu0 0.0
  %654 = vmatprep.subr.mxu0 0.0
  %655 = vmatpush1.msra.mxu0 0.0
  %656 = vmatprep.subr.mxu0 0.0
  %657 = vmatpush1.msra.mxu0 0.0
  %658 = vmatprep.subr.mxu0 0.0
  %659 = vmatpush1.msra.mxu0 0.0
  %660 = vmatprep.subr.mxu0 0.0
  %661 = vmatpush1.msra.mxu0 0.0
  %662 = vmatprep.subr.mxu0 0.0
  %663 = vmatpush1.msra.mxu0 0.0
  %664 = vmatprep.subr.mxu0 0.0
  %665 = vmatpush1.msra.mxu0 0.0
  %666 = vmatprep.mubr.f32.mxu0 0.0
  %667 = vmatmul.mubr.f32.gmra.mrb[0].mxu0 %v171
  %v668 = vpop.f32.mrb[0].mxu0
  %v669 = vadd.f32 %v167, %v668
  %v670 = vpop.f32.mrb[0].mxu0
  %671 = vmatprep.mubr.f32.mxu0 0.0
  %672 = vmatmul.mubr.f32.gmra.mrb[0].mxu0 %v174
  %v673 = vpop.f32.mrb[0].mxu0
  %v674 = vadd.f32 %v167, %v673
  %v675 = vpop.f32.mrb[0].mxu0
  %676 = vmatprep.mubr.f32.mxu0 0.0
  %677 = vmatmul.mubr.f32.gmra.mrb[0].mxu0 %v177
  %v678 = vpop.f32.mrb[0].mxu0
  %v679 = vadd.f32 %v167, %v678
  %v680 = vpop.f32.mrb[0].mxu0
  %681 = vmatprep.mubr.f32.mxu0 0.0
  %682 = vmatmul.mubr.f32.gmra.mrb[0].mxu0 %v180
  %v683 = vpop.f32.mrb[0].mxu0
  %v684 = vadd.f32 %v167, %v683
  %v685 = vpop.f32.mrb[0].mxu0
  %686 = vmatprep.mubr.f32.mxu0 0.0
  %687 = vmatmul.mubr.f32.gmra.mrb[0].mxu0 %v183
  %v688 = vpop.f32.mrb[0].mxu0
  %v689 = vadd.f32 %v167, %v688
  %v690 = vpop.f32.mrb[0].mxu0
  %691 = vmatprep.mubr.f32.mxu0 0.0
  %692 = vmatmul.mubr.f32.gmra.mrb[0].mxu0 %v186
  %v693 = vpop.f32.mrb[0].mxu0
  %v694 = vadd.f32 %v167, %v693
  %v695 = vpop.f32.mrb[0].mxu0
  %696 = vmatprep.mubr.f32.mxu0 0.0
  %697 = vmatmul.mubr.f32.gmra.mrb[0].mxu0 %v189
  %v698 = vpop.f32.mrb[0].mxu0
  %v699 = vadd.f32 %v167, %v698
  %v700 = vpop.f32.mrb[0].mxu0
  %701 = vmatprep.mubr.f32.mxu0 0.0
  %702 = vmatmul.mubr.f32.gmra.mrb[0].mxu0 %v192
  %v703 = vpop.f32.mrb[0].mxu0
  %v704 = vadd.f32 %v167, %v703
  %v705 = vpop.f32.mrb[0].mxu0
  %706 = vmatprep.mubr.f32.mxu0 0.0
  %707 = vmatmul.mubr.f32.gmra.mrb[0].mxu0 %v195
  %v708 = vpop.f32.mrb[0].mxu0
  %v709 = vadd.f32 %v167, %v708
  %v710 = vpop.f32.mrb[0].mxu0
  %711 = vmatprep.mubr.f32.mxu0 0.0
  %712 = vmatmul.mubr.f32.gmra.mrb[0].mxu0 %v198
  %v713 = vpop.f32.mrb[0].mxu0
  %v714 = vadd.f32 %v167, %v713
  %v715 = vpop.f32.mrb[0].mxu0
  %716 = vmatprep.mubr.f32.mxu0 0.0
  %717 = vmatmul.mubr.f32.gmra.mrb[0].mxu0 %v201
  %v718 = vpop.f32.mrb[0].mxu0
  %v719 = vadd.f32 %v167, %v718
  %v720 = vpop.f32.mrb[0].mxu0
  %721 = vmatprep.mubr.f32.mxu0 0.0
  %722 = vmatmul.mubr.f32.gmra.mrb[0].mxu0 %v204
  %v723 = vpop.f32.mrb[0].mxu0
  %v724 = vadd.f32 %v167, %v723
  %v725 = vpop.f32.mrb[0].mxu0
  %726 = vmatprep.mubr.f32.mxu0 0.0
  %727 = vmatmul.mubr.f32.gmra.mrb[0].mxu0 %v207
  %v728 = vpop.f32.mrb[0].mxu0
  %v729 = vadd.f32 %v167, %v728
  %v730 = vpop.f32.mrb[0].mxu0
  %731 = vmatprep.mubr.f32.mxu0 0.0
  %732 = vmatmul.mubr.f32.gmra.mrb[0].mxu0 %v210
  %v733 = vpop.f32.mrb[0].mxu0
  %v734 = vadd.f32 %v167, %v733
  %v735 = vpop.f32.mrb[0].mxu0
  %736 = vmatprep.mubr.f32.mxu0 0.0
  %737 = vmatmul.mubr.f32.gmra.mrb[0].mxu0 %v213
  %v738 = vpop.f32.mrb[0].mxu0
  %v739 = vadd.f32 %v167, %v738
  %v740 = vpop.f32.mrb[0].mxu0
  %741 = vmatprep.mubr.f32.mxu0 0.0
  %742 = vmatmul.mubr.f32.gmra.mrb[0].mxu0 %v216
  %v743 = vpop.f32.mrb[0].mxu0
  %v744 = vadd.f32 %v167, %v743
  %v745 = vpop.f32.mrb[0].mxu0
  %746 = vmatprep.mubr.f32.mxu0 0.0
  %747 = vmatmul.mubr.f32.gmra.mrb[0].mxu0 %v219
  %v748 = vpop.f32.mrb[0].mxu0
  %v749 = vadd.f32 %v167, %v748
  %v750 = vpop.f32.mrb[0].mxu0
  %751 = vmatprep.mubr.f32.mxu0 0.0
  %752 = vmatmul.mubr.f32.gmra.mrb[0].mxu0 %v222
  %v753 = vpop.f32.mrb[0].mxu0
  %v754 = vadd.f32 %v167, %v753
  %v755 = vpop.f32.mrb[0].mxu0
  %756 = vmatprep.mubr.f32.mxu0 0.0
  %757 = vmatmul.mubr.f32.gmra.mrb[0].mxu0 %v225
  %v758 = vpop.f32.mrb[0].mxu0
  %v759 = vadd.f32 %v167, %v758
  %v760 = vpop.f32.mrb[0].mxu0
  %761 = vmatprep.mubr.f32.mxu0 0.0
  %762 = vmatmul.mubr.f32.gmra.mrb[0].mxu0 %v228
  %v763 = vpop.f32.mrb[0].mxu0
  %v764 = vadd.f32 %v167, %v763
  %v765 = vpop.f32.mrb[0].mxu0
  %766 = vmatprep.mubr.f32.mxu0 0.0
  %767 = vmatmul.mubr.f32.gmra.mrb[0].mxu0 %v231
  %v768 = vpop.f32.mrb[0].mxu0
  %v769 = vadd.f32 %v167, %v768
  %v770 = vpop.f32.mrb[0].mxu0
  %771 = vmatprep.mubr.f32.mxu0 0.0
  %772 = vmatmul.mubr.f32.gmra.mrb[0].mxu0 %v234
  %v773 = vpop.f32.mrb[0].mxu0
  %v774 = vadd.f32 %v167, %v773
  %v775 = vpop.f32.mrb[0].mxu0
  %776 = vmatprep.mubr.f32.mxu0 0.0
  %777 = vmatmul.mubr.f32.gmra.mrb[0].mxu0 %v237
  %v778 = vpop.f32.mrb[0].mxu0
  %v779 = vadd.f32 %v167, %v778
  %v780 = vpop.f32.mrb[0].mxu0
  %781 = vmatprep.mubr.f32.mxu0 0.0
  %782 = vmatmul.mubr.f32.gmra.mrb[0].mxu0 %v240
  %v783 = vpop.f32.mrb[0].mxu0
  %v784 = vadd.f32 %v167, %v783
  %v785 = vpop.f32.mrb[0].mxu0
  %786 = vmatprep.mubr.f32.mxu0 0.0
  %787 = vmatmul.mubr.f32.gmra.mrb[0].mxu0 %v243
  %v788 = vpop.f32.mrb[0].mxu0
  %v789 = vadd.f32 %v167, %v788
  %v790 = vpop.f32.mrb[0].mxu0
  %791 = vmatprep.mubr.f32.mxu0 0.0
  %792 = vmatmul.mubr.f32.gmra.mrb[0].mxu0 %v246
  %v793 = vpop.f32.mrb[0].mxu0
  %v794 = vadd.f32 %v167, %v793
  %v795 = vpop.f32.mrb[0].mxu0
  %796 = vmatprep.mubr.f32.mxu0 0.0
  %797 = vmatmul.mubr.f32.gmra.mrb[0].mxu0 %v249
  %v798 = vpop.f32.mrb[0].mxu0
  %v799 = vadd.f32 %v167, %v798
  %v800 = vpop.f32.mrb[0].mxu0
  %801 = vmatprep.mubr.f32.mxu0 0.0
  %802 = vmatmul.mubr.f32.gmra.mrb[0].mxu0 %v252
  %v803 = vpop.f32.mrb[0].mxu0
  %v804 = vadd.f32 %v167, %v803
  %v805 = vpop.f32.mrb[0].mxu0
  %806 = vmatprep.mubr.f32.mxu0 0.0
  %807 = vmatmul.mubr.f32.gmra.mrb[0].mxu0 %v255
  %v808 = vpop.f32.mrb[0].mxu0
  %v809 = vadd.f32 %v167, %v808
  %v810 = vpop.f32.mrb[0].mxu0
  %811 = vmatprep.mubr.f32.mxu0 0.0
  %812 = vmatmul.mubr.f32.gmra.mrb[0].mxu0 %v258
  %v813 = vpop.f32.mrb[0].mxu0
  %v814 = vadd.f32 %v167, %v813
  %v815 = vpop.f32.mrb[0].mxu0
  %816 = vmatprep.mubr.f32.mxu0 0.0
  %817 = vmatmul.mubr.f32.gmra.mrb[0].mxu0 %v261
  %v818 = vpop.f32.mrb[0].mxu0
  %v819 = vadd.f32 %v167, %v818
  %v820 = vpop.f32.mrb[0].mxu0
  %821 = vmatprep.mubr.f32.mxu0 0.0
  %822 = vmatmul.mubr.f32.gmra.mrb[0].mxu0 %v264
  %v823 = vpop.f32.mrb[0].mxu0
  %v824 = vadd.f32 %v167, %v823
  %v825 = vpop.f32.mrb[0].mxu0
  %826 = vmatprep.mubr.f32.mxu0 0.0
  %827 = vmatmul.mubr.f32.gmra.mrb[0].mxu0 %v267
  %v828 = vpop.f32.mrb[0].mxu0
  %v829 = vadd.f32 %v167, %v828
  %v830 = vpop.f32.mrb[0].mxu0
  %831 = vmatprep.mubr.f32.mxu0 0.0
  %832 = vmatmul.mubr.f32.gmra.mrb[0].mxu0 %v270
  %v833 = vpop.f32.mrb[0].mxu0
  %v834 = vadd.f32 %v167, %v833
  %v835 = vpop.f32.mrb[0].mxu0
  %836 = vmatprep.mubr.f32.mxu0 0.0
  %837 = vmatmul.mubr.f32.gmra.mrb[0].mxu0 %v273
  %v838 = vpop.f32.mrb[0].mxu0
  %v839 = vadd.f32 %v167, %v838
  %v840 = vpop.f32.mrb[0].mxu0
  %841 = vmatprep.mubr.f32.mxu0 0.0
  %842 = vmatmul.mubr.f32.gmra.mrb[0].mxu0 %v276
  %v843 = vpop.f32.mrb[0].mxu0
  %v844 = vadd.f32 %v167, %v843
  %v845 = vpop.f32.mrb[0].mxu0
  %846 = vmatprep.mubr.f32.mxu0 0.0
  %847 = vmatmul.mubr.f32.gmra.mrb[0].mxu0 %v279
  %v848 = vpop.f32.mrb[0].mxu0
  %v849 = vadd.f32 %v167, %v848
  %v850 = vpop.f32.mrb[0].mxu0
  %851 = vmatprep.mubr.f32.mxu0 0.0
  %852 = vmatmul.mubr.f32.gmra.mrb[0].mxu0 %v282
  %v853 = vpop.f32.mrb[0].mxu0
  %v854 = vadd.f32 %v167, %v853
  %v855 = vpop.f32.mrb[0].mxu0
  %856 = vmatprep.mubr.f32.mxu0 0.0
  %857 = vmatmul.mubr.f32.gmra.mrb[0].mxu0 %v285
  %v858 = vpop.f32.mrb[0].mxu0
  %v859 = vadd.f32 %v167, %v858
  %v860 = vpop.f32.mrb[0].mxu0
  %861 = vmatprep.mubr.f32.mxu0 0.0
  %862 = vmatmul.mubr.f32.gmra.mrb[0].mxu0 %v288
  %v863 = vpop.f32.mrb[0].mxu0
  %v864 = vadd.f32 %v167, %v863
  %v865 = vpop.f32.mrb[0].mxu0
  %866 = vmatprep.mubr.f32.mxu0 0.0
  %867 = vmatmul.mubr.f32.gmra.mrb[0].mxu0 %v291
  %v868 = vpop.f32.mrb[0].mxu0
  %v869 = vadd.f32 %v167, %v868
  %v870 = vpop.f32.mrb[0].mxu0
  %871 = vmatprep.mubr.f32.mxu0 0.0
  %872 = vmatmul.mubr.f32.gmra.mrb[0].mxu0 %v294
  %v873 = vpop.f32.mrb[0].mxu0
  %v874 = vadd.f32 %v167, %v873
  %v875 = vpop.f32.mrb[0].mxu0
  %876 = vmatprep.mubr.f32.mxu0 0.0
  %877 = vmatmul.mubr.f32.gmra.mrb[0].mxu0 %v297
  %v878 = vpop.f32.mrb[0].mxu0
  %v879 = vadd.f32 %v167, %v878
  %v880 = vpop.f32.mrb[0].mxu0
  %881 = vmatprep.mubr.f32.mxu0 0.0
  %882 = vmatmul.mubr.f32.gmra.mrb[0].mxu0 %v300
  %v883 = vpop.f32.mrb[0].mxu0
  %v884 = vadd.f32 %v167, %v883
  %v885 = vpop.f32.mrb[0].mxu0
  %886 = vmatprep.mubr.f32.mxu0 0.0
  %887 = vmatmul.mubr.f32.gmra.mrb[0].mxu0 %v303
  %v888 = vpop.f32.mrb[0].mxu0
  %v889 = vadd.f32 %v167, %v888
  %v890 = vpop.f32.mrb[0].mxu0
  %891 = vmatprep.mubr.f32.mxu0 0.0
  %892 = vmatmul.mubr.f32.gmra.mrb[0].mxu0 %v306
  %v893 = vpop.f32.mrb[0].mxu0
  %v894 = vadd.f32 %v167, %v893
  %v895 = vpop.f32.mrb[0].mxu0
  %896 = vmatprep.mubr.f32.mxu0 0.0
  %897 = vmatmul.mubr.f32.gmra.mrb[0].mxu0 %v309
  %v898 = vpop.f32.mrb[0].mxu0
  %v899 = vadd.f32 %v167, %v898
  %v900 = vpop.f32.mrb[0].mxu0
  %901 = vmatprep.mubr.f32.mxu0 0.0
  %902 = vmatmul.mubr.f32.gmra.mrb[0].mxu0 %v312
  %v903 = vpop.f32.mrb[0].mxu0
  %v904 = vadd.f32 %v167, %v903
  %v905 = vpop.f32.mrb[0].mxu0
  %906 = vmatprep.mubr.f32.mxu0 0.0
  %907 = vmatmul.mubr.f32.gmra.mrb[0].mxu0 %v315
  %v908 = vpop.f32.mrb[0].mxu0
  %v909 = vadd.f32 %v167, %v908
  %v910 = vpop.f32.mrb[0].mxu0
  %911 = vmatprep.mubr.f32.mxu0 0.0
  %912 = vmatmul.mubr.f32.gmra.mrb[0].mxu0 %v318
  %v913 = vpop.f32.mrb[0].mxu0
  %v914 = vadd.f32 %v167, %v913
  %v915 = vpop.f32.mrb[0].mxu0
  %916 = vmatprep.mubr.f32.mxu0 0.0
  %917 = vmatmul.mubr.f32.gmra.mrb[0].mxu0 %v321
  %v918 = vpop.f32.mrb[0].mxu0
  %v919 = vadd.f32 %v167, %v918
  %v920 = vpop.f32.mrb[0].mxu0
  %921 = vmatprep.mubr.f32.mxu0 0.0
  %922 = vmatmul.mubr.f32.gmra.mrb[0].mxu0 %v324
  %v923 = vpop.f32.mrb[0].mxu0
  %v924 = vadd.f32 %v167, %v923
  %v925 = vpop.f32.mrb[0].mxu0
  %926 = vmatprep.mubr.f32.mxu0 0.0
  %927 = vmatmul.mubr.f32.gmra.mrb[0].mxu0 %v327
  %v928 = vpop.f32.mrb[0].mxu0
  %v929 = vadd.f32 %v167, %v928
  %v930 = vpop.f32.mrb[0].mxu0
  %931 = vmatprep.mubr.f32.mxu0 0.0
  %932 = vmatmul.mubr.f32.gmra.mrb[0].mxu0 %v330
  %v933 = vpop.f32.mrb[0].mxu0
  %v934 = vadd.f32 %v167, %v933
  %v935 = vpop.f32.mrb[0].mxu0
  %936 = vmatprep.mubr.f32.mxu0 0.0
  %937 = vmatmul.mubr.f32.gmra.mrb[0].mxu0 %v333
  %v938 = vpop.f32.mrb[0].mxu0
  %v939 = vadd.f32 %v167, %v938
  %v940 = vpop.f32.mrb[0].mxu0
  %941 = vmatprep.mubr.f32.mxu0 0.0
  %942 = vmatmul.mubr.f32.gmra.mrb[0].mxu0 %v336
  %v943 = vpop.f32.mrb[0].mxu0
  %v944 = vadd.f32 %v167, %v943
  %v945 = vpop.f32.mrb[0].mxu0
  %946 = vmatprep.mubr.f32.mxu0 0.0
  %947 = vmatmul.mubr.f32.gmra.mrb[0].mxu0 %v339
  %v948 = vpop.f32.mrb[0].mxu0
  %v949 = vadd.f32 %v167, %v948
  %v950 = vpop.f32.mrb[0].mxu0
  %951 = vmatprep.mubr.f32.mxu0 0.0
  %952 = vmatmul.mubr.f32.gmra.mrb[0].mxu0 %v342
  %v953 = vpop.f32.mrb[0].mxu0
  %v954 = vadd.f32 %v167, %v953
  %v955 = vpop.f32.mrb[0].mxu0
  %956 = vmatprep.mubr.f32.mxu0 0.0
  %957 = vmatmul.mubr.f32.gmra.mrb[0].mxu0 %v345
  %v958 = vpop.f32.mrb[0].mxu0
  %v959 = vadd.f32 %v167, %v958
  %v960 = vpop.f32.mrb[0].mxu0
  %961 = vmatprep.mubr.f32.mxu0 0.0
  %962 = vmatmul.mubr.f32.gmra.mrb[0].mxu0 %v348
  %v963 = vpop.f32.mrb[0].mxu0
  %v964 = vadd.f32 %v167, %v963
  %v965 = vpop.f32.mrb[0].mxu0
  %966 = vmatprep.mubr.f32.mxu0 0.0
  %967 = vmatmul.mubr.f32.gmra.mrb[0].mxu0 %v351
  %v968 = vpop.f32.mrb[0].mxu0
  %v969 = vadd.f32 %v167, %v968
  %v970 = vpop.f32.mrb[0].mxu0
  %971 = vmatprep.mubr.f32.mxu0 0.0
  %972 = vmatmul.mubr.f32.gmra.mrb[0].mxu0 %v354
  %v973 = vpop.f32.mrb[0].mxu0
  %v974 = vadd.f32 %v167, %v973
  %v975 = vpop.f32.mrb[0].mxu0
  %976 = vmatprep.mubr.f32.mxu0 0.0
  %977 = vmatmul.mubr.f32.gmra.mrb[0].mxu0 %v357
  %v978 = vpop.f32.mrb[0].mxu0
  %v979 = vadd.f32 %v167, %v978
  %v980 = vpop.f32.mrb[0].mxu0
  %981 = vmatprep.mubr.f32.mxu0 0.0
  %982 = vmatmul.mubr.f32.gmra.mrb[0].mxu0 %v360
  %v983 = vpop.f32.mrb[0].mxu0
  %v984 = vadd.f32 %v167, %v983
  %v985 = vpop.f32.mrb[0].mxu0
  %986 = vmatprep.mubr.f32.mxu0 0.0
  %987 = vmatmul.mubr.f32.gmra.mrb[0].mxu0 %v363
  %v988 = vpop.f32.mrb[0].mxu0
  %v989 = vadd.f32 %v167, %v988
  %v990 = vpop.f32.mrb[0].mxu0
  %991 = vmatprep.mubr.f32.mxu0 0.0
  %992 = vmatmul.mubr.f32.gmra.mrb[0].mxu0 %v366
  %v993 = vpop.f32.mrb[0].mxu0
  %v994 = vadd.f32 %v167, %v993
  %v995 = vpop.f32.mrb[0].mxu0
  %996 = vmatprep.mubr.f32.mxu0 0.0
  %997 = vmatmul.mubr.f32.gmra.mrb[0].mxu0 %v369
  %v998 = vpop.f32.mrb[0].mxu0
  %v999 = vadd.f32 %v167, %v998
  %v1000 = vpop.f32.mrb[0].mxu0
  %1001 = vmatprep.mubr.f32.mxu0 0.0
  %1002 = vmatmul.mubr.f32.gmra.mrb[0].mxu0 %v372
  %v1003 = vpop.f32.mrb[0].mxu0
  %v1004 = vadd.f32 %v167, %v1003
  %v1005 = vpop.f32.mrb[0].mxu0
  %1006 = vmatprep.mubr.f32.mxu0 0.0
  %1007 = vmatmul.mubr.f32.gmra.mrb[0].mxu0 %v375
  %v1008 = vpop.f32.mrb[0].mxu0
  %v1009 = vadd.f32 %v167, %v1008
  %v1010 = vpop.f32.mrb[0].mxu0
  %1011 = vmatprep.mubr.f32.mxu0 0.0
  %1012 = vmatmul.mubr.f32.gmra.mrb[0].mxu0 %v378
  %v1013 = vpop.f32.mrb[0].mxu0
  %v1014 = vadd.f32 %v167, %v1013
  %v1015 = vpop.f32.mrb[0].mxu0
  %1016 = vmatprep.mubr.f32.mxu0 0.0
  %1017 = vmatmul.mubr.f32.gmra.mrb[0].mxu0 %v381
  %v1018 = vpop.f32.mrb[0].mxu0
  %v1019 = vadd.f32 %v167, %v1018
  %v1020 = vpop.f32.mrb[0].mxu0
  %1021 = vmatprep.mubr.f32.mxu0 0.0
  %1022 = vmatmul.mubr.f32.gmra.mrb[0].mxu0 %v384
  %v1023 = vpop.f32.mrb[0].mxu0
  %v1024 = vadd.f32 %v167, %v1023
  %v1025 = vpop.f32.mrb[0].mxu0
  %1026 = vmatprep.mubr.f32.mxu0 0.0
  %1027 = vmatmul.mubr.f32.gmra.mrb[0].mxu0 %v387
  %v1028 = vpop.f32.mrb[0].mxu0
  %v1029 = vadd.f32 %v167, %v1028
  %v1030 = vpop.f32.mrb[0].mxu0
  %1031 = vmatprep.mubr.f32.mxu0 0.0
  %1032 = vmatmul.mubr.f32.gmra.mrb[0].mxu0 %v390
  %v1033 = vpop.f32.mrb[0].mxu0
  %v1034 = vadd.f32 %v167, %v1033
  %v1035 = vpop.f32.mrb[0].mxu0
  %1036 = vmatprep.mubr.f32.mxu0 0.0
  %1037 = vmatmul.mubr.f32.gmra.mrb[0].mxu0 %v393
  %v1038 = vpop.f32.mrb[0].mxu0
  %v1039 = vadd.f32 %v167, %v1038
  %v1040 = vpop.f32.mrb[0].mxu0
  %1041 = vmatprep.mubr.f32.mxu0 0.0
  %1042 = vmatmul.mubr.f32.gmra.mrb[0].mxu0 %v396
  %v1043 = vpop.f32.mrb[0].mxu0
  %v1044 = vadd.f32 %v167, %v1043
  %v1045 = vpop.f32.mrb[0].mxu0
  %1046 = vmatprep.mubr.f32.mxu0 0.0
  %1047 = vmatmul.mubr.f32.gmra.mrb[0].mxu0 %v399
  %v1048 = vpop.f32.mrb[0].mxu0
  %v1049 = vadd.f32 %v167, %v1048
  %v1050 = vpop.f32.mrb[0].mxu0
  %1051 = vmatprep.mubr.f32.mxu0 0.0
  %1052 = vmatmul.mubr.f32.gmra.mrb[0].mxu0 %v402
  %v1053 = vpop.f32.mrb[0].mxu0
  %v1054 = vadd.f32 %v167, %v1053
  %v1055 = vpop.f32.mrb[0].mxu0
  %1056 = vmatprep.mubr.f32.mxu0 0.0
  %1057 = vmatmul.mubr.f32.gmra.mrb[0].mxu0 %v405
  %v1058 = vpop.f32.mrb[0].mxu0
  %v1059 = vadd.f32 %v167, %v1058
  %v1060 = vpop.f32.mrb[0].mxu0
  %1061 = vmatprep.mubr.f32.mxu0 0.0
  %1062 = vmatmul.mubr.f32.gmra.mrb[0].mxu0 %v408
  %v1063 = vpop.f32.mrb[0].mxu0
  %v1064 = vadd.f32 %v167, %v1063
  %v1065 = vpop.f32.mrb[0].mxu0
  %1066 = vmatprep.mubr.f32.mxu0 0.0
  %1067 = vmatmul.mubr.f32.gmra.mrb[0].mxu0 %v411
  %v1068 = vpop.f32.mrb[0].mxu0
  %v1069 = vadd.f32 %v167, %v1068
  %v1070 = vpop.f32.mrb[0].mxu0
  %1071 = vmatprep.mubr.f32.mxu0 0.0
  %1072 = vmatmul.mubr.f32.gmra.mrb[0].mxu0 %v414
  %v1073 = vpop.f32.mrb[0].mxu0
  %v1074 = vadd.f32 %v167, %v1073
  %v1075 = vpop.f32.mrb[0].mxu0
  %1076 = vmatprep.mubr.f32.mxu0 0.0
  %1077 = vmatmul.mubr.f32.gmra.mrb[0].mxu0 %v417
  %v1078 = vpop.f32.mrb[0].mxu0
  %v1079 = vadd.f32 %v167, %v1078
  %v1080 = vpop.f32.mrb[0].mxu0
  %1081 = vmatprep.mubr.f32.mxu0 0.0
  %1082 = vmatmul.mubr.f32.gmra.mrb[0].mxu0 %v420
  %v1083 = vpop.f32.mrb[0].mxu0
  %v1084 = vadd.f32 %v167, %v1083
  %v1085 = vpop.f32.mrb[0].mxu0
  %1086 = vmatprep.mubr.f32.mxu0 0.0
  %1087 = vmatmul.mubr.f32.gmra.mrb[0].mxu0 %v423
  %v1088 = vpop.f32.mrb[0].mxu0
  %v1089 = vadd.f32 %v167, %v1088
  %v1090 = vpop.f32.mrb[0].mxu0
  %1091 = vmatprep.mubr.f32.mxu0 0.0
  %1092 = vmatmul.mubr.f32.gmra.mrb[0].mxu0 %v426
  %v1093 = vpop.f32.mrb[0].mxu0
  %v1094 = vadd.f32 %v167, %v1093
  %v1095 = vpop.f32.mrb[0].mxu0
  %1096 = vmatprep.mubr.f32.mxu0 0.0
  %1097 = vmatmul.mubr.f32.gmra.mrb[0].mxu0 %v429
  %v1098 = vpop.f32.mrb[0].mxu0
  %v1099 = vadd.f32 %v167, %v1098
  %v1100 = vpop.f32.mrb[0].mxu0
  %1101 = vmatprep.mubr.f32.mxu0 0.0
  %1102 = vmatmul.mubr.f32.gmra.mrb[0].mxu0 %v432
  %v1103 = vpop.f32.mrb[0].mxu0
  %v1104 = vadd.f32 %v167, %v1103
  %v1105 = vpop.f32.mrb[0].mxu0
  %1106 = vmatprep.mubr.f32.mxu0 0.0
  %1107 = vmatmul.mubr.f32.gmra.mrb[0].mxu0 %v435
  %v1108 = vpop.f32.mrb[0].mxu0
  %v1109 = vadd.f32 %v167, %v1108
  %v1110 = vpop.f32.mrb[0].mxu0
  %1111 = vmatprep.mubr.f32.mxu0 0.0
  %1112 = vmatmul.mubr.f32.gmra.mrb[0].mxu0 %v438
  %v1113 = vpop.f32.mrb[0].mxu0
  %v1114 = vadd.f32 %v167, %v1113
  %v1115 = vpop.f32.mrb[0].mxu0
  %1116 = vmatprep.mubr.f32.mxu0 0.0
  %1117 = vmatmul.mubr.f32.gmra.mrb[0].mxu0 %v441
  %v1118 = vpop.f32.mrb[0].mxu0
  %v1119 = vadd.f32 %v167, %v1118
  %v1120 = vpop.f32.mrb[0].mxu0
  %1121 = vmatprep.mubr.f32.mxu0 0.0
  %1122 = vmatmul.mubr.f32.gmra.mrb[0].mxu0 %v444
  %v1123 = vpop.f32.mrb[0].mxu0
  %v1124 = vadd.f32 %v167, %v1123
  %v1125 = vpop.f32.mrb[0].mxu0
  %1126 = vmatprep.mubr.f32.mxu0 0.0
  %1127 = vmatmul.mubr.f32.gmra.mrb[0].mxu0 %v447
  %v1128 = vpop.f32.mrb[0].mxu0
  %v1129 = vadd.f32 %v167, %v1128
  %v1130 = vpop.f32.mrb[0].mxu0
  %1131 = vmatprep.mubr.f32.mxu0 0.0
  %1132 = vmatmul.mubr.f32.gmra.mrb[0].mxu0 %v450
  %v1133 = vpop.f32.mrb[0].mxu0
  %v1134 = vadd.f32 %v167, %v1133
  %v1135 = vpop.f32.mrb[0].mxu0
  %1136 = vmatprep.mubr.f32.mxu0 0.0
  %1137 = vmatmul.mubr.f32.gmra.mrb[0].mxu0 %v453
  %v1138 = vpop.f32.mrb[0].mxu0
  %v1139 = vadd.f32 %v167, %v1138
  %v1140 = vpop.f32.mrb[0].mxu0
  %1141 = vmatprep.mubr.f32.mxu0 0.0
  %1142 = vmatmul.mubr.f32.gmra.mrb[0].mxu0 %v456
  %v1143 = vpop.f32.mrb[0].mxu0
  %v1144 = vadd.f32 %v167, %v1143
  %v1145 = vpop.f32.mrb[0].mxu0
  %1146 = vmatprep.mubr.f32.mxu0 0.0
  %1147 = vmatmul.mubr.f32.gmra.mrb[0].mxu0 %v459
  %v1148 = vpop.f32.mrb[0].mxu0
  %v1149 = vadd.f32 %v167, %v1148
  %v1150 = vpop.f32.mrb[0].mxu0
  %1151 = vmatprep.mubr.f32.mxu0 0.0
  %1152 = vmatmul.mubr.f32.gmra.mrb[0].mxu0 %v462
  %v1153 = vpop.f32.mrb[0].mxu0
  %v1154 = vadd.f32 %v167, %v1153
  %v1155 = vpop.f32.mrb[0].mxu0
  %1156 = vmatprep.mubr.f32.mxu0 0.0
  %1157 = vmatmul.mubr.f32.gmra.mrb[0].mxu0 %v465
  %v1158 = vpop.f32.mrb[0].mxu0
  %v1159 = vadd.f32 %v167, %v1158
  %v1160 = vpop.f32.mrb[0].mxu0
  %1161 = vmatprep.mubr.f32.mxu0 0.0
  %1162 = vmatmul.mubr.f32.gmra.mrb[0].mxu0 %v468
  %v1163 = vpop.f32.mrb[0].mxu0
  %v1164 = vadd.f32 %v167, %v1163
  %v1165 = vpop.f32.mrb[0].mxu0
  %1166 = vmatprep.mubr.f32.mxu0 0.0
  %1167 = vmatmul.mubr.f32.gmra.mrb[0].mxu0 %v471
  %v1168 = vpop.f32.mrb[0].mxu0
  %v1169 = vadd.f32 %v167, %v1168
  %v1170 = vpop.f32.mrb[0].mxu0
  %1171 = vmatprep.mubr.f32.mxu0 0.0
  %1172 = vmatmul.mubr.f32.gmra.mrb[0].mxu0 %v474
  %v1173 = vpop.f32.mrb[0].mxu0
  %v1174 = vadd.f32 %v167, %v1173
  %v1175 = vpop.f32.mrb[0].mxu0
  %1176 = vmatprep.mubr.f32.mxu0 0.0
  %1177 = vmatmul.mubr.f32.gmra.mrb[0].mxu0 %v477
  %v1178 = vpop.f32.mrb[0].mxu0
  %v1179 = vadd.f32 %v167, %v1178
  %v1180 = vpop.f32.mrb[0].mxu0
  %1181 = vmatprep.mubr.f32.mxu0 0.0
  %1182 = vmatmul.mubr.f32.gmra.mrb[0].mxu0 %v480
  %v1183 = vpop.f32.mrb[0].mxu0
  %v1184 = vadd.f32 %v167, %v1183
  %v1185 = vpop.f32.mrb[0].mxu0
  %1186 = vmatprep.mubr.f32.mxu0 0.0
  %1187 = vmatmul.mubr.f32.gmra.mrb[0].mxu0 %v483
  %v1188 = vpop.f32.mrb[0].mxu0
  %v1189 = vadd.f32 %v167, %v1188
  %v1190 = vpop.f32.mrb[0].mxu0
  %1191 = vmatprep.mubr.f32.mxu0 0.0
  %1192 = vmatmul.mubr.f32.gmra.mrb[0].mxu0 %v486
  %v1193 = vpop.f32.mrb[0].mxu0
  %v1194 = vadd.f32 %v167, %v1193
  %v1195 = vpop.f32.mrb[0].mxu0
  %1196 = vmatprep.mubr.f32.mxu0 0.0
  %1197 = vmatmul.mubr.f32.gmra.mrb[0].mxu0 %v489
  %v1198 = vpop.f32.mrb[0].mxu0
  %v1199 = vadd.f32 %v167, %v1198
  %v1200 = vpop.f32.mrb[0].mxu0
  %1201 = vmatprep.mubr.f32.mxu0 0.0
  %1202 = vmatmul.mubr.f32.gmra.mrb[0].mxu0 %v492
  %v1203 = vpop.f32.mrb[0].mxu0
  %v1204 = vadd.f32 %v167, %v1203
  %v1205 = vpop.f32.mrb[0].mxu0
  %1206 = vmatprep.mubr.f32.mxu0 0.0
  %1207 = vmatmul.mubr.f32.gmra.mrb[0].mxu0 %v495
  %v1208 = vpop.f32.mrb[0].mxu0
  %v1209 = vadd.f32 %v167, %v1208
  %v1210 = vpop.f32.mrb[0].mxu0
  %1211 = vmatprep.mubr.f32.mxu0 0.0
  %1212 = vmatmul.mubr.f32.gmra.mrb[0].mxu0 %v498
  %v1213 = vpop.f32.mrb[0].mxu0
  %v1214 = vadd.f32 %v167, %v1213
  %v1215 = vpop.f32.mrb[0].mxu0
  %1216 = vmatprep.mubr.f32.mxu0 0.0
  %1217 = vmatmul.mubr.f32.gmra.mrb[0].mxu0 %v501
  %v1218 = vpop.f32.mrb[0].mxu0
  %v1219 = vadd.f32 %v167, %v1218
  %v1220 = vpop.f32.mrb[0].mxu0
  %1221 = vmatprep.mubr.f32.mxu0 0.0
  %1222 = vmatmul.mubr.f32.gmra.mrb[0].mxu0 %v504
  %v1223 = vpop.f32.mrb[0].mxu0
  %v1224 = vadd.f32 %v167, %v1223
  %v1225 = vpop.f32.mrb[0].mxu0
  %1226 = vmatprep.mubr.f32.mxu0 0.0
  %1227 = vmatmul.mubr.f32.gmra.mrb[0].mxu0 %v507
  %v1228 = vpop.f32.mrb[0].mxu0
  %v1229 = vadd.f32 %v167, %v1228
  %v1230 = vpop.f32.mrb[0].mxu0
  %1231 = vmatprep.mubr.f32.mxu0 0.0
  %1232 = vmatmul.mubr.f32.gmra.mrb[0].mxu0 %v510
  %v1233 = vpop.f32.mrb[0].mxu0
  %v1234 = vadd.f32 %v167, %v1233
  %v1235 = vpop.f32.mrb[0].mxu0
  %1236 = vmatprep.mubr.f32.mxu0 0.0
  %1237 = vmatmul.mubr.f32.gmra.mrb[0].mxu0 %v513
  %v1238 = vpop.f32.mrb[0].mxu0
  %v1239 = vadd.f32 %v167, %v1238
  %v1240 = vpop.f32.mrb[0].mxu0
  %1241 = vmatprep.mubr.f32.mxu0 0.0
  %1242 = vmatmul.mubr.f32.gmra.mrb[0].mxu0 %v516
  %v1243 = vpop.f32.mrb[0].mxu0
  %v1244 = vadd.f32 %v167, %v1243
  %v1245 = vpop.f32.mrb[0].mxu0
  %1246 = vmatprep.mubr.f32.mxu0 0.0
  %1247 = vmatmul.mubr.f32.gmra.mrb[0].mxu0 %v519
  %v1248 = vpop.f32.mrb[0].mxu0
  %v1249 = vadd.f32 %v167, %v1248
  %v1250 = vpop.f32.mrb[0].mxu0
  %1251 = vmatprep.mubr.f32.mxu0 0.0
  %1252 = vmatmul.mubr.f32.gmra.mrb[0].mxu0 %v522
  %v1253 = vpop.f32.mrb[0].mxu0
  %v1254 = vadd.f32 %v167, %v1253
  %v1255 = vpop.f32.mrb[0].mxu0
  %1256 = vmatprep.mubr.f32.mxu0 0.0
  %1257 = vmatmul.mubr.f32.gmra.mrb[0].mxu0 %v525
  %v1258 = vpop.f32.mrb[0].mxu0
  %v1259 = vadd.f32 %v167, %v1258
  %v1260 = vpop.f32.mrb[0].mxu0
  %1261 = vmatprep.mubr.f32.mxu0 0.0
  %1262 = vmatmul.mubr.f32.gmra.mrb[0].mxu0 %v528
  %v1263 = vpop.f32.mrb[0].mxu0
  %v1264 = vadd.f32 %v167, %v1263
  %v1265 = vpop.f32.mrb[0].mxu0
  %1266 = vmatprep.mubr.f32.mxu0 0.0
  %1267 = vmatmul.mubr.f32.gmra.mrb[0].mxu0 %v531
  %v1268 = vpop.f32.mrb[0].mxu0
  %v1269 = vadd.f32 %v167, %v1268
  %v1270 = vpop.f32.mrb[0].mxu0
  %1271 = vmatprep.mubr.f32.mxu0 0.0
  %1272 = vmatmul.mubr.f32.gmra.mrb[0].mxu0 %v534
  %v1273 = vpop.f32.mrb[0].mxu0
  %v1274 = vadd.f32 %v167, %v1273
  %v1275 = vpop.f32.mrb[0].mxu0
  %1276 = vmatprep.mubr.f32.mxu0 0.0
  %1277 = vmatmul.mubr.f32.gmra.mrb[0].mxu0 %v537
  %v1278 = vpop.f32.mrb[0].mxu0
  %v1279 = vadd.f32 %v167, %v1278
  %v1280 = vpop.f32.mrb[0].mxu0
  %1281 = vmatprep.mubr.f32.mxu0 0.0
  %1282 = vmatmul.mubr.f32.gmra.mrb[0].mxu0 %v540
  %v1283 = vpop.f32.mrb[0].mxu0
  %v1284 = vadd.f32 %v167, %v1283
  %v1285 = vpop.f32.mrb[0].mxu0
  %1286 = vmatprep.mubr.f32.mxu0 0.0
  %1287 = vmatmul.mubr.f32.gmra.mrb[0].mxu0 %v543
  %v1288 = vpop.f32.mrb[0].mxu0
  %v1289 = vadd.f32 %v167, %v1288
  %v1290 = vpop.f32.mrb[0].mxu0
  %1291 = vmatprep.mubr.f32.mxu0 0.0
  %1292 = vmatmul.mubr.f32.gmra.mrb[0].mxu0 %v546
  %v1293 = vpop.f32.mrb[0].mxu0
  %v1294 = vadd.f32 %v167, %v1293
  %v1295 = vpop.f32.mrb[0].mxu0
  %1296 = vmatprep.mubr.f32.mxu0 0.0
  %1297 = vmatmul.mubr.f32.gmra.mrb[0].mxu0 %v549
  %v1298 = vpop.f32.mrb[0].mxu0
  %v1299 = vadd.f32 %v167, %v1298
  %v1300 = vpop.f32.mrb[0].mxu0
  %1301 = vmatprep.mubr.f32.mxu0 0.0
  %1302 = vmatmul.mubr.f32.gmra.mrb[0].mxu0 %v552
  %v1303 = vpop.f32.mrb[0].mxu0
  %v1304 = vadd.f32 %v167, %v1303
  %v1305 = vpop.f32.mrb[0].mxu0
  %1306 = vmatprep.mubr.f32.mxu0 0.0
  %1307 = vmatmul.mubr.f32.gmra.mrb[0].mxu0 %v555
  %v1308 = vpop.f32.mrb[0].mxu0
  %v1309 = vadd.f32 %v167, %v1308
  %v1310 = vpop.f32.mrb[0].mxu0
  %1311 = vmatprep.mubr.f32.mxu0 0.0
  %1312 = vmatmul.mubr.f32.gmra.mrb[0].mxu0 %v558
  %v1313 = vpop.f32.mrb[0].mxu0
  %v1314 = vadd.f32 %v167, %v1313
  %v1315 = vpop.f32.mrb[0].mxu0
  %1316 = vmatprep.mubr.f32.mxu0 0.0
  %1317 = vmatmul.mubr.f32.gmra.mrb[0].mxu0 %v561
  %v1318 = vpop.f32.mrb[0].mxu0
  %v1319 = vadd.f32 %v167, %v1318
  %v1320 = vpop.f32.mrb[0].mxu0
  %1321 = vmatprep.mubr.f32.mxu0 0.0
  %1322 = vmatmul.mubr.f32.gmra.mrb[0].mxu0 %v564
  %v1323 = vpop.f32.mrb[0].mxu0
  %v1324 = vadd.f32 %v167, %v1323
  %v1325 = vpop.f32.mrb[0].mxu0
  %1326 = vmatprep.mubr.f32.mxu0 0.0
  %1327 = vmatmul.mubr.f32.gmra.mrb[0].mxu0 %v567
  %v1328 = vpop.f32.mrb[0].mxu0
  %v1329 = vadd.f32 %v167, %v1328
  %v1330 = vpop.f32.mrb[0].mxu0
  %1331 = vmatprep.mubr.f32.mxu0 0.0
  %1332 = vmatmul.mubr.f32.gmra.mrb[0].mxu0 %v570
  %v1333 = vpop.f32.mrb[0].mxu0
  %v1334 = vadd.f32 %v167, %v1333
  %v1335 = vpop.f32.mrb[0].mxu0
  %1336 = vmatprep.mubr.f32.mxu0 0.0
  %1337 = vmatmul.mubr.f32.gmra.mrb[0].mxu0 %v573
  %v1338 = vpop.f32.mrb[0].mxu0
  %v1339 = vadd.f32 %v167, %v1338
  %v1340 = vpop.f32.mrb[0].mxu0
  %1341 = vmatprep.mubr.f32.mxu0 0.0
  %1342 = vmatmul.mubr.f32.gmra.mrb[0].mxu0 %v576
  %v1343 = vpop.f32.mrb[0].mxu0
  %v1344 = vadd.f32 %v167, %v1343
  %v1345 = vpop.f32.mrb[0].mxu0
  %1346 = vmatprep.mubr.f32.mxu0 0.0
  %1347 = vmatmul.mubr.f32.gmra.mrb[0].mxu0 %v579
  %v1348 = vpop.f32.mrb[0].mxu0
  %v1349 = vadd.f32 %v167, %v1348
  %v1350 = vpop.f32.mrb[0].mxu0
  %1351 = vmatprep.mubr.f32.mxu0 0.0
  %1352 = vmatmul.mubr.f32.gmra.mrb[0].mxu0 %v582
  %v1353 = vpop.f32.mrb[0].mxu0
  %v1354 = vadd.f32 %v167, %v1353
  %v1355 = vpop.f32.mrb[0].mxu0
  %1356 = vmatprep.mubr.f32.mxu0 0.0
  %1357 = vmatmul.mubr.f32.gmra.mrb[0].mxu0 %v585
  %v1358 = vpop.f32.mrb[0].mxu0
  %v1359 = vadd.f32 %v167, %v1358
  %v1360 = vpop.f32.mrb[0].mxu0
  %1361 = vmatprep.mubr.f32.mxu0 0.0
  %1362 = vmatmul.mubr.f32.gmra.mrb[0].mxu0 %v588
  %v1363 = vpop.f32.mrb[0].mxu0
  %v1364 = vadd.f32 %v167, %v1363
  %v1365 = vpop.f32.mrb[0].mxu0
  %1366 = vmatprep.mubr.f32.mxu0 0.0
  %1367 = vmatmul.mubr.f32.gmra.mrb[0].mxu0 %v591
  %v1368 = vpop.f32.mrb[0].mxu0
  %v1369 = vadd.f32 %v167, %v1368
  %v1370 = vpop.f32.mrb[0].mxu0
  %1371 = vmatprep.mubr.f32.mxu0 0.0
  %1372 = vmatmul.mubr.f32.gmra.mrb[0].mxu0 %v594
  %v1373 = vpop.f32.mrb[0].mxu0
  %v1374 = vadd.f32 %v167, %v1373
  %v1375 = vpop.f32.mrb[0].mxu0
  %1376 = vmatprep.mubr.f32.mxu0 0.0
  %1377 = vmatmul.mubr.f32.gmra.mrb[0].mxu0 %v597
  %v1378 = vpop.f32.mrb[0].mxu0
  %v1379 = vadd.f32 %v167, %v1378
  %v1380 = vpop.f32.mrb[0].mxu0
  %1381 = vmatprep.mubr.f32.mxu0 0.0
  %1382 = vmatmul.mubr.f32.gmra.mrb[0].mxu0 %v600
  %v1383 = vpop.f32.mrb[0].mxu0
  %v1384 = vadd.f32 %v167, %v1383
  %v1385 = vpop.f32.mrb[0].mxu0
  %1386 = vdwg.mxu0
  %v1387 = vmax.f32 %v669, 0.0
  %v1388 = vmax.f32 %v674, 0.0
  %v1389 = vmax.f32 %v679, 0.0
  %v1390 = vmax.f32 %v684, 0.0
  %v1391 = vmax.f32 %v689, 0.0
  %v1392 = vmax.f32 %v694, 0.0
  %v1393 = vmax.f32 %v699, 0.0
  %v1394 = vmax.f32 %v704, 0.0
  %v1395 = vmax.f32 %v709, 0.0
  %v1396 = vmax.f32 %v714, 0.0
  %v1397 = vmax.f32 %v719, 0.0
  %v1398 = vmax.f32 %v724, 0.0
  %v1399 = vmax.f32 %v729, 0.0
  %v1400 = vmax.f32 %v734, 0.0
  %v1401 = vmax.f32 %v739, 0.0
  %v1402 = vmax.f32 %v744, 0.0
  %v1403 = vmax.f32 %v749, 0.0
  %v1404 = vmax.f32 %v754, 0.0
  %v1405 = vmax.f32 %v759, 0.0
  %v1406 = vmax.f32 %v764, 0.0
  %v1407 = vmax.f32 %v769, 0.0
  %v1408 = vmax.f32 %v774, 0.0
  %v1409 = vmax.f32 %v779, 0.0
  %v1410 = vmax.f32 %v784, 0.0
  %v1411 = vmax.f32 %v789, 0.0
  %v1412 = vmax.f32 %v794, 0.0
  %v1413 = vmax.f32 %v799, 0.0
  %v1414 = vmax.f32 %v804, 0.0
  %v1415 = vmax.f32 %v809, 0.0
  %v1416 = vmax.f32 %v814, 0.0
  %v1417 = vmax.f32 %v819, 0.0
  %v1418 = vmax.f32 %v824, 0.0
  %v1419 = vmax.f32 %v829, 0.0
  %v1420 = vmax.f32 %v834, 0.0
  %v1421 = vmax.f32 %v839, 0.0
  %v1422 = vmax.f32 %v844, 0.0
  %v1423 = vmax.f32 %v849, 0.0
  %v1424 = vmax.f32 %v854, 0.0
  %v1425 = vmax.f32 %v859, 0.0
  %v1426 = vmax.f32 %v864, 0.0
  %v1427 = vmax.f32 %v869, 0.0
  %v1428 = vmax.f32 %v874, 0.0
  %v1429 = vmax.f32 %v879, 0.0
  %v1430 = vmax.f32 %v884, 0.0
  %v1431 = vmax.f32 %v889, 0.0
  %v1432 = vmax.f32 %v894, 0.0
  %v1433 = vmax.f32 %v899, 0.0
  %v1434 = vmax.f32 %v904, 0.0
  %v1435 = vmax.f32 %v909, 0.0
  %v1436 = vmax.f32 %v914, 0.0
  %v1437 = vmax.f32 %v919, 0.0
  %v1438 = vmax.f32 %v924, 0.0
  %v1439 = vmax.f32 %v929, 0.0
  %v1440 = vmax.f32 %v934, 0.0
  %v1441 = vmax.f32 %v939, 0.0
  %v1442 = vmax.f32 %v944, 0.0
  %v1443 = vmax.f32 %v949, 0.0
  %v1444 = vmax.f32 %v954, 0.0
  %v1445 = vmax.f32 %v959, 0.0
  %v1446 = vmax.f32 %v964, 0.0
  %v1447 = vmax.f32 %v969, 0.0
  %v1448 = vmax.f32 %v974, 0.0
  %v1449 = vmax.f32 %v979, 0.0
  %v1450 = vmax.f32 %v984, 0.0
  %v1451 = vmax.f32 %v989, 0.0
  %v1452 = vmax.f32 %v994, 0.0
  %v1453 = vmax.f32 %v999, 0.0
  %v1454 = vmax.f32 %v1004, 0.0
  %v1455 = vmax.f32 %v1009, 0.0
  %v1456 = vmax.f32 %v1014, 0.0
  %v1457 = vmax.f32 %v1019, 0.0
  %v1458 = vmax.f32 %v1024, 0.0
  %v1459 = vmax.f32 %v1029, 0.0
  %v1460 = vmax.f32 %v1034, 0.0
  %v1461 = vmax.f32 %v1039, 0.0
  %v1462 = vmax.f32 %v1044, 0.0
  %v1463 = vmax.f32 %v1049, 0.0
  %v1464 = vmax.f32 %v1054, 0.0
  %v1465 = vmax.f32 %v1059, 0.0
  %v1466 = vmax.f32 %v1064, 0.0
  %v1467 = vmax.f32 %v1069, 0.0
  %v1468 = vmax.f32 %v1074, 0.0
  %v1469 = vmax.f32 %v1079, 0.0
  %v1470 = vmax.f32 %v1084, 0.0
  %v1471 = vmax.f32 %v1089, 0.0
  %v1472 = vmax.f32 %v1094, 0.0
  %v1473 = vmax.f32 %v1099, 0.0
  %v1474 = vmax.f32 %v1104, 0.0
  %v1475 = vmax.f32 %v1109, 0.0
  %v1476 = vmax.f32 %v1114, 0.0
  %v1477 = vmax.f32 %v1119, 0.0
  %v1478 = vmax.f32 %v1124, 0.0
  %v1479 = vmax.f32 %v1129, 0.0
  %v1480 = vmax.f32 %v1134, 0.0
  %v1481 = vmax.f32 %v1139, 0.0
  %v1482 = vmax.f32 %v1144, 0.0
  %v1483 = vmax.f32 %v1149, 0.0
  %v1484 = vmax.f32 %v1154, 0.0
  %v1485 = vmax.f32 %v1159, 0.0
  %v1486 = vmax.f32 %v1164, 0.0
  %v1487 = vmax.f32 %v1169, 0.0
  %v1488 = vmax.f32 %v1174, 0.0
  %v1489 = vmax.f32 %v1179, 0.0
  %v1490 = vmax.f32 %v1184, 0.0
  %v1491 = vmax.f32 %v1189, 0.0
  %v1492 = vmax.f32 %v1194, 0.0
  %v1493 = vmax.f32 %v1199, 0.0
  %v1494 = vmax.f32 %v1204, 0.0
  %v1495 = vmax.f32 %v1209, 0.0
  %v1496 = vmax.f32 %v1214, 0.0
  %v1497 = vmax.f32 %v1219, 0.0
  %v1498 = vmax.f32 %v1224, 0.0
  %v1499 = vmax.f32 %v1229, 0.0
  %v1500 = vmax.f32 %v1234, 0.0
  %v1501 = vmax.f32 %v1239, 0.0
  %v1502 = vmax.f32 %v1244, 0.0
  %v1503 = vmax.f32 %v1249, 0.0
  %v1504 = vmax.f32 %v1254, 0.0
  %v1505 = vmax.f32 %v1259, 0.0
  %v1506 = vmax.f32 %v1264, 0.0
  %v1507 = vmax.f32 %v1269, 0.0
  %v1508 = vmax.f32 %v1274, 0.0
  %v1509 = vmax.f32 %v1279, 0.0
  %v1510 = vmax.f32 %v1284, 0.0
  %v1511 = vmax.f32 %v1289, 0.0
  %v1512 = vmax.f32 %v1294, 0.0
  %v1513 = vmax.f32 %v1299, 0.0
  %v1514 = vmax.f32 %v1304, 0.0
  %v1515 = vmax.f32 %v1309, 0.0
  %v1516 = vmax.f32 %v1314, 0.0
  %v1517 = vmax.f32 %v1319, 0.0
  %v1518 = vmax.f32 %v1324, 0.0
  %v1519 = vmax.f32 %v1329, 0.0
  %v1520 = vmax.f32 %v1334, 0.0
  %v1521 = vmax.f32 %v1339, 0.0
  %v1522 = vmax.f32 %v1344, 0.0
  %v1523 = vmax.f32 %v1349, 0.0
  %v1524 = vmax.f32 %v1354, 0.0
  %v1525 = vmax.f32 %v1359, 0.0
  %v1526 = vmax.f32 %v1364, 0.0
  %v1527 = vmax.f32 %v1369, 0.0
  %v1528 = vmax.f32 %v1374, 0.0
  %v1529 = vmax.f32 %v1379, 0.0
  %v1530 = vmax.f32 %v1384, 0.0
  %1531 = vst [vmem:[#allocation2] sm:$0xff] %v1387
  %1532 = vst [vmem:[#allocation2 + $0x8] sm:$0xff] %v1388
  %1533 = vst [vmem:[#allocation2 + $0x10] sm:$0xff] %v1389
  %1534 = vst [vmem:[#allocation2 + $0x18] sm:$0xff] %v1390
  %1535 = vst [vmem:[#allocation2 + $0x20] sm:$0xff] %v1391
  %1536 = vst [vmem:[#allocation2 + $0x28] sm:$0xff] %v1392
  %1537 = vst [vmem:[#allocation2 + $0x30] sm:$0xff] %v1393
  %1538 = vst [vmem:[#allocation2 + $0x38] sm:$0xff] %v1394
  %1539 = vst [vmem:[#allocation2 + $0x40] sm:$0xff] %v1395
  %1540 = vst [vmem:[#allocation2 + $0x48] sm:$0xff] %v1396
  %1541 = vst [vmem:[#allocation2 + $0x50] sm:$0xff] %v1397
  %1542 = vst [vmem:[#allocation2 + $0x58] sm:$0xff] %v1398
  %1543 = vst [vmem:[#allocation2 + $0x60] sm:$0xff] %v1399
  %1544 = vst [vmem:[#allocation2 + $0x68] sm:$0xff] %v1400
  %1545 = vst [vmem:[#allocation2 + $0x70] sm:$0xff] %v1401
  %1546 = vst [vmem:[#allocation2 + $0x78] sm:$0xff] %v1402
  %1547 = vst [vmem:[#allocation2 + $0x80] sm:$0xff] %v1403
  %1548 = vst [vmem:[#allocation2 + $0x88] sm:$0xff] %v1404
  %1549 = vst [vmem:[#allocation2 + $0x90] sm:$0xff] %v1405
  %1550 = vst [vmem:[#allocation2 + $0x98] sm:$0xff] %v1406
  %1551 = vst [vmem:[#allocation2 + $0xa0] sm:$0xff] %v1407
  %1552 = vst [vmem:[#allocation2 + $0xa8] sm:$0xff] %v1408
  %1553 = vst [vmem:[#allocation2 + $0xb0] sm:$0xff] %v1409
  %1554 = vst [vmem:[#allocation2 + $0xb8] sm:$0xff] %v1410
  %1555 = vst [vmem:[#allocation2 + $0xc0] sm:$0xff] %v1411
  %1556 = vst [vmem:[#allocation2 + $0xc8] sm:$0xff] %v1412
  %1557 = vst [vmem:[#allocation2 + $0xd0] sm:$0xff] %v1413
  %1558 = vst [vmem:[#allocation2 + $0xd8] sm:$0xff] %v1414
  %1559 = vst [vmem:[#allocation2 + $0xe0] sm:$0xff] %v1415
  %1560 = vst [vmem:[#allocation2 + $0xe8] sm:$0xff] %v1416
  %1561 = vst [vmem:[#allocation2 + $0xf0] sm:$0xff] %v1417
  %1562 = vst [vmem:[#allocation2 + $0xf8] sm:$0xff] %v1418
  %1563 = vst [vmem:[#allocation2 + $0x100] sm:$0xff] %v1419
  %1564 = vst [vmem:[#allocation2 + $0x108] sm:$0xff] %v1420
  %1565 = vst [vmem:[#allocation2 + $0x110] sm:$0xff] %v1421
  %1566 = vst [vmem:[#allocation2 + $0x118] sm:$0xff] %v1422
  %1567 = vst [vmem:[#allocation2 + $0x120] sm:$0xff] %v1423
  %1568 = vst [vmem:[#allocation2 + $0x128] sm:$0xff] %v1424
  %1569 = vst [vmem:[#allocation2 + $0x130] sm:$0xff] %v1425
  %1570 = vst [vmem:[#allocation2 + $0x138] sm:$0xff] %v1426
  %1571 = vst [vmem:[#allocation2 + $0x140] sm:$0xff] %v1427
  %1572 = vst [vmem:[#allocation2 + $0x148] sm:$0xff] %v1428
  %1573 = vst [vmem:[#allocation2 + $0x150] sm:$0xff] %v1429
  %1574 = vst [vmem:[#allocation2 + $0x158] sm:$0xff] %v1430
  %1575 = vst [vmem:[#allocation2 + $0x160] sm:$0xff] %v1431
  %1576 = vst [vmem:[#allocation2 + $0x168] sm:$0xff] %v1432
  %1577 = vst [vmem:[#allocation2 + $0x170] sm:$0xff] %v1433
  %1578 = vst [vmem:[#allocation2 + $0x178] sm:$0xff] %v1434
  %1579 = vst [vmem:[#allocation2 + $0x180] sm:$0xff] %v1435
  %1580 = vst [vmem:[#allocation2 + $0x188] sm:$0xff] %v1436
  %1581 = vst [vmem:[#allocation2 + $0x190] sm:$0xff] %v1437
  %1582 = vst [vmem:[#allocation2 + $0x198] sm:$0xff] %v1438
  %1583 = vst [vmem:[#allocation2 + $0x1a0] sm:$0xff] %v1439
  %1584 = vst [vmem:[#allocation2 + $0x1a8] sm:$0xff] %v1440
  %1585 = vst [vmem:[#allocation2 + $0x1b0] sm:$0xff] %v1441
  %1586 = vst [vmem:[#allocation2 + $0x1b8] sm:$0xff] %v1442
  %1587 = vst [vmem:[#allocation2 + $0x1c0] sm:$0xff] %v1443
  %1588 = vst [vmem:[#allocation2 + $0x1c8] sm:$0xff] %v1444
  %1589 = vst [vmem:[#allocation2 + $0x1d0] sm:$0xff] %v1445
  %1590 = vst [vmem:[#allocation2 + $0x1d8] sm:$0xff] %v1446
  %1591 = vst [vmem:[#allocation2 + $0x1e0] sm:$0xff] %v1447
  %1592 = vst [vmem:[#allocation2 + $0x1e8] sm:$0xff] %v1448
  %1593 = vst [vmem:[#allocation2 + $0x1f0] sm:$0xff] %v1449
  %1594 = vst [vmem:[#allocation2 + $0x1f8] sm:$0xff] %v1450
  %1595 = vst [vmem:[#allocation2 + $0x200] sm:$0xff] %v1451
  %1596 = vst [vmem:[#allocation2 + $0x208] sm:$0xff] %v1452
  %1597 = vst [vmem:[#allocation2 + $0x210] sm:$0xff] %v1453
  %1598 = vst [vmem:[#allocation2 + $0x218] sm:$0xff] %v1454
  %1599 = vst [vmem:[#allocation2 + $0x220] sm:$0xff] %v1455
  %1600 = vst [vmem:[#allocation2 + $0x228] sm:$0xff] %v1456
  %1601 = vst [vmem:[#allocation2 + $0x230] sm:$0xff] %v1457
  %1602 = vst [vmem:[#allocation2 + $0x238] sm:$0xff] %v1458
  %1603 = vst [vmem:[#allocation2 + $0x240] sm:$0xff] %v1459
  %1604 = vst [vmem:[#allocation2 + $0x248] sm:$0xff] %v1460
  %1605 = vst [vmem:[#allocation2 + $0x250] sm:$0xff] %v1461
  %1606 = vst [vmem:[#allocation2 + $0x258] sm:$0xff] %v1462
  %1607 = vst [vmem:[#allocation2 + $0x260] sm:$0xff] %v1463
  %1608 = vst [vmem:[#allocation2 + $0x268] sm:$0xff] %v1464
  %1609 = vst [vmem:[#allocation2 + $0x270] sm:$0xff] %v1465
  %1610 = vst [vmem:[#allocation2 + $0x278] sm:$0xff] %v1466
  %1611 = vst [vmem:[#allocation2 + $0x280] sm:$0xff] %v1467
  %1612 = vst [vmem:[#allocation2 + $0x288] sm:$0xff] %v1468
  %1613 = vst [vmem:[#allocation2 + $0x290] sm:$0xff] %v1469
  %1614 = vst [vmem:[#allocation2 + $0x298] sm:$0xff] %v1470
  %1615 = vst [vmem:[#allocation2 + $0x2a0] sm:$0xff] %v1471
  %1616 = vst [vmem:[#allocation2 + $0x2a8] sm:$0xff] %v1472
  %1617 = vst [vmem:[#allocation2 + $0x2b0] sm:$0xff] %v1473
  %1618 = vst [vmem:[#allocation2 + $0x2b8] sm:$0xff] %v1474
  %1619 = vst [vmem:[#allocation2 + $0x2c0] sm:$0xff] %v1475
  %1620 = vst [vmem:[#allocation2 + $0x2c8] sm:$0xff] %v1476
  %1621 = vst [vmem:[#allocation2 + $0x2d0] sm:$0xff] %v1477
  %1622 = vst [vmem:[#allocation2 + $0x2d8] sm:$0xff] %v1478
  %1623 = vst [vmem:[#allocation2 + $0x2e0] sm:$0xff] %v1479
  %1624 = vst [vmem:[#allocation2 + $0x2e8] sm:$0xff] %v1480
  %1625 = vst [vmem:[#allocation2 + $0x2f0] sm:$0xff] %v1481
  %1626 = vst [vmem:[#allocation2 + $0x2f8] sm:$0xff] %v1482
  %1627 = vst [vmem:[#allocation2 + $0x300] sm:$0xff] %v1483
  %1628 = vst [vmem:[#allocation2 + $0x308] sm:$0xff] %v1484
  %1629 = vst [vmem:[#allocation2 + $0x310] sm:$0xff] %v1485
  %1630 = vst [vmem:[#allocation2 + $0x318] sm:$0xff] %v1486
  %1631 = vst [vmem:[#allocation2 + $0x320] sm:$0xff] %v1487
  %1632 = vst [vmem:[#allocation2 + $0x328] sm:$0xff] %v1488
  %1633 = vst [vmem:[#allocation2 + $0x330] sm:$0xff] %v1489
  %1634 = vst [vmem:[#allocation2 + $0x338] sm:$0xff] %v1490
  %1635 = vst [vmem:[#allocation2 + $0x340] sm:$0xff] %v1491
  %1636 = vst [vmem:[#allocation2 + $0x348] sm:$0xff] %v1492
  %1637 = vst [vmem:[#allocation2 + $0x350] sm:$0xff] %v1493
  %1638 = vst [vmem:[#allocation2 + $0x358] sm:$0xff] %v1494
  %1639 = vst [vmem:[#allocation2 + $0x360] sm:$0xff] %v1495
  %1640 = vst [vmem:[#allocation2 + $0x368] sm:$0xff] %v1496
  %1641 = vst [vmem:[#allocation2 + $0x370] sm:$0xff] %v1497
  %1642 = vst [vmem:[#allocation2 + $0x378] sm:$0xff] %v1498
  %1643 = vst [vmem:[#allocation2 + $0x380] sm:$0xff] %v1499
  %1644 = vst [vmem:[#allocation2 + $0x388] sm:$0xff] %v1500
  %1645 = vst [vmem:[#allocation2 + $0x390] sm:$0xff] %v1501
  %1646 = vst [vmem:[#allocation2 + $0x398] sm:$0xff] %v1502
  %1647 = vst [vmem:[#allocation2 + $0x3a0] sm:$0xff] %v1503
  %1648 = vst [vmem:[#allocation2 + $0x3a8] sm:$0xff] %v1504
  %1649 = vst [vmem:[#allocation2 + $0x3b0] sm:$0xff] %v1505
  %1650 = vst [vmem:[#allocation2 + $0x3b8] sm:$0xff] %v1506
  %1651 = vst [vmem:[#allocation2 + $0x3c0] sm:$0xff] %v1507
  %1652 = vst [vmem:[#allocation2 + $0x3c8] sm:$0xff] %v1508
  %1653 = vst [vmem:[#allocation2 + $0x3d0] sm:$0xff] %v1509
  %1654 = vst [vmem:[#allocation2 + $0x3d8] sm:$0xff] %v1510
  %1655 = vst [vmem:[#allocation2 + $0x3e0] sm:$0xff] %v1511
  %1656 = vst [vmem:[#allocation2 + $0x3e8] sm:$0xff] %v1512
  %1657 = vst [vmem:[#allocation2 + $0x3f0] sm:$0xff] %v1513
  %1658 = vst [vmem:[#allocation2 + $0x3f8] sm:$0xff] %v1514
  %1659 = vst [vmem:[#allocation2 + $0x400] sm:$0xff] %v1515
  %1660 = vst [vmem:[#allocation2 + $0x408] sm:$0xff] %v1516
  %1661 = vst [vmem:[#allocation2 + $0x410] sm:$0xff] %v1517
  %1662 = vst [vmem:[#allocation2 + $0x418] sm:$0xff] %v1518
  %1663 = vst [vmem:[#allocation2 + $0x420] sm:$0xff] %v1519
  %1664 = vst [vmem:[#allocation2 + $0x428] sm:$0xff] %v1520
  %1665 = vst [vmem:[#allocation2 + $0x430] sm:$0xff] %v1521
  %1666 = vst [vmem:[#allocation2 + $0x438] sm:$0xff] %v1522
  %1667 = vst [vmem:[#allocation2 + $0x440] sm:$0xff] %v1523
  %1668 = vst [vmem:[#allocation2 + $0x448] sm:$0xff] %v1524
  %1669 = vst [vmem:[#allocation2 + $0x450] sm:$0xff] %v1525
  %1670 = vst [vmem:[#allocation2 + $0x458] sm:$0xff] %v1526
  %1671 = vst [vmem:[#allocation2 + $0x460] sm:$0xff] %v1527
  %1672 = vst [vmem:[#allocation2 + $0x468] sm:$0xff] %v1528
  %1673 = vst [vmem:[#allocation2 + $0x470] sm:$0xff] %v1529
  %1674 = vst [vmem:[#allocation2 + $0x478] sm:$0xff] %v1530
  %v1675 = vld [vmem:[#allocation2] ss:$2 sm:$0xff]
  %s1676 = scalar_lea.vmem [#allocation2], 16
  %v1677 = vld [vmem:[%s1676] ss:$2 sm:$0xf]
  %s1678 = scalar_lea.vmem [#allocation2], 48
  %v1679 = vld [vmem:[%s1678] ss:$2 sm:$0xff]
  %s1680 = scalar_lea.vmem [#allocation2], 64
  %v1681 = vld [vmem:[%s1680] ss:$2 sm:$0xf]
  %s1682 = scalar_lea.vmem [#allocation2], 96
  %v1683 = vld [vmem:[%s1682] ss:$2 sm:$0xff]
  %s1684 = scalar_lea.vmem [#allocation2], 112
  %v1685 = vld [vmem:[%s1684] ss:$2 sm:$0xf]
  %s1686 = scalar_lea.vmem [#allocation2], 144
  %v1687 = vld [vmem:[%s1686] ss:$2 sm:$0xff]
  %s1688 = scalar_lea.vmem [#allocation2], 160
  %v1689 = vld [vmem:[%s1688] ss:$2 sm:$0xf]
  %s1690 = scalar_lea.vmem [#allocation2], 192
  %v1691 = vld [vmem:[%s1690] ss:$2 sm:$0xff]
  %s1692 = scalar_lea.vmem [#allocation2], 208
  %v1693 = vld [vmem:[%s1692] ss:$2 sm:$0xf]
  %s1694 = scalar_lea.vmem [#allocation2], 240
  %v1695 = vld [vmem:[%s1694] ss:$2 sm:$0xff]
  %s1696 = scalar_lea.vmem [#allocation2], 256
  %v1697 = vld [vmem:[%s1696] ss:$2 sm:$0xf]
  %s1698 = scalar_lea.vmem [#allocation2], 288
  %v1699 = vld [vmem:[%s1698] ss:$2 sm:$0xff]
  %s1700 = scalar_lea.vmem [#allocation2], 304
  %v1701 = vld [vmem:[%s1700] ss:$2 sm:$0xf]
  %s1702 = scalar_lea.vmem [#allocation2], 336
  %v1703 = vld [vmem:[%s1702] ss:$2 sm:$0xff]
  %s1704 = scalar_lea.vmem [#allocation2], 352
  %v1705 = vld [vmem:[%s1704] ss:$2 sm:$0xf]
  %s1706 = scalar_lea.vmem [#allocation2], 384
  %v1707 = vld [vmem:[%s1706] ss:$2 sm:$0xff]
  %s1708 = scalar_lea.vmem [#allocation2], 400
  %v1709 = vld [vmem:[%s1708] ss:$2 sm:$0xf]
  %s1710 = scalar_lea.vmem [#allocation2], 432
  %v1711 = vld [vmem:[%s1710] ss:$2 sm:$0xff]
  %s1712 = scalar_lea.vmem [#allocation2], 448
  %v1713 = vld [vmem:[%s1712] ss:$2 sm:$0xf]
  %s1714 = scalar_lea.vmem [#allocation2], 480
  %v1715 = vld [vmem:[%s1714] ss:$2 sm:$0xff]
  %s1716 = scalar_lea.vmem [#allocation2], 496
  %v1717 = vld [vmem:[%s1716] ss:$2 sm:$0xf]
  %s1718 = scalar_lea.vmem [#allocation2], 528
  %v1719 = vld [vmem:[%s1718] ss:$2 sm:$0xff]
  %s1720 = scalar_lea.vmem [#allocation2], 544
  %v1721 = vld [vmem:[%s1720] ss:$2 sm:$0xf]
  %s1722 = scalar_lea.vmem [#allocation2], 576
  %v1723 = vld [vmem:[%s1722] ss:$2 sm:$0xff]
  %s1724 = scalar_lea.vmem [#allocation2], 592
  %v1725 = vld [vmem:[%s1724] ss:$2 sm:$0xf]
  %s1726 = scalar_lea.vmem [#allocation2], 624
  %v1727 = vld [vmem:[%s1726] ss:$2 sm:$0xff]
  %s1728 = scalar_lea.vmem [#allocation2], 640
  %v1729 = vld [vmem:[%s1728] ss:$2 sm:$0xf]
  %s1730 = scalar_lea.vmem [#allocation2], 672
  %v1731 = vld [vmem:[%s1730] ss:$2 sm:$0xff]
  %s1732 = scalar_lea.vmem [#allocation2], 688
  %v1733 = vld [vmem:[%s1732] ss:$2 sm:$0xf]
  %s1734 = scalar_lea.vmem [#allocation2], 720
  %v1735 = vld [vmem:[%s1734] ss:$2 sm:$0xff]
  %s1736 = scalar_lea.vmem [#allocation2], 736
  %v1737 = vld [vmem:[%s1736] ss:$2 sm:$0xf]
  %s1738 = scalar_lea.vmem [#allocation2], 768
  %v1739 = vld [vmem:[%s1738] ss:$2 sm:$0xff]
  %s1740 = scalar_lea.vmem [#allocation2], 784
  %v1741 = vld [vmem:[%s1740] ss:$2 sm:$0xf]
  %s1742 = scalar_lea.vmem [#allocation2], 816
  %v1743 = vld [vmem:[%s1742] ss:$2 sm:$0xff]
  %s1744 = scalar_lea.vmem [#allocation2], 832
  %v1745 = vld [vmem:[%s1744] ss:$2 sm:$0xf]
  %s1746 = scalar_lea.vmem [#allocation2], 864
  %v1747 = vld [vmem:[%s1746] ss:$2 sm:$0xff]
  %s1748 = scalar_lea.vmem [#allocation2], 880
  %v1749 = vld [vmem:[%s1748] ss:$2 sm:$0xf]
  %s1750 = scalar_lea.vmem [#allocation2], 912
  %v1751 = vld [vmem:[%s1750] ss:$2 sm:$0xff]
  %s1752 = scalar_lea.vmem [#allocation2], 928
  %v1753 = vld [vmem:[%s1752] ss:$2 sm:$0xf]
  %s1754 = scalar_lea.vmem [#allocation2], 960
  %v1755 = vld [vmem:[%s1754] ss:$2 sm:$0xff]
  %s1756 = scalar_lea.vmem [#allocation2], 976
  %v1757 = vld [vmem:[%s1756] ss:$2 sm:$0xf]
  %s1758 = scalar_lea.vmem [#allocation2], 1008
  %v1759 = vld [vmem:[%s1758] ss:$2 sm:$0xff]
  %s1760 = scalar_lea.vmem [#allocation2], 1024
  %v1761 = vld [vmem:[%s1760] ss:$2 sm:$0xf]
  %s1762 = scalar_lea.vmem [#allocation2], 1056
  %v1763 = vld [vmem:[%s1762] ss:$2 sm:$0xff]
  %s1764 = scalar_lea.vmem [#allocation2], 1072
  %v1765 = vld [vmem:[%s1764] ss:$2 sm:$0xf]
  %s1766 = scalar_lea.vmem [#allocation2], 1104
  %v1767 = vld [vmem:[%s1766] ss:$2 sm:$0xff]
  %s1768 = scalar_lea.vmem [#allocation2], 1120
  %v1769 = vld [vmem:[%s1768] ss:$2 sm:$0xf]
  %s1770 = scalar_lea.vmem [#allocation2], 1
  %v1771 = vld [vmem:[%s1770] ss:$2 sm:$0xff]
  %s1772 = scalar_lea.vmem [#allocation2], 17
  %v1773 = vld [vmem:[%s1772] ss:$2 sm:$0xf]
  %s1774 = scalar_lea.vmem [#allocation2], 49
  %v1775 = vld [vmem:[%s1774] ss:$2 sm:$0xff]
  %s1776 = scalar_lea.vmem [#allocation2], 65
  %v1777 = vld [vmem:[%s1776] ss:$2 sm:$0xf]
  %s1778 = scalar_lea.vmem [#allocation2], 97
  %v1779 = vld [vmem:[%s1778] ss:$2 sm:$0xff]
  %s1780 = scalar_lea.vmem [#allocation2], 113
  %v1781 = vld [vmem:[%s1780] ss:$2 sm:$0xf]
  %s1782 = scalar_lea.vmem [#allocation2], 145
  %v1783 = vld [vmem:[%s1782] ss:$2 sm:$0xff]
  %s1784 = scalar_lea.vmem [#allocation2], 161
  %v1785 = vld [vmem:[%s1784] ss:$2 sm:$0xf]
  %s1786 = scalar_lea.vmem [#allocation2], 193
  %v1787 = vld [vmem:[%s1786] ss:$2 sm:$0xff]
  %s1788 = scalar_lea.vmem [#allocation2], 209
  %v1789 = vld [vmem:[%s1788] ss:$2 sm:$0xf]
  %s1790 = scalar_lea.vmem [#allocation2], 241
  %v1791 = vld [vmem:[%s1790] ss:$2 sm:$0xff]
  %s1792 = scalar_lea.vmem [#allocation2], 257
  %v1793 = vld [vmem:[%s1792] ss:$2 sm:$0xf]
  %s1794 = scalar_lea.vmem [#allocation2], 289
  %v1795 = vld [vmem:[%s1794] ss:$2 sm:$0xff]
  %s1796 = scalar_lea.vmem [#allocation2], 305
  %v1797 = vld [vmem:[%s1796] ss:$2 sm:$0xf]
  %s1798 = scalar_lea.vmem [#allocation2], 337
  %v1799 = vld [vmem:[%s1798] ss:$2 sm:$0xff]
  %s1800 = scalar_lea.vmem [#allocation2], 353
  %v1801 = vld [vmem:[%s1800] ss:$2 sm:$0xf]
  %s1802 = scalar_lea.vmem [#allocation2], 385
  %v1803 = vld [vmem:[%s1802] ss:$2 sm:$0xff]
  %s1804 = scalar_lea.vmem [#allocation2], 401
  %v1805 = vld [vmem:[%s1804] ss:$2 sm:$0xf]
  %s1806 = scalar_lea.vmem [#allocation2], 433
  %v1807 = vld [vmem:[%s1806] ss:$2 sm:$0xff]
  %s1808 = scalar_lea.vmem [#allocation2], 449
  %v1809 = vld [vmem:[%s1808] ss:$2 sm:$0xf]
  %s1810 = scalar_lea.vmem [#allocation2], 481
  %v1811 = vld [vmem:[%s1810] ss:$2 sm:$0xff]
  %s1812 = scalar_lea.vmem [#allocation2], 497
  %v1813 = vld [vmem:[%s1812] ss:$2 sm:$0xf]
  %s1814 = scalar_lea.vmem [#allocation2], 529
  %v1815 = vld [vmem:[%s1814] ss:$2 sm:$0xff]
  %s1816 = scalar_lea.vmem [#allocation2], 545
  %v1817 = vld [vmem:[%s1816] ss:$2 sm:$0xf]
  %s1818 = scalar_lea.vmem [#allocation2], 577
  %v1819 = vld [vmem:[%s1818] ss:$2 sm:$0xff]
  %s1820 = scalar_lea.vmem [#allocation2], 593
  %v1821 = vld [vmem:[%s1820] ss:$2 sm:$0xf]
  %s1822 = scalar_lea.vmem [#allocation2], 625
  %v1823 = vld [vmem:[%s1822] ss:$2 sm:$0xff]
  %s1824 = scalar_lea.vmem [#allocation2], 641
  %v1825 = vld [vmem:[%s1824] ss:$2 sm:$0xf]
  %s1826 = scalar_lea.vmem [#allocation2], 673
  %v1827 = vld [vmem:[%s1826] ss:$2 sm:$0xff]
  %s1828 = scalar_lea.vmem [#allocation2], 689
  %v1829 = vld [vmem:[%s1828] ss:$2 sm:$0xf]
  %s1830 = scalar_lea.vmem [#allocation2], 721
  %v1831 = vld [vmem:[%s1830] ss:$2 sm:$0xff]
  %s1832 = scalar_lea.vmem [#allocation2], 737
  %v1833 = vld [vmem:[%s1832] ss:$2 sm:$0xf]
  %s1834 = scalar_lea.vmem [#allocation2], 769
  %v1835 = vld [vmem:[%s1834] ss:$2 sm:$0xff]
  %s1836 = scalar_lea.vmem [#allocation2], 785
  %v1837 = vld [vmem:[%s1836] ss:$2 sm:$0xf]
  %s1838 = scalar_lea.vmem [#allocation2], 817
  %v1839 = vld [vmem:[%s1838] ss:$2 sm:$0xff]
  %s1840 = scalar_lea.vmem [#allocation2], 833
  %v1841 = vld [vmem:[%s1840] ss:$2 sm:$0xf]
  %s1842 = scalar_lea.vmem [#allocation2], 865
  %v1843 = vld [vmem:[%s1842] ss:$2 sm:$0xff]
  %s1844 = scalar_lea.vmem [#allocation2], 881
  %v1845 = vld [vmem:[%s1844] ss:$2 sm:$0xf]
  %s1846 = scalar_lea.vmem [#allocation2], 913
  %v1847 = vld [vmem:[%s1846] ss:$2 sm:$0xff]
  %s1848 = scalar_lea.vmem [#allocation2], 929
  %v1849 = vld [vmem:[%s1848] ss:$2 sm:$0xf]
  %s1850 = scalar_lea.vmem [#allocation2], 961
  %v1851 = vld [vmem:[%s1850] ss:$2 sm:$0xff]
  %s1852 = scalar_lea.vmem [#allocation2], 977
  %v1853 = vld [vmem:[%s1852] ss:$2 sm:$0xf]
  %s1854 = scalar_lea.vmem [#allocation2], 1009
  %v1855 = vld [vmem:[%s1854] ss:$2 sm:$0xff]
  %s1856 = scalar_lea.vmem [#allocation2], 1025
  %v1857 = vld [vmem:[%s1856] ss:$2 sm:$0xf]
  %s1858 = scalar_lea.vmem [#allocation2], 1057
  %v1859 = vld [vmem:[%s1858] ss:$2 sm:$0xff]
  %s1860 = scalar_lea.vmem [#allocation2], 1073
  %v1861 = vld [vmem:[%s1860] ss:$2 sm:$0xf]
  %s1862 = scalar_lea.vmem [#allocation2], 1105
  %v1863 = vld [vmem:[%s1862] ss:$2 sm:$0xff]
  %s1864 = scalar_lea.vmem [#allocation2], 1121
  %v1865 = vld [vmem:[%s1864] ss:$2 sm:$0xf]
  %s1866 = scalar_lea.vmem [#allocation2], 24
  %v1867 = vld [vmem:[%s1866] ss:$2 sm:$0xff]
  %s1868 = scalar_lea.vmem %s1866, 16 [#allocation2]
  %v1869 = vld [vmem:[%s1868] ss:$2 sm:$0xf]
  %s1870 = scalar_lea.vmem %s1866, 48 [#allocation2]
  %v1871 = vld [vmem:[%s1870] ss:$2 sm:$0xff]
  %s1872 = scalar_lea.vmem %s1866, 64 [#allocation2]
  %v1873 = vld [vmem:[%s1872] ss:$2 sm:$0xf]
  %s1874 = scalar_lea.vmem %s1866, 96 [#allocation2]
  %v1875 = vld [vmem:[%s1874] ss:$2 sm:$0xff]
  %s1876 = scalar_lea.vmem %s1866, 112 [#allocation2]
  %v1877 = vld [vmem:[%s1876] ss:$2 sm:$0xf]
  %s1878 = scalar_lea.vmem %s1866, 144 [#allocation2]
  %v1879 = vld [vmem:[%s1878] ss:$2 sm:$0xff]
  %s1880 = scalar_lea.vmem %s1866, 160 [#allocation2]
  %v1881 = vld [vmem:[%s1880] ss:$2 sm:$0xf]
  %s1882 = scalar_lea.vmem %s1866, 192 [#allocation2]
  %v1883 = vld [vmem:[%s1882] ss:$2 sm:$0xff]
  %s1884 = scalar_lea.vmem %s1866, 208 [#allocation2]
  %v1885 = vld [vmem:[%s1884] ss:$2 sm:$0xf]
  %s1886 = scalar_lea.vmem %s1866, 240 [#allocation2]
  %v1887 = vld [vmem:[%s1886] ss:$2 sm:$0xff]
  %s1888 = scalar_lea.vmem %s1866, 256 [#allocation2]
  %v1889 = vld [vmem:[%s1888] ss:$2 sm:$0xf]
  %s1890 = scalar_lea.vmem %s1866, 288 [#allocation2]
  %v1891 = vld [vmem:[%s1890] ss:$2 sm:$0xff]
  %s1892 = scalar_lea.vmem %s1866, 304 [#allocation2]
  %v1893 = vld [vmem:[%s1892] ss:$2 sm:$0xf]
  %s1894 = scalar_lea.vmem %s1866, 336 [#allocation2]
  %v1895 = vld [vmem:[%s1894] ss:$2 sm:$0xff]
  %s1896 = scalar_lea.vmem %s1866, 352 [#allocation2]
  %v1897 = vld [vmem:[%s1896] ss:$2 sm:$0xf]
  %s1898 = scalar_lea.vmem %s1866, 384 [#allocation2]
  %v1899 = vld [vmem:[%s1898] ss:$2 sm:$0xff]
  %s1900 = scalar_lea.vmem %s1866, 400 [#allocation2]
  %v1901 = vld [vmem:[%s1900] ss:$2 sm:$0xf]
  %s1902 = scalar_lea.vmem %s1866, 432 [#allocation2]
  %v1903 = vld [vmem:[%s1902] ss:$2 sm:$0xff]
  %s1904 = scalar_lea.vmem %s1866, 448 [#allocation2]
  %v1905 = vld [vmem:[%s1904] ss:$2 sm:$0xf]
  %s1906 = scalar_lea.vmem %s1866, 480 [#allocation2]
  %v1907 = vld [vmem:[%s1906] ss:$2 sm:$0xff]
  %s1908 = scalar_lea.vmem %s1866, 496 [#allocation2]
  %v1909 = vld [vmem:[%s1908] ss:$2 sm:$0xf]
  %s1910 = scalar_lea.vmem %s1866, 528 [#allocation2]
  %v1911 = vld [vmem:[%s1910] ss:$2 sm:$0xff]
  %s1912 = scalar_lea.vmem %s1866, 544 [#allocation2]
  %v1913 = vld [vmem:[%s1912] ss:$2 sm:$0xf]
  %s1914 = scalar_lea.vmem %s1866, 576 [#allocation2]
  %v1915 = vld [vmem:[%s1914] ss:$2 sm:$0xff]
  %s1916 = scalar_lea.vmem %s1866, 592 [#allocation2]
  %v1917 = vld [vmem:[%s1916] ss:$2 sm:$0xf]
  %s1918 = scalar_lea.vmem %s1866, 624 [#allocation2]
  %v1919 = vld [vmem:[%s1918] ss:$2 sm:$0xff]
  %s1920 = scalar_lea.vmem %s1866, 640 [#allocation2]
  %v1921 = vld [vmem:[%s1920] ss:$2 sm:$0xf]
  %s1922 = scalar_lea.vmem %s1866, 672 [#allocation2]
  %v1923 = vld [vmem:[%s1922] ss:$2 sm:$0xff]
  %s1924 = scalar_lea.vmem %s1866, 688 [#allocation2]
  %v1925 = vld [vmem:[%s1924] ss:$2 sm:$0xf]
  %s1926 = scalar_lea.vmem %s1866, 720 [#allocation2]
  %v1927 = vld [vmem:[%s1926] ss:$2 sm:$0xff]
  %s1928 = scalar_lea.vmem %s1866, 736 [#allocation2]
  %v1929 = vld [vmem:[%s1928] ss:$2 sm:$0xf]
  %s1930 = scalar_lea.vmem %s1866, 768 [#allocation2]
  %v1931 = vld [vmem:[%s1930] ss:$2 sm:$0xff]
  %s1932 = scalar_lea.vmem %s1866, 784 [#allocation2]
  %v1933 = vld [vmem:[%s1932] ss:$2 sm:$0xf]
  %s1934 = scalar_lea.vmem %s1866, 816 [#allocation2]
  %v1935 = vld [vmem:[%s1934] ss:$2 sm:$0xff]
  %s1936 = scalar_lea.vmem %s1866, 832 [#allocation2]
  %v1937 = vld [vmem:[%s1936] ss:$2 sm:$0xf]
  %s1938 = scalar_lea.vmem %s1866, 864 [#allocation2]
  %v1939 = vld [vmem:[%s1938] ss:$2 sm:$0xff]
  %s1940 = scalar_lea.vmem %s1866, 880 [#allocation2]
  %v1941 = vld [vmem:[%s1940] ss:$2 sm:$0xf]
  %s1942 = scalar_lea.vmem %s1866, 912 [#allocation2]
  %v1943 = vld [vmem:[%s1942] ss:$2 sm:$0xff]
  %s1944 = scalar_lea.vmem %s1866, 928 [#allocation2]
  %v1945 = vld [vmem:[%s1944] ss:$2 sm:$0xf]
  %s1946 = scalar_lea.vmem %s1866, 960 [#allocation2]
  %v1947 = vld [vmem:[%s1946] ss:$2 sm:$0xff]
  %s1948 = scalar_lea.vmem %s1866, 976 [#allocation2]
  %v1949 = vld [vmem:[%s1948] ss:$2 sm:$0xf]
  %s1950 = scalar_lea.vmem %s1866, 1008 [#allocation2]
  %v1951 = vld [vmem:[%s1950] ss:$2 sm:$0xff]
  %s1952 = scalar_lea.vmem %s1866, 1024 [#allocation2]
  %v1953 = vld [vmem:[%s1952] ss:$2 sm:$0xf]
  %s1954 = scalar_lea.vmem %s1866, 1056 [#allocation2]
  %v1955 = vld [vmem:[%s1954] ss:$2 sm:$0xff]
  %s1956 = scalar_lea.vmem %s1866, 1072 [#allocation2]
  %v1957 = vld [vmem:[%s1956] ss:$2 sm:$0xf]
  %s1958 = scalar_lea.vmem %s1866, 1104 [#allocation2]
  %v1959 = vld [vmem:[%s1958] ss:$2 sm:$0xff]
  %s1960 = scalar_lea.vmem %s1866, 1120 [#allocation2]
  %v1961 = vld [vmem:[%s1960] ss:$2 sm:$0xf]
  %s1962 = scalar_lea.vmem %s1866, 1 [#allocation2]
  %v1963 = vld [vmem:[%s1962] ss:$2 sm:$0xff]
  %s1964 = scalar_lea.vmem %s1866, 17 [#allocation2]
  %v1965 = vld [vmem:[%s1964] ss:$2 sm:$0xf]
  %s1966 = scalar_lea.vmem %s1866, 49 [#allocation2]
  %v1967 = vld [vmem:[%s1966] ss:$2 sm:$0xff]
  %s1968 = scalar_lea.vmem %s1866, 65 [#allocation2]
  %v1969 = vld [vmem:[%s1968] ss:$2 sm:$0xf]
  %s1970 = scalar_lea.vmem %s1866, 97 [#allocation2]
  %v1971 = vld [vmem:[%s1970] ss:$2 sm:$0xff]
  %s1972 = scalar_lea.vmem %s1866, 113 [#allocation2]
  %v1973 = vld [vmem:[%s1972] ss:$2 sm:$0xf]
  %s1974 = scalar_lea.vmem %s1866, 145 [#allocation2]
  %v1975 = vld [vmem:[%s1974] ss:$2 sm:$0xff]
  %s1976 = scalar_lea.vmem %s1866, 161 [#allocation2]
  %v1977 = vld [vmem:[%s1976] ss:$2 sm:$0xf]
  %s1978 = scalar_lea.vmem %s1866, 193 [#allocation2]
  %v1979 = vld [vmem:[%s1978] ss:$2 sm:$0xff]
  %s1980 = scalar_lea.vmem %s1866, 209 [#allocation2]
  %v1981 = vld [vmem:[%s1980] ss:$2 sm:$0xf]
  %s1982 = scalar_lea.vmem %s1866, 241 [#allocation2]
  %v1983 = vld [vmem:[%s1982] ss:$2 sm:$0xff]
  %s1984 = scalar_lea.vmem %s1866, 257 [#allocation2]
  %v1985 = vld [vmem:[%s1984] ss:$2 sm:$0xf]
  %s1986 = scalar_lea.vmem %s1866, 289 [#allocation2]
  %v1987 = vld [vmem:[%s1986] ss:$2 sm:$0xff]
  %s1988 = scalar_lea.vmem %s1866, 305 [#allocation2]
  %v1989 = vld [vmem:[%s1988] ss:$2 sm:$0xf]
  %s1990 = scalar_lea.vmem %s1866, 337 [#allocation2]
  %v1991 = vld [vmem:[%s1990] ss:$2 sm:$0xff]
  %s1992 = scalar_lea.vmem %s1866, 353 [#allocation2]
  %v1993 = vld [vmem:[%s1992] ss:$2 sm:$0xf]
  %s1994 = scalar_lea.vmem %s1866, 385 [#allocation2]
  %v1995 = vld [vmem:[%s1994] ss:$2 sm:$0xff]
  %s1996 = scalar_lea.vmem %s1866, 401 [#allocation2]
  %v1997 = vld [vmem:[%s1996] ss:$2 sm:$0xf]
  %s1998 = scalar_lea.vmem %s1866, 433 [#allocation2]
  %v1999 = vld [vmem:[%s1998] ss:$2 sm:$0xff]
  %s2000 = scalar_lea.vmem %s1866, 449 [#allocation2]
  %v2001 = vld [vmem:[%s2000] ss:$2 sm:$0xf]
  %s2002 = scalar_lea.vmem %s1866, 481 [#allocation2]
  %v2003 = vld [vmem:[%s2002] ss:$2 sm:$0xff]
  %s2004 = scalar_lea.vmem %s1866, 497 [#allocation2]
  %v2005 = vld [vmem:[%s2004] ss:$2 sm:$0xf]
  %s2006 = scalar_lea.vmem %s1866, 529 [#allocation2]
  %v2007 = vld [vmem:[%s2006] ss:$2 sm:$0xff]
  %s2008 = scalar_lea.vmem %s1866, 545 [#allocation2]
  %v2009 = vld [vmem:[%s2008] ss:$2 sm:$0xf]
  %s2010 = scalar_lea.vmem %s1866, 577 [#allocation2]
  %v2011 = vld [vmem:[%s2010] ss:$2 sm:$0xff]
  %s2012 = scalar_lea.vmem %s1866, 593 [#allocation2]
  %v2013 = vld [vmem:[%s2012] ss:$2 sm:$0xf]
  %s2014 = scalar_lea.vmem %s1866, 625 [#allocation2]
  %v2015 = vld [vmem:[%s2014] ss:$2 sm:$0xff]
  %s2016 = scalar_lea.vmem %s1866, 641 [#allocation2]
  %v2017 = vld [vmem:[%s2016] ss:$2 sm:$0xf]
  %s2018 = scalar_lea.vmem %s1866, 673 [#allocation2]
  %v2019 = vld [vmem:[%s2018] ss:$2 sm:$0xff]
  %s2020 = scalar_lea.vmem %s1866, 689 [#allocation2]
  %v2021 = vld [vmem:[%s2020] ss:$2 sm:$0xf]
  %s2022 = scalar_lea.vmem %s1866, 721 [#allocation2]
  %v2023 = vld [vmem:[%s2022] ss:$2 sm:$0xff]
  %s2024 = scalar_lea.vmem %s1866, 737 [#allocation2]
  %v2025 = vld [vmem:[%s2024] ss:$2 sm:$0xf]
  %s2026 = scalar_lea.vmem %s1866, 769 [#allocation2]
  %v2027 = vld [vmem:[%s2026] ss:$2 sm:$0xff]
  %s2028 = scalar_lea.vmem %s1866, 785 [#allocation2]
  %v2029 = vld [vmem:[%s2028] ss:$2 sm:$0xf]
  %s2030 = scalar_lea.vmem %s1866, 817 [#allocation2]
  %v2031 = vld [vmem:[%s2030] ss:$2 sm:$0xff]
  %s2032 = scalar_lea.vmem %s1866, 833 [#allocation2]
  %v2033 = vld [vmem:[%s2032] ss:$2 sm:$0xf]
  %s2034 = scalar_lea.vmem %s1866, 865 [#allocation2]
  %v2035 = vld [vmem:[%s2034] ss:$2 sm:$0xff]
  %s2036 = scalar_lea.vmem %s1866, 881 [#allocation2]
  %v2037 = vld [vmem:[%s2036] ss:$2 sm:$0xf]
  %s2038 = scalar_lea.vmem %s1866, 913 [#allocation2]
  %v2039 = vld [vmem:[%s2038] ss:$2 sm:$0xff]
  %s2040 = scalar_lea.vmem %s1866, 929 [#allocation2]
  %v2041 = vld [vmem:[%s2040] ss:$2 sm:$0xf]
  %s2042 = scalar_lea.vmem %s1866, 961 [#allocation2]
  %v2043 = vld [vmem:[%s2042] ss:$2 sm:$0xff]
  %s2044 = scalar_lea.vmem %s1866, 977 [#allocation2]
  %v2045 = vld [vmem:[%s2044] ss:$2 sm:$0xf]
  %s2046 = scalar_lea.vmem %s1866, 1009 [#allocation2]
  %v2047 = vld [vmem:[%s2046] ss:$2 sm:$0xff]
  %s2048 = scalar_lea.vmem %s1866, 1025 [#allocation2]
  %v2049 = vld [vmem:[%s2048] ss:$2 sm:$0xf]
  %s2050 = scalar_lea.vmem %s1866, 1057 [#allocation2]
  %v2051 = vld [vmem:[%s2050] ss:$2 sm:$0xff]
  %s2052 = scalar_lea.vmem %s1866, 1073 [#allocation2]
  %v2053 = vld [vmem:[%s2052] ss:$2 sm:$0xf]
  %s2054 = scalar_lea.vmem %s1866, 1105 [#allocation2]
  %v2055 = vld [vmem:[%s2054] ss:$2 sm:$0xff]
  %s2056 = scalar_lea.vmem %s1866, 1121 [#allocation2]
  %v2057 = vld [vmem:[%s2056] ss:$2 sm:$0xf]
  %v2058 = vmax.f32 %v1675, %v1771
  %v2059 = vmax.f32 %v1677, %v1773
  %v2060 = vmax.f32 %v1679, %v1775
  %v2061 = vmax.f32 %v1681, %v1777
  %v2062 = vmax.f32 %v1683, %v1779
  %v2063 = vmax.f32 %v1685, %v1781
  %v2064 = vmax.f32 %v1687, %v1783
  %v2065 = vmax.f32 %v1689, %v1785
  %v2066 = vmax.f32 %v1691, %v1787
  %v2067 = vmax.f32 %v1693, %v1789
  %v2068 = vmax.f32 %v1695, %v1791
  %v2069 = vmax.f32 %v1697, %v1793
  %v2070 = vmax.f32 %v1699, %v1795
  %v2071 = vmax.f32 %v1701, %v1797
  %v2072 = vmax.f32 %v1703, %v1799
  %v2073 = vmax.f32 %v1705, %v1801
  %v2074 = vmax.f32 %v1707, %v1803
  %v2075 = vmax.f32 %v1709, %v1805
  %v2076 = vmax.f32 %v1711, %v1807
  %v2077 = vmax.f32 %v1713, %v1809
  %v2078 = vmax.f32 %v1715, %v1811
  %v2079 = vmax.f32 %v1717, %v1813
  %v2080 = vmax.f32 %v1719, %v1815
  %v2081 = vmax.f32 %v1721, %v1817
  %v2082 = vmax.f32 %v1723, %v1819
  %v2083 = vmax.f32 %v1725, %v1821
  %v2084 = vmax.f32 %v1727, %v1823
  %v2085 = vmax.f32 %v1729, %v1825
  %v2086 = vmax.f32 %v1731, %v1827
  %v2087 = vmax.f32 %v1733, %v1829
  %v2088 = vmax.f32 %v1735, %v1831
  %v2089 = vmax.f32 %v1737, %v1833
  %v2090 = vmax.f32 %v1739, %v1835
  %v2091 = vmax.f32 %v1741, %v1837
  %v2092 = vmax.f32 %v1743, %v1839
  %v2093 = vmax.f32 %v1745, %v1841
  %v2094 = vmax.f32 %v1747, %v1843
  %v2095 = vmax.f32 %v1749, %v1845
  %v2096 = vmax.f32 %v1751, %v1847
  %v2097 = vmax.f32 %v1753, %v1849
  %v2098 = vmax.f32 %v1755, %v1851
  %v2099 = vmax.f32 %v1757, %v1853
  %v2100 = vmax.f32 %v1759, %v1855
  %v2101 = vmax.f32 %v1761, %v1857
  %v2102 = vmax.f32 %v1763, %v1859
  %v2103 = vmax.f32 %v1765, %v1861
  %v2104 = vmax.f32 %v1767, %v1863
  %v2105 = vmax.f32 %v1769, %v1865
  %v2106 = vmax.f32 %v1867, %v1963
  %v2107 = vmax.f32 %v1869, %v1965
  %v2108 = vmax.f32 %v1871, %v1967
  %v2109 = vmax.f32 %v1873, %v1969
  %v2110 = vmax.f32 %v1875, %v1971
  %v2111 = vmax.f32 %v1877, %v1973
  %v2112 = vmax.f32 %v1879, %v1975
  %v2113 = vmax.f32 %v1881, %v1977
  %v2114 = vmax.f32 %v1883, %v1979
  %v2115 = vmax.f32 %v1885, %v1981
  %v2116 = vmax.f32 %v1887, %v1983
  %v2117 = vmax.f32 %v1889, %v1985
  %v2118 = vmax.f32 %v1891, %v1987
  %v2119 = vmax.f32 %v1893, %v1989
  %v2120 = vmax.f32 %v1895, %v1991
  %v2121 = vmax.f32 %v1897, %v1993
  %v2122 = vmax.f32 %v1899, %v1995
  %v2123 = vmax.f32 %v1901, %v1997
  %v2124 = vmax.f32 %v1903, %v1999
  %v2125 = vmax.f32 %v1905, %v2001
  %v2126 = vmax.f32 %v1907, %v2003
  %v2127 = vmax.f32 %v1909, %v2005
  %v2128 = vmax.f32 %v1911, %v2007
  %v2129 = vmax.f32 %v1913, %v2009
  %v2130 = vmax.f32 %v1915, %v2011
  %v2131 = vmax.f32 %v1917, %v2013
  %v2132 = vmax.f32 %v1919, %v2015
  %v2133 = vmax.f32 %v1921, %v2017
  %v2134 = vmax.f32 %v1923, %v2019
  %v2135 = vmax.f32 %v1925, %v2021
  %v2136 = vmax.f32 %v1927, %v2023
  %v2137 = vmax.f32 %v1929, %v2025
  %v2138 = vmax.f32 %v1931, %v2027
  %v2139 = vmax.f32 %v1933, %v2029
  %v2140 = vmax.f32 %v1935, %v2031
  %v2141 = vmax.f32 %v1937, %v2033
  %v2142 = vmax.f32 %v1939, %v2035
  %v2143 = vmax.f32 %v1941, %v2037
  %v2144 = vmax.f32 %v1943, %v2039
  %v2145 = vmax.f32 %v1945, %v2041
  %v2146 = vmax.f32 %v1947, %v2043
  %v2147 = vmax.f32 %v1949, %v2045
  %v2148 = vmax.f32 %v1951, %v2047
  %v2149 = vmax.f32 %v1953, %v2049
  %v2150 = vmax.f32 %v1955, %v2051
  %v2151 = vmax.f32 %v1957, %v2053
  %v2152 = vmax.f32 %v1959, %v2055
  %v2153 = vmax.f32 %v1961, %v2057
  %v2154 = vmax.f32 %v2058, %v2106
  %v2155 = vmax.f32 %v2059, %v2107
  %v2156 = vmax.f32 %v2060, %v2108
  %v2157 = vmax.f32 %v2061, %v2109
  %v2158 = vmax.f32 %v2062, %v2110
  %v2159 = vmax.f32 %v2063, %v2111
  %v2160 = vmax.f32 %v2064, %v2112
  %v2161 = vmax.f32 %v2065, %v2113
  %v2162 = vmax.f32 %v2066, %v2114
  %v2163 = vmax.f32 %v2067, %v2115
  %v2164 = vmax.f32 %v2068, %v2116
  %v2165 = vmax.f32 %v2069, %v2117
  %v2166 = vmax.f32 %v2070, %v2118
  %v2167 = vmax.f32 %v2071, %v2119
  %v2168 = vmax.f32 %v2072, %v2120
  %v2169 = vmax.f32 %v2073, %v2121
  %v2170 = vmax.f32 %v2074, %v2122
  %v2171 = vmax.f32 %v2075, %v2123
  %v2172 = vmax.f32 %v2076, %v2124
  %v2173 = vmax.f32 %v2077, %v2125
  %v2174 = vmax.f32 %v2078, %v2126
  %v2175 = vmax.f32 %v2079, %v2127
  %v2176 = vmax.f32 %v2080, %v2128
  %v2177 = vmax.f32 %v2081, %v2129
  %v2178 = vmax.f32 %v2082, %v2130
  %v2179 = vmax.f32 %v2083, %v2131
  %v2180 = vmax.f32 %v2084, %v2132
  %v2181 = vmax.f32 %v2085, %v2133
  %v2182 = vmax.f32 %v2086, %v2134
  %v2183 = vmax.f32 %v2087, %v2135
  %v2184 = vmax.f32 %v2088, %v2136
  %v2185 = vmax.f32 %v2089, %v2137
  %v2186 = vmax.f32 %v2090, %v2138
  %v2187 = vmax.f32 %v2091, %v2139
  %v2188 = vmax.f32 %v2092, %v2140
  %v2189 = vmax.f32 %v2093, %v2141
  %v2190 = vmax.f32 %v2094, %v2142
  %v2191 = vmax.f32 %v2095, %v2143
  %v2192 = vmax.f32 %v2096, %v2144
  %v2193 = vmax.f32 %v2097, %v2145
  %v2194 = vmax.f32 %v2098, %v2146
  %v2195 = vmax.f32 %v2099, %v2147
  %v2196 = vmax.f32 %v2100, %v2148
  %v2197 = vmax.f32 %v2101, %v2149
  %v2198 = vmax.f32 %v2102, %v2150
  %v2199 = vmax.f32 %v2103, %v2151
  %v2200 = vmax.f32 %v2104, %v2152
  %v2201 = vmax.f32 %v2105, %v2153
  %2202 = vst [vmem:[%s3] sm:$0xff] %v2154
  %2203 = vst [vmem:[%s3 + $0x8] sm:$0xf] %v2155
  %2204 = vst [vmem:[%s3 + $0x10] sm:$0xff] %v2156
  %2205 = vst [vmem:[%s3 + $0x18] sm:$0xf] %v2157
  %2206 = vst [vmem:[%s3 + $0x20] sm:$0xff] %v2158
  %2207 = vst [vmem:[%s3 + $0x28] sm:$0xf] %v2159
  %2208 = vst [vmem:[%s3 + $0x30] sm:$0xff] %v2160
  %2209 = vst [vmem:[%s3 + $0x38] sm:$0xf] %v2161
  %2210 = vst [vmem:[%s3 + $0x40] sm:$0xff] %v2162
  %2211 = vst [vmem:[%s3 + $0x48] sm:$0xf] %v2163
  %2212 = vst [vmem:[%s3 + $0x50] sm:$0xff] %v2164
  %2213 = vst [vmem:[%s3 + $0x58] sm:$0xf] %v2165
  %2214 = vst [vmem:[%s3 + $0x60] sm:$0xff] %v2166
  %2215 = vst [vmem:[%s3 + $0x68] sm:$0xf] %v2167
  %2216 = vst [vmem:[%s3 + $0x70] sm:$0xff] %v2168
  %2217 = vst [vmem:[%s3 + $0x78] sm:$0xf] %v2169
  %2218 = vst [vmem:[%s3 + $0x80] sm:$0xff] %v2170
  %2219 = vst [vmem:[%s3 + $0x88] sm:$0xf] %v2171
  %2220 = vst [vmem:[%s3 + $0x90] sm:$0xff] %v2172
  %2221 = vst [vmem:[%s3 + $0x98] sm:$0xf] %v2173
  %2222 = vst [vmem:[%s3 + $0xa0] sm:$0xff] %v2174
  %2223 = vst [vmem:[%s3 + $0xa8] sm:$0xf] %v2175
  %2224 = vst [vmem:[%s3 + $0xb0] sm:$0xff] %v2176
  %2225 = vst [vmem:[%s3 + $0xb8] sm:$0xf] %v2177
  %2226 = vst [vmem:[%s3 + $0xc0] sm:$0xff] %v2178
  %2227 = vst [vmem:[%s3 + $0xc8] sm:$0xf] %v2179
  %2228 = vst [vmem:[%s3 + $0xd0] sm:$0xff] %v2180
  %2229 = vst [vmem:[%s3 + $0xd8] sm:$0xf] %v2181
  %2230 = vst [vmem:[%s3 + $0xe0] sm:$0xff] %v2182
  %2231 = vst [vmem:[%s3 + $0xe8] sm:$0xf] %v2183
  %2232 = vst [vmem:[%s3 + $0xf0] sm:$0xff] %v2184
  %2233 = vst [vmem:[%s3 + $0xf8] sm:$0xf] %v2185
  %2234 = vst [vmem:[%s3 + $0x100] sm:$0xff] %v2186
  %2235 = vst [vmem:[%s3 + $0x108] sm:$0xf] %v2187
  %2236 = vst [vmem:[%s3 + $0x110] sm:$0xff] %v2188
  %2237 = vst [vmem:[%s3 + $0x118] sm:$0xf] %v2189
  %2238 = vst [vmem:[%s3 + $0x120] sm:$0xff] %v2190
  %2239 = vst [vmem:[%s3 + $0x128] sm:$0xf] %v2191
  %2240 = vst [vmem:[%s3 + $0x130] sm:$0xff] %v2192
  %2241 = vst [vmem:[%s3 + $0x138] sm:$0xf] %v2193
  %2242 = vst [vmem:[%s3 + $0x140] sm:$0xff] %v2194
  %2243 = vst [vmem:[%s3 + $0x148] sm:$0xf] %v2195
  %2244 = vst [vmem:[%s3 + $0x150] sm:$0xff] %v2196
  %2245 = vst [vmem:[%s3 + $0x158] sm:$0xf] %v2197
  %2246 = vst [vmem:[%s3 + $0x160] sm:$0xff] %v2198
  %2247 = vst [vmem:[%s3 + $0x168] sm:$0xf] %v2199
  %2248 = vst [vmem:[%s3 + $0x170] sm:$0xff] %v2200
  %2249 = vst [vmem:[%s3 + $0x178] sm:$0xf] %v2201
  // Predicated region
  $region14: #{dnn_forward.3} parent=0 // pred_check
    _
  $region15: #{dnn_forward.3} parent=0 // pred_check_branch
    %2251 = sbr.rel (0) target = $region17
  $region16: #{dnn_forward.3} parent=0 // pred_region
    _
  $region17: #{dnn_forward.3} parent=0 // pred_fallthru
    _
  // Predicated region
  $region18: #{dnn_forward.3} parent=0 // pred_check
    _
  $region19: #{dnn_forward.3} parent=0 // pred_check_branch
    %2253 = sbr.rel (0) target = $region21
  $region20: #{dnn_forward.3} parent=0 // pred_region
    _
  $region21: #{dnn_forward.3} parent=0 // pred_fallthru
    _

// kernel: dnn_forward.4
$region0: #{dnn_forward.4}
  #allocation0 [shape = 'u32[]', space=smem, size = 0x4, offset = 0x4, fixed_abs, tag = 'smem constant byte address 0x4 - core index']
  #allocation1 [shape = 'u32[144,128]{1,0:T(1,128)}', space=vmem, size = 0x12000, scoped, tag = 'internal scratch']
  #allocation2 [shape = 'f32[16,8,128]{2,1,0:T(8,128)}', space=vmem, size = 0x10000, scoped, tag = 'scratch operand']
  %s0 = inlined_call_operand.vmem [shape: f32[128,512], index: 0, kind: input, shape index: {}]
  %s1 = inlined_call_operand.vmem [shape: f32[512,128], index: 1, kind: input, shape index: {}]
  %s2 = inlined_call_operand.vmem [shape: f32[1,128], index: 2, kind: input, shape index: {}]
  %s3 = inlined_call_operand.vmem [shape: f32[8,4,128], index: 3, kind: output, shape index: {}]
  %s4 = sld [smem:[#allocation0]]
  $region22: #{dnn_forward.4} parent=0
    _
  %s6 = ssub.s32 1, %s4
  %s7 = scalar_select 0, %s6, %s4
  // Predicated region
  $region2: #{dnn_forward.4} parent=0 // pred_check
    _
  $region3: #{dnn_forward.4} parent=0 // pred_check_branch
    %9 = sbr.rel (0) target = $region5
  $region4: #{dnn_forward.4} parent=0 // pred_region
    _
  $region5: #{dnn_forward.4} parent=0 // pred_fallthru
    _
  // Predicated region
  $region6: #{dnn_forward.4} parent=0 // pred_check
    _
  $region7: #{dnn_forward.4} parent=0 // pred_check_branch
    %11 = sbr.rel (0) target = $region9
  $region8: #{dnn_forward.4} parent=0 // pred_region
    _
  $region9: #{dnn_forward.4} parent=0 // pred_fallthru
    _
  // Predicated region
  $region10: #{dnn_forward.4} parent=0 // pred_check
    _
  $region11: #{dnn_forward.4} parent=0 // pred_check_branch
    %13 = sbr.rel (0) target = $region13
  $region12: #{dnn_forward.4} parent=0 // pred_region
    _
  $region13: #{dnn_forward.4} parent=0 // pred_fallthru
    _
  %v14 = vld [vmem:[%s0] sm:$0xff]
  %v15 = vld [vmem:[%s0 + $0x8] sm:$0xff]
  %v16 = vld [vmem:[%s0 + $0x10] sm:$0xff]
  %v17 = vld [vmem:[%s0 + $0x18] sm:$0xff]
  %v18 = vld [vmem:[%s0 + $0x20] sm:$0xff]
  %v19 = vld [vmem:[%s0 + $0x28] sm:$0xff]
  %v20 = vld [vmem:[%s0 + $0x30] sm:$0xff]
  %v21 = vld [vmem:[%s0 + $0x38] sm:$0xff]
  %v22 = vld [vmem:[%s0 + $0x40] sm:$0xff]
  %v23 = vld [vmem:[%s0 + $0x48] sm:$0xff]
  %v24 = vld [vmem:[%s0 + $0x50] sm:$0xff]
  %v25 = vld [vmem:[%s0 + $0x58] sm:$0xff]
  %v26 = vld [vmem:[%s0 + $0x60] sm:$0xff]
  %v27 = vld [vmem:[%s0 + $0x68] sm:$0xff]
  %v28 = vld [vmem:[%s0 + $0x70] sm:$0xff]
  %v29 = vld [vmem:[%s0 + $0x78] sm:$0xff]
  %v30 = vld [vmem:[%s0 + $0x80] sm:$0xff]
  %v31 = vld [vmem:[%s0 + $0x88] sm:$0xff]
  %v32 = vld [vmem:[%s0 + $0x90] sm:$0xff]
  %v33 = vld [vmem:[%s0 + $0x98] sm:$0xff]
  %v34 = vld [vmem:[%s0 + $0xa0] sm:$0xff]
  %v35 = vld [vmem:[%s0 + $0xa8] sm:$0xff]
  %v36 = vld [vmem:[%s0 + $0xb0] sm:$0xff]
  %v37 = vld [vmem:[%s0 + $0xb8] sm:$0xff]
  %v38 = vld [vmem:[%s0 + $0xc0] sm:$0xff]
  %v39 = vld [vmem:[%s0 + $0xc8] sm:$0xff]
  %v40 = vld [vmem:[%s0 + $0xd0] sm:$0xff]
  %v41 = vld [vmem:[%s0 + $0xd8] sm:$0xff]
  %v42 = vld [vmem:[%s0 + $0xe0] sm:$0xff]
  %v43 = vld [vmem:[%s0 + $0xe8] sm:$0xff]
  %v44 = vld [vmem:[%s0 + $0xf0] sm:$0xff]
  %v45 = vld [vmem:[%s0 + $0xf8] sm:$0xff]
  %v46 = vld [vmem:[%s0 + $0x100] sm:$0xff]
  %v47 = vld [vmem:[%s0 + $0x108] sm:$0xff]
  %v48 = vld [vmem:[%s0 + $0x110] sm:$0xff]
  %v49 = vld [vmem:[%s0 + $0x118] sm:$0xff]
  %v50 = vld [vmem:[%s0 + $0x120] sm:$0xff]
  %v51 = vld [vmem:[%s0 + $0x128] sm:$0xff]
  %v52 = vld [vmem:[%s0 + $0x130] sm:$0xff]
  %v53 = vld [vmem:[%s0 + $0x138] sm:$0xff]
  %v54 = vld [vmem:[%s0 + $0x140] sm:$0xff]
  %v55 = vld [vmem:[%s0 + $0x148] sm:$0xff]
  %v56 = vld [vmem:[%s0 + $0x150] sm:$0xff]
  %v57 = vld [vmem:[%s0 + $0x158] sm:$0xff]
  %v58 = vld [vmem:[%s0 + $0x160] sm:$0xff]
  %v59 = vld [vmem:[%s0 + $0x168] sm:$0xff]
  %v60 = vld [vmem:[%s0 + $0x170] sm:$0xff]
  %v61 = vld [vmem:[%s0 + $0x178] sm:$0xff]
  %v62 = vld [vmem:[%s0 + $0x180] sm:$0xff]
  %v63 = vld [vmem:[%s0 + $0x188] sm:$0xff]
  %v64 = vld [vmem:[%s0 + $0x190] sm:$0xff]
  %v65 = vld [vmem:[%s0 + $0x198] sm:$0xff]
  %v66 = vld [vmem:[%s0 + $0x1a0] sm:$0xff]
  %v67 = vld [vmem:[%s0 + $0x1a8] sm:$0xff]
  %v68 = vld [vmem:[%s0 + $0x1b0] sm:$0xff]
  %v69 = vld [vmem:[%s0 + $0x1b8] sm:$0xff]
  %v70 = vld [vmem:[%s0 + $0x1c0] sm:$0xff]
  %v71 = vld [vmem:[%s0 + $0x1c8] sm:$0xff]
  %v72 = vld [vmem:[%s0 + $0x1d0] sm:$0xff]
  %v73 = vld [vmem:[%s0 + $0x1d8] sm:$0xff]
  %v74 = vld [vmem:[%s0 + $0x1e0] sm:$0xff]
  %v75 = vld [vmem:[%s0 + $0x1e8] sm:$0xff]
  %v76 = vld [vmem:[%s0 + $0x1f0] sm:$0xff]
  %v77 = vld [vmem:[%s0 + $0x1f8] sm:$0xff]
  %v78 = vld [vmem:[%s1] sm:$0xff]
  %v79 = vld [vmem:[%s1 + $0x8] sm:$0xff]
  %v80 = vld [vmem:[%s1 + $0x10] sm:$0xff]
  %v81 = vld [vmem:[%s1 + $0x18] sm:$0xff]
  %v82 = vld [vmem:[%s1 + $0x20] sm:$0xff]
  %v83 = vld [vmem:[%s1 + $0x28] sm:$0xff]
  %v84 = vld [vmem:[%s1 + $0x30] sm:$0xff]
  %v85 = vld [vmem:[%s1 + $0x38] sm:$0xff]
  %v86 = vld [vmem:[%s1 + $0x40] sm:$0xff]
  %v87 = vld [vmem:[%s1 + $0x48] sm:$0xff]
  %v88 = vld [vmem:[%s1 + $0x50] sm:$0xff]
  %v89 = vld [vmem:[%s1 + $0x58] sm:$0xff]
  %v90 = vld [vmem:[%s1 + $0x60] sm:$0xff]
  %v91 = vld [vmem:[%s1 + $0x68] sm:$0xff]
  %v92 = vld [vmem:[%s1 + $0x70] sm:$0xff]
  %v93 = vld [vmem:[%s1 + $0x78] sm:$0xff]
  %v94 = vld [vmem:[%s1 + $0x80] sm:$0xff]
  %v95 = vld [vmem:[%s1 + $0x88] sm:$0xff]
  %v96 = vld [vmem:[%s1 + $0x90] sm:$0xff]
  %v97 = vld [vmem:[%s1 + $0x98] sm:$0xff]
  %v98 = vld [vmem:[%s1 + $0xa0] sm:$0xff]
  %v99 = vld [vmem:[%s1 + $0xa8] sm:$0xff]
  %v100 = vld [vmem:[%s1 + $0xb0] sm:$0xff]
  %v101 = vld [vmem:[%s1 + $0xb8] sm:$0xff]
  %v102 = vld [vmem:[%s1 + $0xc0] sm:$0xff]
  %v103 = vld [vmem:[%s1 + $0xc8] sm:$0xff]
  %v104 = vld [vmem:[%s1 + $0xd0] sm:$0xff]
  %v105 = vld [vmem:[%s1 + $0xd8] sm:$0xff]
  %v106 = vld [vmem:[%s1 + $0xe0] sm:$0xff]
  %v107 = vld [vmem:[%s1 + $0xe8] sm:$0xff]
  %v108 = vld [vmem:[%s1 + $0xf0] sm:$0xff]
  %v109 = vld [vmem:[%s1 + $0xf8] sm:$0xff]
  %v110 = vld [vmem:[%s1 + $0x100] sm:$0xff]
  %v111 = vld [vmem:[%s1 + $0x108] sm:$0xff]
  %v112 = vld [vmem:[%s1 + $0x110] sm:$0xff]
  %v113 = vld [vmem:[%s1 + $0x118] sm:$0xff]
  %v114 = vld [vmem:[%s1 + $0x120] sm:$0xff]
  %v115 = vld [vmem:[%s1 + $0x128] sm:$0xff]
  %v116 = vld [vmem:[%s1 + $0x130] sm:$0xff]
  %v117 = vld [vmem:[%s1 + $0x138] sm:$0xff]
  %v118 = vld [vmem:[%s1 + $0x140] sm:$0xff]
  %v119 = vld [vmem:[%s1 + $0x148] sm:$0xff]
  %v120 = vld [vmem:[%s1 + $0x150] sm:$0xff]
  %v121 = vld [vmem:[%s1 + $0x158] sm:$0xff]
  %v122 = vld [vmem:[%s1 + $0x160] sm:$0xff]
  %v123 = vld [vmem:[%s1 + $0x168] sm:$0xff]
  %v124 = vld [vmem:[%s1 + $0x170] sm:$0xff]
  %v125 = vld [vmem:[%s1 + $0x178] sm:$0xff]
  %v126 = vld [vmem:[%s1 + $0x180] sm:$0xff]
  %v127 = vld [vmem:[%s1 + $0x188] sm:$0xff]
  %v128 = vld [vmem:[%s1 + $0x190] sm:$0xff]
  %v129 = vld [vmem:[%s1 + $0x198] sm:$0xff]
  %v130 = vld [vmem:[%s1 + $0x1a0] sm:$0xff]
  %v131 = vld [vmem:[%s1 + $0x1a8] sm:$0xff]
  %v132 = vld [vmem:[%s1 + $0x1b0] sm:$0xff]
  %v133 = vld [vmem:[%s1 + $0x1b8] sm:$0xff]
  %v134 = vld [vmem:[%s1 + $0x1c0] sm:$0xff]
  %v135 = vld [vmem:[%s1 + $0x1c8] sm:$0xff]
  %v136 = vld [vmem:[%s1 + $0x1d0] sm:$0xff]
  %v137 = vld [vmem:[%s1 + $0x1d8] sm:$0xff]
  %v138 = vld [vmem:[%s1 + $0x1e0] sm:$0xff]
  %v139 = vld [vmem:[%s1 + $0x1e8] sm:$0xff]
  %v140 = vld [vmem:[%s1 + $0x1f0] sm:$0xff]
  %v141 = vld [vmem:[%s1 + $0x1f8] sm:$0xff]
  %v142 = vld [vmem:[%s2] sm:$0x1]
  %v144 = vlaneseq
  %v145 = vshrl.u32 %v144, 7
  %v146 = vsub.s32 0, %v145
  %v147 = vrot.slane %v142, %v146
  %149 = vmatprep.subr.mxu0 0.0
  %150 = vmatpush1.msra.mxu0 %v78
  %151 = vmatprep.subr.mxu0 0.0
  %152 = vmatpush1.msra.mxu0 %v79
  %153 = vmatprep.subr.mxu0 0.0
  %154 = vmatpush1.msra.mxu0 %v80
  %155 = vmatprep.subr.mxu0 0.0
  %156 = vmatpush1.msra.mxu0 %v81
  %157 = vmatprep.subr.mxu0 0.0
  %158 = vmatpush1.msra.mxu0 %v82
  %159 = vmatprep.subr.mxu0 0.0
  %160 = vmatpush1.msra.mxu0 %v83
  %161 = vmatprep.subr.mxu0 0.0
  %162 = vmatpush1.msra.mxu0 %v84
  %163 = vmatprep.subr.mxu0 0.0
  %164 = vmatpush1.msra.mxu0 %v85
  %165 = vmatprep.subr.mxu0 0.0
  %166 = vmatpush1.msra.mxu0 %v86
  %167 = vmatprep.subr.mxu0 0.0
  %168 = vmatpush1.msra.mxu0 %v87
  %169 = vmatprep.subr.mxu0 0.0
  %170 = vmatpush1.msra.mxu0 %v88
  %171 = vmatprep.subr.mxu0 0.0
  %172 = vmatpush1.msra.mxu0 %v89
  %173 = vmatprep.subr.mxu0 0.0
  %174 = vmatpush1.msra.mxu0 %v90
  %175 = vmatprep.subr.mxu0 0.0
  %176 = vmatpush1.msra.mxu0 %v91
  %177 = vmatprep.subr.mxu0 0.0
  %178 = vmatpush1.msra.mxu0 %v92
  %179 = vmatprep.subr.mxu0 0.0
  %180 = vmatpush1.msra.mxu0 %v93
  %181 = vmatprep.subr.mxu0 0.0
  %182 = vmatpush1.msra.mxu0 %v94
  %183 = vmatprep.subr.mxu0 0.0
  %184 = vmatpush1.msra.mxu0 %v95
  %185 = vmatprep.subr.mxu0 0.0
  %186 = vmatpush1.msra.mxu0 %v96
  %187 = vmatprep.subr.mxu0 0.0
  %188 = vmatpush1.msra.mxu0 %v97
  %189 = vmatprep.subr.mxu0 0.0
  %190 = vmatpush1.msra.mxu0 %v98
  %191 = vmatprep.subr.mxu0 0.0
  %192 = vmatpush1.msra.mxu0 %v99
  %193 = vmatprep.subr.mxu0 0.0
  %194 = vmatpush1.msra.mxu0 %v100
  %195 = vmatprep.subr.mxu0 0.0
  %196 = vmatpush1.msra.mxu0 %v101
  %197 = vmatprep.subr.mxu0 0.0
  %198 = vmatpush1.msra.mxu0 %v102
  %199 = vmatprep.subr.mxu0 0.0
  %200 = vmatpush1.msra.mxu0 %v103
  %201 = vmatprep.subr.mxu0 0.0
  %202 = vmatpush1.msra.mxu0 %v104
  %203 = vmatprep.subr.mxu0 0.0
  %204 = vmatpush1.msra.mxu0 %v105
  %205 = vmatprep.subr.mxu0 0.0
  %206 = vmatpush1.msra.mxu0 %v106
  %207 = vmatprep.subr.mxu0 0.0
  %208 = vmatpush1.msra.mxu0 %v107
  %209 = vmatprep.subr.mxu0 0.0
  %210 = vmatpush1.msra.mxu0 %v108
  %211 = vmatprep.subr.mxu0 0.0
  %212 = vmatpush1.msra.mxu0 %v109
  %213 = vmatprep.mubr.f32.mxu0 %v15
  %214 = vmatmul.mubr.f32.gmra.mrb[0].mxu0 %v14
  %v215 = vpop.f32.mrb[0].mxu0
  %v216 = vadd.f32 %v147, %v215
  %v217 = vpop.f32.mrb[0].mxu0
  %218 = vmatprep.mubr.f32.mxu0 %v19
  %219 = vmatmul.mubr.f32.gmra.mrb[0].mxu0 %v18
  %v220 = vpop.f32.mrb[0].mxu0
  %v221 = vadd.f32 %v147, %v220
  %v222 = vpop.f32.mrb[0].mxu0
  %223 = vmatprep.mubr.f32.mxu0 %v23
  %224 = vmatmul.mubr.f32.gmra.mrb[0].mxu0 %v22
  %v225 = vpop.f32.mrb[0].mxu0
  %v226 = vadd.f32 %v147, %v225
  %v227 = vpop.f32.mrb[0].mxu0
  %228 = vmatprep.mubr.f32.mxu0 %v27
  %229 = vmatmul.mubr.f32.gmra.mrb[0].mxu0 %v26
  %v230 = vpop.f32.mrb[0].mxu0
  %v231 = vadd.f32 %v147, %v230
  %v232 = vpop.f32.mrb[0].mxu0
  %233 = vmatprep.mubr.f32.mxu0 %v31
  %234 = vmatmul.mubr.f32.gmra.mrb[0].mxu0 %v30
  %v235 = vpop.f32.mrb[0].mxu0
  %v236 = vadd.f32 %v147, %v235
  %v237 = vpop.f32.mrb[0].mxu0
  %238 = vmatprep.mubr.f32.mxu0 %v35
  %239 = vmatmul.mubr.f32.gmra.mrb[0].mxu0 %v34
  %v240 = vpop.f32.mrb[0].mxu0
  %v241 = vadd.f32 %v147, %v240
  %v242 = vpop.f32.mrb[0].mxu0
  %243 = vmatprep.mubr.f32.mxu0 %v39
  %244 = vmatmul.mubr.f32.gmra.mrb[0].mxu0 %v38
  %v245 = vpop.f32.mrb[0].mxu0
  %v246 = vadd.f32 %v147, %v245
  %v247 = vpop.f32.mrb[0].mxu0
  %248 = vmatprep.mubr.f32.mxu0 %v43
  %249 = vmatmul.mubr.f32.gmra.mrb[0].mxu0 %v42
  %v250 = vpop.f32.mrb[0].mxu0
  %v251 = vadd.f32 %v147, %v250
  %v252 = vpop.f32.mrb[0].mxu0
  %253 = vmatprep.mubr.f32.mxu0 %v47
  %254 = vmatmul.mubr.f32.gmra.mrb[0].mxu0 %v46
  %v255 = vpop.f32.mrb[0].mxu0
  %v256 = vadd.f32 %v147, %v255
  %v257 = vpop.f32.mrb[0].mxu0
  %258 = vmatprep.mubr.f32.mxu0 %v51
  %259 = vmatmul.mubr.f32.gmra.mrb[0].mxu0 %v50
  %v260 = vpop.f32.mrb[0].mxu0
  %v261 = vadd.f32 %v147, %v260
  %v262 = vpop.f32.mrb[0].mxu0
  %263 = vmatprep.mubr.f32.mxu0 %v55
  %264 = vmatmul.mubr.f32.gmra.mrb[0].mxu0 %v54
  %v265 = vpop.f32.mrb[0].mxu0
  %v266 = vadd.f32 %v147, %v265
  %v267 = vpop.f32.mrb[0].mxu0
  %268 = vmatprep.mubr.f32.mxu0 %v59
  %269 = vmatmul.mubr.f32.gmra.mrb[0].mxu0 %v58
  %v270 = vpop.f32.mrb[0].mxu0
  %v271 = vadd.f32 %v147, %v270
  %v272 = vpop.f32.mrb[0].mxu0
  %273 = vmatprep.mubr.f32.mxu0 %v63
  %274 = vmatmul.mubr.f32.gmra.mrb[0].mxu0 %v62
  %v275 = vpop.f32.mrb[0].mxu0
  %v276 = vadd.f32 %v147, %v275
  %v277 = vpop.f32.mrb[0].mxu0
  %278 = vmatprep.mubr.f32.mxu0 %v67
  %279 = vmatmul.mubr.f32.gmra.mrb[0].mxu0 %v66
  %v280 = vpop.f32.mrb[0].mxu0
  %v281 = vadd.f32 %v147, %v280
  %v282 = vpop.f32.mrb[0].mxu0
  %283 = vmatprep.mubr.f32.mxu0 %v71
  %284 = vmatmul.mubr.f32.gmra.mrb[0].mxu0 %v70
  %v285 = vpop.f32.mrb[0].mxu0
  %v286 = vadd.f32 %v147, %v285
  %v287 = vpop.f32.mrb[0].mxu0
  %288 = vmatprep.mubr.f32.mxu0 %v75
  %289 = vmatmul.mubr.f32.gmra.mrb[0].mxu0 %v74
  %v290 = vpop.f32.mrb[0].mxu0
  %v291 = vadd.f32 %v147, %v290
  %v292 = vpop.f32.mrb[0].mxu0
  %293 = vdwg.mxu0
  %294 = vmatprep.subr.mxu0 0.0
  %295 = vmatpush1.msra.mxu0 %v110
  %296 = vmatprep.subr.mxu0 0.0
  %297 = vmatpush1.msra.mxu0 %v111
  %298 = vmatprep.subr.mxu0 0.0
  %299 = vmatpush1.msra.mxu0 %v112
  %300 = vmatprep.subr.mxu0 0.0
  %301 = vmatpush1.msra.mxu0 %v113
  %302 = vmatprep.subr.mxu0 0.0
  %303 = vmatpush1.msra.mxu0 %v114
  %304 = vmatprep.subr.mxu0 0.0
  %305 = vmatpush1.msra.mxu0 %v115
  %306 = vmatprep.subr.mxu0 0.0
  %307 = vmatpush1.msra.mxu0 %v116
  %308 = vmatprep.subr.mxu0 0.0
  %309 = vmatpush1.msra.mxu0 %v117
  %310 = vmatprep.subr.mxu0 0.0
  %311 = vmatpush1.msra.mxu0 %v118
  %312 = vmatprep.subr.mxu0 0.0
  %313 = vmatpush1.msra.mxu0 %v119
  %314 = vmatprep.subr.mxu0 0.0
  %315 = vmatpush1.msra.mxu0 %v120
  %316 = vmatprep.subr.mxu0 0.0
  %317 = vmatpush1.msra.mxu0 %v121
  %318 = vmatprep.subr.mxu0 0.0
  %319 = vmatpush1.msra.mxu0 %v122
  %320 = vmatprep.subr.mxu0 0.0
  %321 = vmatpush1.msra.mxu0 %v123
  %322 = vmatprep.subr.mxu0 0.0
  %323 = vmatpush1.msra.mxu0 %v124
  %324 = vmatprep.subr.mxu0 0.0
  %325 = vmatpush1.msra.mxu0 %v125
  %326 = vmatprep.subr.mxu0 0.0
  %327 = vmatpush1.msra.mxu0 %v126
  %328 = vmatprep.subr.mxu0 0.0
  %329 = vmatpush1.msra.mxu0 %v127
  %330 = vmatprep.subr.mxu0 0.0
  %331 = vmatpush1.msra.mxu0 %v128
  %332 = vmatprep.subr.mxu0 0.0
  %333 = vmatpush1.msra.mxu0 %v129
  %334 = vmatprep.subr.mxu0 0.0
  %335 = vmatpush1.msra.mxu0 %v130
  %336 = vmatprep.subr.mxu0 0.0
  %337 = vmatpush1.msra.mxu0 %v131
  %338 = vmatprep.subr.mxu0 0.0
  %339 = vmatpush1.msra.mxu0 %v132
  %340 = vmatprep.subr.mxu0 0.0
  %341 = vmatpush1.msra.mxu0 %v133
  %342 = vmatprep.subr.mxu0 0.0
  %343 = vmatpush1.msra.mxu0 %v134
  %344 = vmatprep.subr.mxu0 0.0
  %345 = vmatpush1.msra.mxu0 %v135
  %346 = vmatprep.subr.mxu0 0.0
  %347 = vmatpush1.msra.mxu0 %v136
  %348 = vmatprep.subr.mxu0 0.0
  %349 = vmatpush1.msra.mxu0 %v137
  %350 = vmatprep.subr.mxu0 0.0
  %351 = vmatpush1.msra.mxu0 %v138
  %352 = vmatprep.subr.mxu0 0.0
  %353 = vmatpush1.msra.mxu0 %v139
  %354 = vmatprep.subr.mxu0 0.0
  %355 = vmatpush1.msra.mxu0 %v140
  %356 = vmatprep.subr.mxu0 0.0
  %357 = vmatpush1.msra.mxu0 %v141
  %358 = vmatprep.mubr.f32.mxu0 %v17
  %359 = vmatmul.mubr.f32.gmra.mrb[0].mxu0 %v16
  %v360 = vpop.f32.mrb[0].mxu0
  %v361 = vadd.f32 %v216, %v360
  %v362 = vpop.f32.mrb[0].mxu0
  %363 = vmatprep.mubr.f32.mxu0 %v21
  %364 = vmatmul.mubr.f32.gmra.mrb[0].mxu0 %v20
  %v365 = vpop.f32.mrb[0].mxu0
  %v366 = vadd.f32 %v221, %v365
  %v367 = vpop.f32.mrb[0].mxu0
  %368 = vmatprep.mubr.f32.mxu0 %v25
  %369 = vmatmul.mubr.f32.gmra.mrb[0].mxu0 %v24
  %v370 = vpop.f32.mrb[0].mxu0
  %v371 = vadd.f32 %v226, %v370
  %v372 = vpop.f32.mrb[0].mxu0
  %373 = vmatprep.mubr.f32.mxu0 %v29
  %374 = vmatmul.mubr.f32.gmra.mrb[0].mxu0 %v28
  %v375 = vpop.f32.mrb[0].mxu0
  %v376 = vadd.f32 %v231, %v375
  %v377 = vpop.f32.mrb[0].mxu0
  %378 = vmatprep.mubr.f32.mxu0 %v33
  %379 = vmatmul.mubr.f32.gmra.mrb[0].mxu0 %v32
  %v380 = vpop.f32.mrb[0].mxu0
  %v381 = vadd.f32 %v236, %v380
  %v382 = vpop.f32.mrb[0].mxu0
  %383 = vmatprep.mubr.f32.mxu0 %v37
  %384 = vmatmul.mubr.f32.gmra.mrb[0].mxu0 %v36
  %v385 = vpop.f32.mrb[0].mxu0
  %v386 = vadd.f32 %v241, %v385
  %v387 = vpop.f32.mrb[0].mxu0
  %388 = vmatprep.mubr.f32.mxu0 %v41
  %389 = vmatmul.mubr.f32.gmra.mrb[0].mxu0 %v40
  %v390 = vpop.f32.mrb[0].mxu0
  %v391 = vadd.f32 %v246, %v390
  %v392 = vpop.f32.mrb[0].mxu0
  %393 = vmatprep.mubr.f32.mxu0 %v45
  %394 = vmatmul.mubr.f32.gmra.mrb[0].mxu0 %v44
  %v395 = vpop.f32.mrb[0].mxu0
  %v396 = vadd.f32 %v251, %v395
  %v397 = vpop.f32.mrb[0].mxu0
  %398 = vmatprep.mubr.f32.mxu0 %v49
  %399 = vmatmul.mubr.f32.gmra.mrb[0].mxu0 %v48
  %v400 = vpop.f32.mrb[0].mxu0
  %v401 = vadd.f32 %v256, %v400
  %v402 = vpop.f32.mrb[0].mxu0
  %403 = vmatprep.mubr.f32.mxu0 %v53
  %404 = vmatmul.mubr.f32.gmra.mrb[0].mxu0 %v52
  %v405 = vpop.f32.mrb[0].mxu0
  %v406 = vadd.f32 %v261, %v405
  %v407 = vpop.f32.mrb[0].mxu0
  %408 = vmatprep.mubr.f32.mxu0 %v57
  %409 = vmatmul.mubr.f32.gmra.mrb[0].mxu0 %v56
  %v410 = vpop.f32.mrb[0].mxu0
  %v411 = vadd.f32 %v266, %v410
  %v412 = vpop.f32.mrb[0].mxu0
  %413 = vmatprep.mubr.f32.mxu0 %v61
  %414 = vmatmul.mubr.f32.gmra.mrb[0].mxu0 %v60
  %v415 = vpop.f32.mrb[0].mxu0
  %v416 = vadd.f32 %v271, %v415
  %v417 = vpop.f32.mrb[0].mxu0
  %418 = vmatprep.mubr.f32.mxu0 %v65
  %419 = vmatmul.mubr.f32.gmra.mrb[0].mxu0 %v64
  %v420 = vpop.f32.mrb[0].mxu0
  %v421 = vadd.f32 %v276, %v420
  %v422 = vpop.f32.mrb[0].mxu0
  %423 = vmatprep.mubr.f32.mxu0 %v69
  %424 = vmatmul.mubr.f32.gmra.mrb[0].mxu0 %v68
  %v425 = vpop.f32.mrb[0].mxu0
  %v426 = vadd.f32 %v281, %v425
  %v427 = vpop.f32.mrb[0].mxu0
  %428 = vmatprep.mubr.f32.mxu0 %v73
  %429 = vmatmul.mubr.f32.gmra.mrb[0].mxu0 %v72
  %v430 = vpop.f32.mrb[0].mxu0
  %v431 = vadd.f32 %v286, %v430
  %v432 = vpop.f32.mrb[0].mxu0
  %433 = vmatprep.mubr.f32.mxu0 %v77
  %434 = vmatmul.mubr.f32.gmra.mrb[0].mxu0 %v76
  %v435 = vpop.f32.mrb[0].mxu0
  %v436 = vadd.f32 %v291, %v435
  %v437 = vpop.f32.mrb[0].mxu0
  %438 = vdwg.mxu0
  %v439 = vmax.f32 %v361, 0.0
  %v440 = vmax.f32 %v366, 0.0
  %v441 = vmax.f32 %v371, 0.0
  %v442 = vmax.f32 %v376, 0.0
  %v443 = vmax.f32 %v381, 0.0
  %v444 = vmax.f32 %v386, 0.0
  %v445 = vmax.f32 %v391, 0.0
  %v446 = vmax.f32 %v396, 0.0
  %v447 = vmax.f32 %v401, 0.0
  %v448 = vmax.f32 %v406, 0.0
  %v449 = vmax.f32 %v411, 0.0
  %v450 = vmax.f32 %v416, 0.0
  %v451 = vmax.f32 %v421, 0.0
  %v452 = vmax.f32 %v426, 0.0
  %v453 = vmax.f32 %v431, 0.0
  %v454 = vmax.f32 %v436, 0.0
  %455 = vst [vmem:[#allocation2] sm:$0xff] %v439
  %456 = vst [vmem:[#allocation2 + $0x8] sm:$0xff] %v440
  %457 = vst [vmem:[#allocation2 + $0x10] sm:$0xff] %v441
  %458 = vst [vmem:[#allocation2 + $0x18] sm:$0xff] %v442
  %459 = vst [vmem:[#allocation2 + $0x20] sm:$0xff] %v443
  %460 = vst [vmem:[#allocation2 + $0x28] sm:$0xff] %v444
  %461 = vst [vmem:[#allocation2 + $0x30] sm:$0xff] %v445
  %462 = vst [vmem:[#allocation2 + $0x38] sm:$0xff] %v446
  %463 = vst [vmem:[#allocation2 + $0x40] sm:$0xff] %v447
  %464 = vst [vmem:[#allocation2 + $0x48] sm:$0xff] %v448
  %465 = vst [vmem:[#allocation2 + $0x50] sm:$0xff] %v449
  %466 = vst [vmem:[#allocation2 + $0x58] sm:$0xff] %v450
  %467 = vst [vmem:[#allocation2 + $0x60] sm:$0xff] %v451
  %468 = vst [vmem:[#allocation2 + $0x68] sm:$0xff] %v452
  %469 = vst [vmem:[#allocation2 + $0x70] sm:$0xff] %v453
  %470 = vst [vmem:[#allocation2 + $0x78] sm:$0xff] %v454
  %v471 = vld [vmem:[#allocation2] ss:$2 sm:$0xf]
  %s472 = scalar_lea.vmem [#allocation2], 16
  %v473 = vld [vmem:[%s472] ss:$2 sm:$0xf]
  %s474 = scalar_lea.vmem [#allocation2], 32
  %v475 = vld [vmem:[%s474] ss:$2 sm:$0xf]
  %s476 = scalar_lea.vmem [#allocation2], 48
  %v477 = vld [vmem:[%s476] ss:$2 sm:$0xf]
  %s478 = scalar_lea.vmem [#allocation2], 64
  %v479 = vld [vmem:[%s478] ss:$2 sm:$0xf]
  %s480 = scalar_lea.vmem [#allocation2], 80
  %v481 = vld [vmem:[%s480] ss:$2 sm:$0xf]
  %s482 = scalar_lea.vmem [#allocation2], 96
  %v483 = vld [vmem:[%s482] ss:$2 sm:$0xf]
  %s484 = scalar_lea.vmem [#allocation2], 112
  %v485 = vld [vmem:[%s484] ss:$2 sm:$0xf]
  %s486 = scalar_lea.vmem [#allocation2], 1
  %v487 = vld [vmem:[%s486] ss:$2 sm:$0xf]
  %s488 = scalar_lea.vmem [#allocation2], 17
  %v489 = vld [vmem:[%s488] ss:$2 sm:$0xf]
  %s490 = scalar_lea.vmem [#allocation2], 33
  %v491 = vld [vmem:[%s490] ss:$2 sm:$0xf]
  %s492 = scalar_lea.vmem [#allocation2], 49
  %v493 = vld [vmem:[%s492] ss:$2 sm:$0xf]
  %s494 = scalar_lea.vmem [#allocation2], 65
  %v495 = vld [vmem:[%s494] ss:$2 sm:$0xf]
  %s496 = scalar_lea.vmem [#allocation2], 81
  %v497 = vld [vmem:[%s496] ss:$2 sm:$0xf]
  %s498 = scalar_lea.vmem [#allocation2], 97
  %v499 = vld [vmem:[%s498] ss:$2 sm:$0xf]
  %s500 = scalar_lea.vmem [#allocation2], 113
  %v501 = vld [vmem:[%s500] ss:$2 sm:$0xf]
  %s502 = scalar_lea.vmem [#allocation2], 8
  %v503 = vld [vmem:[%s502] ss:$2 sm:$0xf]
  %s504 = scalar_lea.vmem %s502, 16 [#allocation2]
  %v505 = vld [vmem:[%s504] ss:$2 sm:$0xf]
  %s506 = scalar_lea.vmem %s502, 32 [#allocation2]
  %v507 = vld [vmem:[%s506] ss:$2 sm:$0xf]
  %s508 = scalar_lea.vmem %s502, 48 [#allocation2]
  %v509 = vld [vmem:[%s508] ss:$2 sm:$0xf]
  %s510 = scalar_lea.vmem %s502, 64 [#allocation2]
  %v511 = vld [vmem:[%s510] ss:$2 sm:$0xf]
  %s512 = scalar_lea.vmem %s502, 80 [#allocation2]
  %v513 = vld [vmem:[%s512] ss:$2 sm:$0xf]
  %s514 = scalar_lea.vmem %s502, 96 [#allocation2]
  %v515 = vld [vmem:[%s514] ss:$2 sm:$0xf]
  %s516 = scalar_lea.vmem %s502, 112 [#allocation2]
  %v517 = vld [vmem:[%s516] ss:$2 sm:$0xf]
  %s518 = scalar_lea.vmem %s502, 1 [#allocation2]
  %v519 = vld [vmem:[%s518] ss:$2 sm:$0xf]
  %s520 = scalar_lea.vmem %s502, 17 [#allocation2]
  %v521 = vld [vmem:[%s520] ss:$2 sm:$0xf]
  %s522 = scalar_lea.vmem %s502, 33 [#allocation2]
  %v523 = vld [vmem:[%s522] ss:$2 sm:$0xf]
  %s524 = scalar_lea.vmem %s502, 49 [#allocation2]
  %v525 = vld [vmem:[%s524] ss:$2 sm:$0xf]
  %s526 = scalar_lea.vmem %s502, 65 [#allocation2]
  %v527 = vld [vmem:[%s526] ss:$2 sm:$0xf]
  %s528 = scalar_lea.vmem %s502, 81 [#allocation2]
  %v529 = vld [vmem:[%s528] ss:$2 sm:$0xf]
  %s530 = scalar_lea.vmem %s502, 97 [#allocation2]
  %v531 = vld [vmem:[%s530] ss:$2 sm:$0xf]
  %s532 = scalar_lea.vmem %s502, 113 [#allocation2]
  %v533 = vld [vmem:[%s532] ss:$2 sm:$0xf]
  %v534 = vmax.f32 %v471, %v487
  %v535 = vmax.f32 %v473, %v489
  %v536 = vmax.f32 %v475, %v491
  %v537 = vmax.f32 %v477, %v493
  %v538 = vmax.f32 %v479, %v495
  %v539 = vmax.f32 %v481, %v497
  %v540 = vmax.f32 %v483, %v499
  %v541 = vmax.f32 %v485, %v501
  %v542 = vmax.f32 %v503, %v519
  %v543 = vmax.f32 %v505, %v521
  %v544 = vmax.f32 %v507, %v523
  %v545 = vmax.f32 %v509, %v525
  %v546 = vmax.f32 %v511, %v527
  %v547 = vmax.f32 %v513, %v529
  %v548 = vmax.f32 %v515, %v531
  %v549 = vmax.f32 %v517, %v533
  %v550 = vmax.f32 %v534, %v542
  %v551 = vmax.f32 %v535, %v543
  %v552 = vmax.f32 %v536, %v544
  %v553 = vmax.f32 %v537, %v545
  %v554 = vmax.f32 %v538, %v546
  %v555 = vmax.f32 %v539, %v547
  %v556 = vmax.f32 %v540, %v548
  %v557 = vmax.f32 %v541, %v549
  %558 = vst [vmem:[%s3] sm:$0xf] %v550
  %559 = vst [vmem:[%s3 + $0x4] sm:$0xf] %v551
  %560 = vst [vmem:[%s3 + $0x8] sm:$0xf] %v552
  %561 = vst [vmem:[%s3 + $0xc] sm:$0xf] %v553
  %562 = vst [vmem:[%s3 + $0x10] sm:$0xf] %v554
  %563 = vst [vmem:[%s3 + $0x14] sm:$0xf] %v555
  %564 = vst [vmem:[%s3 + $0x18] sm:$0xf] %v556
  %565 = vst [vmem:[%s3 + $0x1c] sm:$0xf] %v557
  // Predicated region
  $region14: #{dnn_forward.4} parent=0 // pred_check
    _
  $region15: #{dnn_forward.4} parent=0 // pred_check_branch
    %567 = sbr.rel (0) target = $region17
  $region16: #{dnn_forward.4} parent=0 // pred_region
    _
  $region17: #{dnn_forward.4} parent=0 // pred_fallthru
    _
  // Predicated region
  $region18: #{dnn_forward.4} parent=0 // pred_check
    _
  $region19: #{dnn_forward.4} parent=0 // pred_check_branch
    %569 = sbr.rel (0) target = $region21
  $region20: #{dnn_forward.4} parent=0 // pred_region
    _
  $region21: #{dnn_forward.4} parent=0 // pred_fallthru
    _

// kernel: dnn_forward.5
$region0: #{dnn_forward.5}
  #allocation0 [shape = 'u32[]', space=smem, size = 0x4, offset = 0x4, fixed_abs, tag = 'smem constant byte address 0x4 - core index']
  #allocation1 [shape = 'u32[144,128]{1,0:T(1,128)}', space=vmem, size = 0x12000, scoped, tag = 'internal scratch']
  %s0 = inlined_call_operand.vmem [shape: f32[2,2048], index: 0, kind: input, shape index: {}]
  %s1 = inlined_call_operand.vmem [shape: f32[2048,128], index: 1, kind: input, shape index: {}]
  %s2 = inlined_call_operand.vmem [shape: f32[1,128], index: 2, kind: input, shape index: {}]
  %s3 = inlined_call_operand.vmem [shape: f32[128,128], index: 3, kind: input, shape index: {}]
  %s4 = inlined_call_operand.vmem [shape: f32[1,128], index: 4, kind: input, shape index: {}]
  %s5 = inlined_call_operand.vmem [shape: f32[128,128], index: 5, kind: input, shape index: {}]
  %s6 = inlined_call_operand.vmem [shape: f32[1,128], index: 6, kind: input, shape index: {}]
  %s7 = inlined_call_operand.hbm [shape: f32[2,128], index: 7, kind: output, shape index: {}]
  %s8 = sld [smem:[#allocation0]]
  $region38: #{dnn_forward.5} parent=0
    _
  %s10 = ssub.s32 1, %s8
  %s11 = scalar_select 0, %s10, %s8
  $region1: #{dnn_forward.5} parent=0
    #allocation2 [shape = 'u8[1024]{0}', space=vmem, size = 0x400, scoped, tag = 'output window, operand 0, single buffered']
    #allocation3 [shape = 's32[1]{0}', space=sflag, size = 0x4, scoped, tag = 'scoped memory for dnn_forward.5']
    %12 = vsyncpa [#allocation3], 0
    // Predicated region
    $region2: #{dnn_forward.5} parent=1 // pred_check
      _
    $region3: #{dnn_forward.5} parent=1 // pred_check_branch
      %14 = sbr.rel (0) target = $region5
    $region4: #{dnn_forward.5} parent=1 // pred_region
      _
    $region5: #{dnn_forward.5} parent=1 // pred_fallthru
      _
    // Predicated region
    $region6: #{dnn_forward.5} parent=1 // pred_check
      _
    $region7: #{dnn_forward.5} parent=1 // pred_check_branch
      %16 = sbr.rel (0) target = $region9
    $region8: #{dnn_forward.5} parent=1 // pred_region
      _
    $region9: #{dnn_forward.5} parent=1 // pred_fallthru
      _
    // Predicated region
    $region10: #{dnn_forward.5} parent=1 // pred_check
      _
    $region11: #{dnn_forward.5} parent=1 // pred_check_branch
      %18 = sbr.rel (0) target = $region13
    $region12: #{dnn_forward.5} parent=1 // pred_region
      _
    $region13: #{dnn_forward.5} parent=1 // pred_fallthru
      _
    // Predicated region
    $region14: #{dnn_forward.5} parent=1 // pred_check
      _
    $region15: #{dnn_forward.5} parent=1 // pred_check_branch
      %20 = sbr.rel (0) target = $region17
    $region16: #{dnn_forward.5} parent=1 // pred_region
      _
    $region17: #{dnn_forward.5} parent=1 // pred_fallthru
      _
    // Predicated region
    $region18: #{dnn_forward.5} parent=1 // pred_check
      _
    $region19: #{dnn_forward.5} parent=1 // pred_check_branch
      %22 = sbr.rel (0) target = $region21
    $region20: #{dnn_forward.5} parent=1 // pred_region
      _
    $region21: #{dnn_forward.5} parent=1 // pred_fallthru
      _
    // Predicated region
    $region22: #{dnn_forward.5} parent=1 // pred_check
      _
    $region23: #{dnn_forward.5} parent=1 // pred_check_branch
      %24 = sbr.rel (0) target = $region25
    $region24: #{dnn_forward.5} parent=1 // pred_region
      _
    $region25: #{dnn_forward.5} parent=1 // pred_fallthru
      _
    // Predicated region
    $region26: #{dnn_forward.5} parent=1 // pred_check
      _
    $region27: #{dnn_forward.5} parent=1 // pred_check_branch
      %26 = sbr.rel (0) target = $region29
    $region28: #{dnn_forward.5} parent=1 // pred_region
      _
    $region29: #{dnn_forward.5} parent=1 // pred_fallthru
      _
    %v27 = vld [vmem:[%s0] sm:$0xff]
    %v28 = vld [vmem:[%s0 + $0x8] sm:$0xff]
    %v29 = vld [vmem:[%s0 + $0x10] sm:$0xff]
    %v30 = vld [vmem:[%s0 + $0x18] sm:$0xff]
    %v31 = vld [vmem:[%s1] sm:$0xff]
    %v32 = vld [vmem:[%s1 + $0x8] sm:$0xff]
    %v33 = vld [vmem:[%s1 + $0x10] sm:$0xff]
    %v34 = vld [vmem:[%s1 + $0x18] sm:$0xff]
    %v35 = vld [vmem:[%s1 + $0x20] sm:$0xff]
    %v36 = vld [vmem:[%s1 + $0x28] sm:$0xff]
    %v37 = vld [vmem:[%s1 + $0x30] sm:$0xff]
    %v38 = vld [vmem:[%s1 + $0x38] sm:$0xff]
    %v39 = vld [vmem:[%s1 + $0x40] sm:$0xff]
    %v40 = vld [vmem:[%s1 + $0x48] sm:$0xff]
    %v41 = vld [vmem:[%s1 + $0x50] sm:$0xff]
    %v42 = vld [vmem:[%s1 + $0x58] sm:$0xff]
    %v43 = vld [vmem:[%s1 + $0x60] sm:$0xff]
    %v44 = vld [vmem:[%s1 + $0x68] sm:$0xff]
    %v45 = vld [vmem:[%s1 + $0x70] sm:$0xff]
    %v46 = vld [vmem:[%s1 + $0x78] sm:$0xff]
    %v47 = vld [vmem:[%s1 + $0x80] sm:$0xff]
    %v48 = vld [vmem:[%s1 + $0x88] sm:$0xff]
    %v49 = vld [vmem:[%s1 + $0x90] sm:$0xff]
    %v50 = vld [vmem:[%s1 + $0x98] sm:$0xff]
    %v51 = vld [vmem:[%s1 + $0xa0] sm:$0xff]
    %v52 = vld [vmem:[%s1 + $0xa8] sm:$0xff]
    %v53 = vld [vmem:[%s1 + $0xb0] sm:$0xff]
    %v54 = vld [vmem:[%s1 + $0xb8] sm:$0xff]
    %v55 = vld [vmem:[%s1 + $0xc0] sm:$0xff]
    %v56 = vld [vmem:[%s1 + $0xc8] sm:$0xff]
    %v57 = vld [vmem:[%s1 + $0xd0] sm:$0xff]
    %v58 = vld [vmem:[%s1 + $0xd8] sm:$0xff]
    %v59 = vld [vmem:[%s1 + $0xe0] sm:$0xff]
    %v60 = vld [vmem:[%s1 + $0xe8] sm:$0xff]
    %v61 = vld [vmem:[%s1 + $0xf0] sm:$0xff]
    %v62 = vld [vmem:[%s1 + $0xf8] sm:$0xff]
    %v63 = vld [vmem:[%s1 + $0x100] sm:$0xff]
    %v64 = vld [vmem:[%s1 + $0x108] sm:$0xff]
    %v65 = vld [vmem:[%s1 + $0x110] sm:$0xff]
    %v66 = vld [vmem:[%s1 + $0x118] sm:$0xff]
    %v67 = vld [vmem:[%s1 + $0x120] sm:$0xff]
    %v68 = vld [vmem:[%s1 + $0x128] sm:$0xff]
    %v69 = vld [vmem:[%s1 + $0x130] sm:$0xff]
    %v70 = vld [vmem:[%s1 + $0x138] sm:$0xff]
    %v71 = vld [vmem:[%s1 + $0x140] sm:$0xff]
    %v72 = vld [vmem:[%s1 + $0x148] sm:$0xff]
    %v73 = vld [vmem:[%s1 + $0x150] sm:$0xff]
    %v74 = vld [vmem:[%s1 + $0x158] sm:$0xff]
    %v75 = vld [vmem:[%s1 + $0x160] sm:$0xff]
    %v76 = vld [vmem:[%s1 + $0x168] sm:$0xff]
    %v77 = vld [vmem:[%s1 + $0x170] sm:$0xff]
    %v78 = vld [vmem:[%s1 + $0x178] sm:$0xff]
    %v79 = vld [vmem:[%s1 + $0x180] sm:$0xff]
    %v80 = vld [vmem:[%s1 + $0x188] sm:$0xff]
    %v81 = vld [vmem:[%s1 + $0x190] sm:$0xff]
    %v82 = vld [vmem:[%s1 + $0x198] sm:$0xff]
    %v83 = vld [vmem:[%s1 + $0x1a0] sm:$0xff]
    %v84 = vld [vmem:[%s1 + $0x1a8] sm:$0xff]
    %v85 = vld [vmem:[%s1 + $0x1b0] sm:$0xff]
    %v86 = vld [vmem:[%s1 + $0x1b8] sm:$0xff]
    %v87 = vld [vmem:[%s1 + $0x1c0] sm:$0xff]
    %v88 = vld [vmem:[%s1 + $0x1c8] sm:$0xff]
    %v89 = vld [vmem:[%s1 + $0x1d0] sm:$0xff]
    %v90 = vld [vmem:[%s1 + $0x1d8] sm:$0xff]
    %v91 = vld [vmem:[%s1 + $0x1e0] sm:$0xff]
    %v92 = vld [vmem:[%s1 + $0x1e8] sm:$0xff]
    %v93 = vld [vmem:[%s1 + $0x1f0] sm:$0xff]
    %v94 = vld [vmem:[%s1 + $0x1f8] sm:$0xff]
    %v95 = vld [vmem:[%s1 + $0x200] sm:$0xff]
    %v96 = vld [vmem:[%s1 + $0x208] sm:$0xff]
    %v97 = vld [vmem:[%s1 + $0x210] sm:$0xff]
    %v98 = vld [vmem:[%s1 + $0x218] sm:$0xff]
    %v99 = vld [vmem:[%s1 + $0x220] sm:$0xff]
    %v100 = vld [vmem:[%s1 + $0x228] sm:$0xff]
    %v101 = vld [vmem:[%s1 + $0x230] sm:$0xff]
    %v102 = vld [vmem:[%s1 + $0x238] sm:$0xff]
    %v103 = vld [vmem:[%s1 + $0x240] sm:$0xff]
    %v104 = vld [vmem:[%s1 + $0x248] sm:$0xff]
    %v105 = vld [vmem:[%s1 + $0x250] sm:$0xff]
    %v106 = vld [vmem:[%s1 + $0x258] sm:$0xff]
    %v107 = vld [vmem:[%s1 + $0x260] sm:$0xff]
    %v108 = vld [vmem:[%s1 + $0x268] sm:$0xff]
    %v109 = vld [vmem:[%s1 + $0x270] sm:$0xff]
    %v110 = vld [vmem:[%s1 + $0x278] sm:$0xff]
    %v111 = vld [vmem:[%s1 + $0x280] sm:$0xff]
    %v112 = vld [vmem:[%s1 + $0x288] sm:$0xff]
    %v113 = vld [vmem:[%s1 + $0x290] sm:$0xff]
    %v114 = vld [vmem:[%s1 + $0x298] sm:$0xff]
    %v115 = vld [vmem:[%s1 + $0x2a0] sm:$0xff]
    %v116 = vld [vmem:[%s1 + $0x2a8] sm:$0xff]
    %v117 = vld [vmem:[%s1 + $0x2b0] sm:$0xff]
    %v118 = vld [vmem:[%s1 + $0x2b8] sm:$0xff]
    %v119 = vld [vmem:[%s1 + $0x2c0] sm:$0xff]
    %v120 = vld [vmem:[%s1 + $0x2c8] sm:$0xff]
    %v121 = vld [vmem:[%s1 + $0x2d0] sm:$0xff]
    %v122 = vld [vmem:[%s1 + $0x2d8] sm:$0xff]
    %v123 = vld [vmem:[%s1 + $0x2e0] sm:$0xff]
    %v124 = vld [vmem:[%s1 + $0x2e8] sm:$0xff]
    %v125 = vld [vmem:[%s1 + $0x2f0] sm:$0xff]
    %v126 = vld [vmem:[%s1 + $0x2f8] sm:$0xff]
    %v127 = vld [vmem:[%s1 + $0x300] sm:$0xff]
    %v128 = vld [vmem:[%s1 + $0x308] sm:$0xff]
    %v129 = vld [vmem:[%s1 + $0x310] sm:$0xff]
    %v130 = vld [vmem:[%s1 + $0x318] sm:$0xff]
    %v131 = vld [vmem:[%s1 + $0x320] sm:$0xff]
    %v132 = vld [vmem:[%s1 + $0x328] sm:$0xff]
    %v133 = vld [vmem:[%s1 + $0x330] sm:$0xff]
    %v134 = vld [vmem:[%s1 + $0x338] sm:$0xff]
    %v135 = vld [vmem:[%s1 + $0x340] sm:$0xff]
    %v136 = vld [vmem:[%s1 + $0x348] sm:$0xff]
    %v137 = vld [vmem:[%s1 + $0x350] sm:$0xff]
    %v138 = vld [vmem:[%s1 + $0x358] sm:$0xff]
    %v139 = vld [vmem:[%s1 + $0x360] sm:$0xff]
    %v140 = vld [vmem:[%s1 + $0x368] sm:$0xff]
    %v141 = vld [vmem:[%s1 + $0x370] sm:$0xff]
    %v142 = vld [vmem:[%s1 + $0x378] sm:$0xff]
    %v143 = vld [vmem:[%s1 + $0x380] sm:$0xff]
    %v144 = vld [vmem:[%s1 + $0x388] sm:$0xff]
    %v145 = vld [vmem:[%s1 + $0x390] sm:$0xff]
    %v146 = vld [vmem:[%s1 + $0x398] sm:$0xff]
    %v147 = vld [vmem:[%s1 + $0x3a0] sm:$0xff]
    %v148 = vld [vmem:[%s1 + $0x3a8] sm:$0xff]
    %v149 = vld [vmem:[%s1 + $0x3b0] sm:$0xff]
    %v150 = vld [vmem:[%s1 + $0x3b8] sm:$0xff]
    %v151 = vld [vmem:[%s1 + $0x3c0] sm:$0xff]
    %v152 = vld [vmem:[%s1 + $0x3c8] sm:$0xff]
    %v153 = vld [vmem:[%s1 + $0x3d0] sm:$0xff]
    %v154 = vld [vmem:[%s1 + $0x3d8] sm:$0xff]
    %v155 = vld [vmem:[%s1 + $0x3e0] sm:$0xff]
    %v156 = vld [vmem:[%s1 + $0x3e8] sm:$0xff]
    %v157 = vld [vmem:[%s1 + $0x3f0] sm:$0xff]
    %v158 = vld [vmem:[%s1 + $0x3f8] sm:$0xff]
    %v159 = vld [vmem:[%s1 + $0x400] sm:$0xff]
    %v160 = vld [vmem:[%s1 + $0x408] sm:$0xff]
    %v161 = vld [vmem:[%s1 + $0x410] sm:$0xff]
    %v162 = vld [vmem:[%s1 + $0x418] sm:$0xff]
    %v163 = vld [vmem:[%s1 + $0x420] sm:$0xff]
    %v164 = vld [vmem:[%s1 + $0x428] sm:$0xff]
    %v165 = vld [vmem:[%s1 + $0x430] sm:$0xff]
    %v166 = vld [vmem:[%s1 + $0x438] sm:$0xff]
    %v167 = vld [vmem:[%s1 + $0x440] sm:$0xff]
    %v168 = vld [vmem:[%s1 + $0x448] sm:$0xff]
    %v169 = vld [vmem:[%s1 + $0x450] sm:$0xff]
    %v170 = vld [vmem:[%s1 + $0x458] sm:$0xff]
    %v171 = vld [vmem:[%s1 + $0x460] sm:$0xff]
    %v172 = vld [vmem:[%s1 + $0x468] sm:$0xff]
    %v173 = vld [vmem:[%s1 + $0x470] sm:$0xff]
    %v174 = vld [vmem:[%s1 + $0x478] sm:$0xff]
    %v175 = vld [vmem:[%s1 + $0x480] sm:$0xff]
    %v176 = vld [vmem:[%s1 + $0x488] sm:$0xff]
    %v177 = vld [vmem:[%s1 + $0x490] sm:$0xff]
    %v178 = vld [vmem:[%s1 + $0x498] sm:$0xff]
    %v179 = vld [vmem:[%s1 + $0x4a0] sm:$0xff]
    %v180 = vld [vmem:[%s1 + $0x4a8] sm:$0xff]
    %v181 = vld [vmem:[%s1 + $0x4b0] sm:$0xff]
    %v182 = vld [vmem:[%s1 + $0x4b8] sm:$0xff]
    %v183 = vld [vmem:[%s1 + $0x4c0] sm:$0xff]
    %v184 = vld [vmem:[%s1 + $0x4c8] sm:$0xff]
    %v185 = vld [vmem:[%s1 + $0x4d0] sm:$0xff]
    %v186 = vld [vmem:[%s1 + $0x4d8] sm:$0xff]
    %v187 = vld [vmem:[%s1 + $0x4e0] sm:$0xff]
    %v188 = vld [vmem:[%s1 + $0x4e8] sm:$0xff]
    %v189 = vld [vmem:[%s1 + $0x4f0] sm:$0xff]
    %v190 = vld [vmem:[%s1 + $0x4f8] sm:$0xff]
    %v191 = vld [vmem:[%s1 + $0x500] sm:$0xff]
    %v192 = vld [vmem:[%s1 + $0x508] sm:$0xff]
    %v193 = vld [vmem:[%s1 + $0x510] sm:$0xff]
    %v194 = vld [vmem:[%s1 + $0x518] sm:$0xff]
    %v195 = vld [vmem:[%s1 + $0x520] sm:$0xff]
    %v196 = vld [vmem:[%s1 + $0x528] sm:$0xff]
    %v197 = vld [vmem:[%s1 + $0x530] sm:$0xff]
    %v198 = vld [vmem:[%s1 + $0x538] sm:$0xff]
    %v199 = vld [vmem:[%s1 + $0x540] sm:$0xff]
    %v200 = vld [vmem:[%s1 + $0x548] sm:$0xff]
    %v201 = vld [vmem:[%s1 + $0x550] sm:$0xff]
    %v202 = vld [vmem:[%s1 + $0x558] sm:$0xff]
    %v203 = vld [vmem:[%s1 + $0x560] sm:$0xff]
    %v204 = vld [vmem:[%s1 + $0x568] sm:$0xff]
    %v205 = vld [vmem:[%s1 + $0x570] sm:$0xff]
    %v206 = vld [vmem:[%s1 + $0x578] sm:$0xff]
    %v207 = vld [vmem:[%s1 + $0x580] sm:$0xff]
    %v208 = vld [vmem:[%s1 + $0x588] sm:$0xff]
    %v209 = vld [vmem:[%s1 + $0x590] sm:$0xff]
    %v210 = vld [vmem:[%s1 + $0x598] sm:$0xff]
    %v211 = vld [vmem:[%s1 + $0x5a0] sm:$0xff]
    %v212 = vld [vmem:[%s1 + $0x5a8] sm:$0xff]
    %v213 = vld [vmem:[%s1 + $0x5b0] sm:$0xff]
    %v214 = vld [vmem:[%s1 + $0x5b8] sm:$0xff]
    %v215 = vld [vmem:[%s1 + $0x5c0] sm:$0xff]
    %v216 = vld [vmem:[%s1 + $0x5c8] sm:$0xff]
    %v217 = vld [vmem:[%s1 + $0x5d0] sm:$0xff]
    %v218 = vld [vmem:[%s1 + $0x5d8] sm:$0xff]
    %v219 = vld [vmem:[%s1 + $0x5e0] sm:$0xff]
    %v220 = vld [vmem:[%s1 + $0x5e8] sm:$0xff]
    %v221 = vld [vmem:[%s1 + $0x5f0] sm:$0xff]
    %v222 = vld [vmem:[%s1 + $0x5f8] sm:$0xff]
    %v223 = vld [vmem:[%s1 + $0x600] sm:$0xff]
    %v224 = vld [vmem:[%s1 + $0x608] sm:$0xff]
    %v225 = vld [vmem:[%s1 + $0x610] sm:$0xff]
    %v226 = vld [vmem:[%s1 + $0x618] sm:$0xff]
    %v227 = vld [vmem:[%s1 + $0x620] sm:$0xff]
    %v228 = vld [vmem:[%s1 + $0x628] sm:$0xff]
    %v229 = vld [vmem:[%s1 + $0x630] sm:$0xff]
    %v230 = vld [vmem:[%s1 + $0x638] sm:$0xff]
    %v231 = vld [vmem:[%s1 + $0x640] sm:$0xff]
    %v232 = vld [vmem:[%s1 + $0x648] sm:$0xff]
    %v233 = vld [vmem:[%s1 + $0x650] sm:$0xff]
    %v234 = vld [vmem:[%s1 + $0x658] sm:$0xff]
    %v235 = vld [vmem:[%s1 + $0x660] sm:$0xff]
    %v236 = vld [vmem:[%s1 + $0x668] sm:$0xff]
    %v237 = vld [vmem:[%s1 + $0x670] sm:$0xff]
    %v238 = vld [vmem:[%s1 + $0x678] sm:$0xff]
    %v239 = vld [vmem:[%s1 + $0x680] sm:$0xff]
    %v240 = vld [vmem:[%s1 + $0x688] sm:$0xff]
    %v241 = vld [vmem:[%s1 + $0x690] sm:$0xff]
    %v242 = vld [vmem:[%s1 + $0x698] sm:$0xff]
    %v243 = vld [vmem:[%s1 + $0x6a0] sm:$0xff]
    %v244 = vld [vmem:[%s1 + $0x6a8] sm:$0xff]
    %v245 = vld [vmem:[%s1 + $0x6b0] sm:$0xff]
    %v246 = vld [vmem:[%s1 + $0x6b8] sm:$0xff]
    %v247 = vld [vmem:[%s1 + $0x6c0] sm:$0xff]
    %v248 = vld [vmem:[%s1 + $0x6c8] sm:$0xff]
    %v249 = vld [vmem:[%s1 + $0x6d0] sm:$0xff]
    %v250 = vld [vmem:[%s1 + $0x6d8] sm:$0xff]
    %v251 = vld [vmem:[%s1 + $0x6e0] sm:$0xff]
    %v252 = vld [vmem:[%s1 + $0x6e8] sm:$0xff]
    %v253 = vld [vmem:[%s1 + $0x6f0] sm:$0xff]
    %v254 = vld [vmem:[%s1 + $0x6f8] sm:$0xff]
    %v255 = vld [vmem:[%s1 + $0x700] sm:$0xff]
    %v256 = vld [vmem:[%s1 + $0x708] sm:$0xff]
    %v257 = vld [vmem:[%s1 + $0x710] sm:$0xff]
    %v258 = vld [vmem:[%s1 + $0x718] sm:$0xff]
    %v259 = vld [vmem:[%s1 + $0x720] sm:$0xff]
    %v260 = vld [vmem:[%s1 + $0x728] sm:$0xff]
    %v261 = vld [vmem:[%s1 + $0x730] sm:$0xff]
    %v262 = vld [vmem:[%s1 + $0x738] sm:$0xff]
    %v263 = vld [vmem:[%s1 + $0x740] sm:$0xff]
    %v264 = vld [vmem:[%s1 + $0x748] sm:$0xff]
    %v265 = vld [vmem:[%s1 + $0x750] sm:$0xff]
    %v266 = vld [vmem:[%s1 + $0x758] sm:$0xff]
    %v267 = vld [vmem:[%s1 + $0x760] sm:$0xff]
    %v268 = vld [vmem:[%s1 + $0x768] sm:$0xff]
    %v269 = vld [vmem:[%s1 + $0x770] sm:$0xff]
    %v270 = vld [vmem:[%s1 + $0x778] sm:$0xff]
    %v271 = vld [vmem:[%s1 + $0x780] sm:$0xff]
    %v272 = vld [vmem:[%s1 + $0x788] sm:$0xff]
    %v273 = vld [vmem:[%s1 + $0x790] sm:$0xff]
    %v274 = vld [vmem:[%s1 + $0x798] sm:$0xff]
    %v275 = vld [vmem:[%s1 + $0x7a0] sm:$0xff]
    %v276 = vld [vmem:[%s1 + $0x7a8] sm:$0xff]
    %v277 = vld [vmem:[%s1 + $0x7b0] sm:$0xff]
    %v278 = vld [vmem:[%s1 + $0x7b8] sm:$0xff]
    %v279 = vld [vmem:[%s1 + $0x7c0] sm:$0xff]
    %v280 = vld [vmem:[%s1 + $0x7c8] sm:$0xff]
    %v281 = vld [vmem:[%s1 + $0x7d0] sm:$0xff]
    %v282 = vld [vmem:[%s1 + $0x7d8] sm:$0xff]
    %v283 = vld [vmem:[%s1 + $0x7e0] sm:$0xff]
    %v284 = vld [vmem:[%s1 + $0x7e8] sm:$0xff]
    %v285 = vld [vmem:[%s1 + $0x7f0] sm:$0xff]
    %v286 = vld [vmem:[%s1 + $0x7f8] sm:$0xff]
    %v287 = vld [vmem:[%s2] sm:$0x1]
    %v289 = vlaneseq
    %v290 = vshrl.u32 %v289, 7
    %v291 = vsub.s32 0, %v290
    %v292 = vrot.slane %v287, %v291
    %v298 = vcombine.high %v27, %v27
    %v300 = vunpack.c.l.s4 1983009808
    %v301 = vunpack.c.0.s8 %v300
    %v302 = vlaneseq
    %v303 = vshrl.u32 %v302, 7
    %v304 = vsub.s32 %v301, %v303
    %v305 = vrot.slane %v27, %v304
    %v307 = vunpack.c.l.s4 1983009808
    %v308 = vunpack.c.0.s8 %v307
    %v309 = vlaneseq
    %v310 = vshrl.u32 %v309, 7
    %v311 = vsub.s32 %v308, %v310
    %v312 = vrot.slane %v298, %v311
    %v313 = vcombine.high %v305, %v305
    %v314 = vcombine.high %v312, %v312
    %v315 = vcombine.high %v28, %v28
    %v317 = vunpack.c.l.s4 1983009808
    %v318 = vunpack.c.0.s8 %v317
    %v319 = vlaneseq
    %v320 = vshrl.u32 %v319, 7
    %v321 = vsub.s32 %v318, %v320
    %v322 = vrot.slane %v28, %v321
    %v324 = vunpack.c.l.s4 1983009808
    %v325 = vunpack.c.0.s8 %v324
    %v326 = vlaneseq
    %v327 = vshrl.u32 %v326, 7
    %v328 = vsub.s32 %v325, %v327
    %v329 = vrot.slane %v315, %v328
    %v330 = vcombine.high %v322, %v322
    %v331 = vcombine.high %v329, %v329
    %v332 = vcombine.high %v29, %v29
    %v334 = vunpack.c.l.s4 1983009808
    %v335 = vunpack.c.0.s8 %v334
    %v336 = vlaneseq
    %v337 = vshrl.u32 %v336, 7
    %v338 = vsub.s32 %v335, %v337
    %v339 = vrot.slane %v29, %v338
    %v341 = vunpack.c.l.s4 1983009808
    %v342 = vunpack.c.0.s8 %v341
    %v343 = vlaneseq
    %v344 = vshrl.u32 %v343, 7
    %v345 = vsub.s32 %v342, %v344
    %v346 = vrot.slane %v332, %v345
    %v347 = vcombine.high %v339, %v339
    %v348 = vcombine.high %v346, %v346
    %v349 = vcombine.high %v30, %v30
    %v351 = vunpack.c.l.s4 1983009808
    %v352 = vunpack.c.0.s8 %v351
    %v353 = vlaneseq
    %v354 = vshrl.u32 %v353, 7
    %v355 = vsub.s32 %v352, %v354
    %v356 = vrot.slane %v30, %v355
    %v358 = vunpack.c.l.s4 1983009808
    %v359 = vunpack.c.0.s8 %v358
    %v360 = vlaneseq
    %v361 = vshrl.u32 %v360, 7
    %v362 = vsub.s32 %v359, %v361
    %v363 = vrot.slane %v349, %v362
    %v364 = vcombine.high %v356, %v356
    %v365 = vcombine.high %v363, %v363
    %382 = vmatprep.subr.mxu0 0.0
    %383 = vmatpush1.msra.mxu0 %v31
    %384 = vmatprep.subr.mxu0 0.0
    %385 = vmatpush1.msra.mxu0 %v32
    %386 = vmatprep.subr.mxu0 0.0
    %387 = vmatpush1.msra.mxu0 %v33
    %388 = vmatprep.subr.mxu0 0.0
    %389 = vmatpush1.msra.mxu0 %v34
    %390 = vmatprep.subr.mxu0 0.0
    %391 = vmatpush1.msra.mxu0 %v35
    %392 = vmatprep.subr.mxu0 0.0
    %393 = vmatpush1.msra.mxu0 %v36
    %394 = vmatprep.subr.mxu0 0.0
    %395 = vmatpush1.msra.mxu0 %v37
    %396 = vmatprep.subr.mxu0 0.0
    %397 = vmatpush1.msra.mxu0 %v38
    %398 = vmatprep.subr.mxu0 0.0
    %399 = vmatpush1.msra.mxu0 %v39
    %400 = vmatprep.subr.mxu0 0.0
    %401 = vmatpush1.msra.mxu0 %v40
    %402 = vmatprep.subr.mxu0 0.0
    %403 = vmatpush1.msra.mxu0 %v41
    %404 = vmatprep.subr.mxu0 0.0
    %405 = vmatpush1.msra.mxu0 %v42
    %406 = vmatprep.subr.mxu0 0.0
    %407 = vmatpush1.msra.mxu0 %v43
    %408 = vmatprep.subr.mxu0 0.0
    %409 = vmatpush1.msra.mxu0 %v44
    %410 = vmatprep.subr.mxu0 0.0
    %411 = vmatpush1.msra.mxu0 %v45
    %412 = vmatprep.subr.mxu0 0.0
    %413 = vmatpush1.msra.mxu0 %v46
    %414 = vmatprep.subr.mxu0 0.0
    %415 = vmatpush1.msra.mxu0 %v47
    %416 = vmatprep.subr.mxu0 0.0
    %417 = vmatpush1.msra.mxu0 %v48
    %418 = vmatprep.subr.mxu0 0.0
    %419 = vmatpush1.msra.mxu0 %v49
    %420 = vmatprep.subr.mxu0 0.0
    %421 = vmatpush1.msra.mxu0 %v50
    %422 = vmatprep.subr.mxu0 0.0
    %423 = vmatpush1.msra.mxu0 %v51
    %424 = vmatprep.subr.mxu0 0.0
    %425 = vmatpush1.msra.mxu0 %v52
    %426 = vmatprep.subr.mxu0 0.0
    %427 = vmatpush1.msra.mxu0 %v53
    %428 = vmatprep.subr.mxu0 0.0
    %429 = vmatpush1.msra.mxu0 %v54
    %430 = vmatprep.subr.mxu0 0.0
    %431 = vmatpush1.msra.mxu0 %v55
    %432 = vmatprep.subr.mxu0 0.0
    %433 = vmatpush1.msra.mxu0 %v56
    %434 = vmatprep.subr.mxu0 0.0
    %435 = vmatpush1.msra.mxu0 %v57
    %436 = vmatprep.subr.mxu0 0.0
    %437 = vmatpush1.msra.mxu0 %v58
    %438 = vmatprep.subr.mxu0 0.0
    %439 = vmatpush1.msra.mxu0 %v59
    %440 = vmatprep.subr.mxu0 0.0
    %441 = vmatpush1.msra.mxu0 %v60
    %442 = vmatprep.subr.mxu0 0.0
    %443 = vmatpush1.msra.mxu0 %v61
    %444 = vmatprep.subr.mxu0 0.0
    %445 = vmatpush1.msra.mxu0 %v62
    %446 = vmatprep.mubr.f32.mxu0 %v313
    %447 = vmatmul.mubr.f32.gmra.mrb[0].mxu0 %v305
    %v448 = vpop.f32.mrb[0].mxu0
    %v449 = vadd.f32 %v292, %v448
    %v450 = vpop.f32.mrb[0].mxu0
    %451 = vdwg.mxu0
    %452 = vmatprep.subr.mxu0 0.0
    %453 = vmatpush1.msra.mxu0 %v63
    %454 = vmatprep.subr.mxu0 0.0
    %455 = vmatpush1.msra.mxu0 %v64
    %456 = vmatprep.subr.mxu0 0.0
    %457 = vmatpush1.msra.mxu0 %v65
    %458 = vmatprep.subr.mxu0 0.0
    %459 = vmatpush1.msra.mxu0 %v66
    %460 = vmatprep.subr.mxu0 0.0
    %461 = vmatpush1.msra.mxu0 %v67
    %462 = vmatprep.subr.mxu0 0.0
    %463 = vmatpush1.msra.mxu0 %v68
    %464 = vmatprep.subr.mxu0 0.0
    %465 = vmatpush1.msra.mxu0 %v69
    %466 = vmatprep.subr.mxu0 0.0
    %467 = vmatpush1.msra.mxu0 %v70
    %468 = vmatprep.subr.mxu0 0.0
    %469 = vmatpush1.msra.mxu0 %v71
    %470 = vmatprep.subr.mxu0 0.0
    %471 = vmatpush1.msra.mxu0 %v72
    %472 = vmatprep.subr.mxu0 0.0
    %473 = vmatpush1.msra.mxu0 %v73
    %474 = vmatprep.subr.mxu0 0.0
    %475 = vmatpush1.msra.mxu0 %v74
    %476 = vmatprep.subr.mxu0 0.0
    %477 = vmatpush1.msra.mxu0 %v75
    %478 = vmatprep.subr.mxu0 0.0
    %479 = vmatpush1.msra.mxu0 %v76
    %480 = vmatprep.subr.mxu0 0.0
    %481 = vmatpush1.msra.mxu0 %v77
    %482 = vmatprep.subr.mxu0 0.0
    %483 = vmatpush1.msra.mxu0 %v78
    %484 = vmatprep.subr.mxu0 0.0
    %485 = vmatpush1.msra.mxu0 %v79
    %486 = vmatprep.subr.mxu0 0.0
    %487 = vmatpush1.msra.mxu0 %v80
    %488 = vmatprep.subr.mxu0 0.0
    %489 = vmatpush1.msra.mxu0 %v81
    %490 = vmatprep.subr.mxu0 0.0
    %491 = vmatpush1.msra.mxu0 %v82
    %492 = vmatprep.subr.mxu0 0.0
    %493 = vmatpush1.msra.mxu0 %v83
    %494 = vmatprep.subr.mxu0 0.0
    %495 = vmatpush1.msra.mxu0 %v84
    %496 = vmatprep.subr.mxu0 0.0
    %497 = vmatpush1.msra.mxu0 %v85
    %498 = vmatprep.subr.mxu0 0.0
    %499 = vmatpush1.msra.mxu0 %v86
    %500 = vmatprep.subr.mxu0 0.0
    %501 = vmatpush1.msra.mxu0 %v87
    %502 = vmatprep.subr.mxu0 0.0
    %503 = vmatpush1.msra.mxu0 %v88
    %504 = vmatprep.subr.mxu0 0.0
    %505 = vmatpush1.msra.mxu0 %v89
    %506 = vmatprep.subr.mxu0 0.0
    %507 = vmatpush1.msra.mxu0 %v90
    %508 = vmatprep.subr.mxu0 0.0
    %509 = vmatpush1.msra.mxu0 %v91
    %510 = vmatprep.subr.mxu0 0.0
    %511 = vmatpush1.msra.mxu0 %v92
    %512 = vmatprep.subr.mxu0 0.0
    %513 = vmatpush1.msra.mxu0 %v93
    %514 = vmatprep.subr.mxu0 0.0
    %515 = vmatpush1.msra.mxu0 %v94
    %516 = vmatprep.mubr.f32.mxu0 %v314
    %517 = vmatmul.mubr.f32.gmra.mrb[0].mxu0 %v312
    %v518 = vpop.f32.mrb[0].mxu0
    %v519 = vadd.f32 %v449, %v518
    %v520 = vpop.f32.mrb[0].mxu0
    %521 = vdwg.mxu0
    %522 = vmatprep.subr.mxu0 0.0
    %523 = vmatpush1.msra.mxu0 %v95
    %524 = vmatprep.subr.mxu0 0.0
    %525 = vmatpush1.msra.mxu0 %v96
    %526 = vmatprep.subr.mxu0 0.0
    %527 = vmatpush1.msra.mxu0 %v97
    %528 = vmatprep.subr.mxu0 0.0
    %529 = vmatpush1.msra.mxu0 %v98
    %530 = vmatprep.subr.mxu0 0.0
    %531 = vmatpush1.msra.mxu0 %v99
    %532 = vmatprep.subr.mxu0 0.0
    %533 = vmatpush1.msra.mxu0 %v100
    %534 = vmatprep.subr.mxu0 0.0
    %535 = vmatpush1.msra.mxu0 %v101
    %536 = vmatprep.subr.mxu0 0.0
    %537 = vmatpush1.msra.mxu0 %v102
    %538 = vmatprep.subr.mxu0 0.0
    %539 = vmatpush1.msra.mxu0 %v103
    %540 = vmatprep.subr.mxu0 0.0
    %541 = vmatpush1.msra.mxu0 %v104
    %542 = vmatprep.subr.mxu0 0.0
    %543 = vmatpush1.msra.mxu0 %v105
    %544 = vmatprep.subr.mxu0 0.0
    %545 = vmatpush1.msra.mxu0 %v106
    %546 = vmatprep.subr.mxu0 0.0
    %547 = vmatpush1.msra.mxu0 %v107
    %548 = vmatprep.subr.mxu0 0.0
    %549 = vmatpush1.msra.mxu0 %v108
    %550 = vmatprep.subr.mxu0 0.0
    %551 = vmatpush1.msra.mxu0 %v109
    %552 = vmatprep.subr.mxu0 0.0
    %553 = vmatpush1.msra.mxu0 %v110
    %554 = vmatprep.subr.mxu0 0.0
    %555 = vmatpush1.msra.mxu0 %v111
    %556 = vmatprep.subr.mxu0 0.0
    %557 = vmatpush1.msra.mxu0 %v112
    %558 = vmatprep.subr.mxu0 0.0
    %559 = vmatpush1.msra.mxu0 %v113
    %560 = vmatprep.subr.mxu0 0.0
    %561 = vmatpush1.msra.mxu0 %v114
    %562 = vmatprep.subr.mxu0 0.0
    %563 = vmatpush1.msra.mxu0 %v115
    %564 = vmatprep.subr.mxu0 0.0
    %565 = vmatpush1.msra.mxu0 %v116
    %566 = vmatprep.subr.mxu0 0.0
    %567 = vmatpush1.msra.mxu0 %v117
    %568 = vmatprep.subr.mxu0 0.0
    %569 = vmatpush1.msra.mxu0 %v118
    %570 = vmatprep.subr.mxu0 0.0
    %571 = vmatpush1.msra.mxu0 %v119
    %572 = vmatprep.subr.mxu0 0.0
    %573 = vmatpush1.msra.mxu0 %v120
    %574 = vmatprep.subr.mxu0 0.0
    %575 = vmatpush1.msra.mxu0 %v121
    %576 = vmatprep.subr.mxu0 0.0
    %577 = vmatpush1.msra.mxu0 %v122
    %578 = vmatprep.subr.mxu0 0.0
    %579 = vmatpush1.msra.mxu0 %v123
    %580 = vmatprep.subr.mxu0 0.0
    %581 = vmatpush1.msra.mxu0 %v124
    %582 = vmatprep.subr.mxu0 0.0
    %583 = vmatpush1.msra.mxu0 %v125
    %584 = vmatprep.subr.mxu0 0.0
    %585 = vmatpush1.msra.mxu0 %v126
    %586 = vmatprep.mubr.f32.mxu0 %v330
    %587 = vmatmul.mubr.f32.gmra.mrb[0].mxu0 %v322
    %v588 = vpop.f32.mrb[0].mxu0
    %v589 = vadd.f32 %v519, %v588
    %v590 = vpop.f32.mrb[0].mxu0
    %591 = vdwg.mxu0
    %592 = vmatprep.subr.mxu0 0.0
    %593 = vmatpush1.msra.mxu0 %v127
    %594 = vmatprep.subr.mxu0 0.0
    %595 = vmatpush1.msra.mxu0 %v128
    %596 = vmatprep.subr.mxu0 0.0
    %597 = vmatpush1.msra.mxu0 %v129
    %598 = vmatprep.subr.mxu0 0.0
    %599 = vmatpush1.msra.mxu0 %v130
    %600 = vmatprep.subr.mxu0 0.0
    %601 = vmatpush1.msra.mxu0 %v131
    %602 = vmatprep.subr.mxu0 0.0
    %603 = vmatpush1.msra.mxu0 %v132
    %604 = vmatprep.subr.mxu0 0.0
    %605 = vmatpush1.msra.mxu0 %v133
    %606 = vmatprep.subr.mxu0 0.0
    %607 = vmatpush1.msra.mxu0 %v134
    %608 = vmatprep.subr.mxu0 0.0
    %609 = vmatpush1.msra.mxu0 %v135
    %610 = vmatprep.subr.mxu0 0.0
    %611 = vmatpush1.msra.mxu0 %v136
    %612 = vmatprep.subr.mxu0 0.0
    %613 = vmatpush1.msra.mxu0 %v137
    %614 = vmatprep.subr.mxu0 0.0
    %615 = vmatpush1.msra.mxu0 %v138
    %616 = vmatprep.subr.mxu0 0.0
    %617 = vmatpush1.msra.mxu0 %v139
    %618 = vmatprep.subr.mxu0 0.0
    %619 = vmatpush1.msra.mxu0 %v140
    %620 = vmatprep.subr.mxu0 0.0
    %621 = vmatpush1.msra.mxu0 %v141
    %622 = vmatprep.subr.mxu0 0.0
    %623 = vmatpush1.msra.mxu0 %v142
    %624 = vmatprep.subr.mxu0 0.0
    %625 = vmatpush1.msra.mxu0 %v143
    %626 = vmatprep.subr.mxu0 0.0
    %627 = vmatpush1.msra.mxu0 %v144
    %628 = vmatprep.subr.mxu0 0.0
    %629 = vmatpush1.msra.mxu0 %v145
    %630 = vmatprep.subr.mxu0 0.0
    %631 = vmatpush1.msra.mxu0 %v146
    %632 = vmatprep.subr.mxu0 0.0
    %633 = vmatpush1.msra.mxu0 %v147
    %634 = vmatprep.subr.mxu0 0.0
    %635 = vmatpush1.msra.mxu0 %v148
    %636 = vmatprep.subr.mxu0 0.0
    %637 = vmatpush1.msra.mxu0 %v149
    %638 = vmatprep.subr.mxu0 0.0
    %639 = vmatpush1.msra.mxu0 %v150
    %640 = vmatprep.subr.mxu0 0.0
    %641 = vmatpush1.msra.mxu0 %v151
    %642 = vmatprep.subr.mxu0 0.0
    %643 = vmatpush1.msra.mxu0 %v152
    %644 = vmatprep.subr.mxu0 0.0
    %645 = vmatpush1.msra.mxu0 %v153
    %646 = vmatprep.subr.mxu0 0.0
    %647 = vmatpush1.msra.mxu0 %v154
    %648 = vmatprep.subr.mxu0 0.0
    %649 = vmatpush1.msra.mxu0 %v155
    %650 = vmatprep.subr.mxu0 0.0
    %651 = vmatpush1.msra.mxu0 %v156
    %652 = vmatprep.subr.mxu0 0.0
    %653 = vmatpush1.msra.mxu0 %v157
    %654 = vmatprep.subr.mxu0 0.0
    %655 = vmatpush1.msra.mxu0 %v158
    %656 = vmatprep.mubr.f32.mxu0 %v331
    %657 = vmatmul.mubr.f32.gmra.mrb[0].mxu0 %v329
    %v658 = vpop.f32.mrb[0].mxu0
    %v659 = vadd.f32 %v589, %v658
    %v660 = vpop.f32.mrb[0].mxu0
    %661 = vdwg.mxu0
    %662 = vmatprep.subr.mxu0 0.0
    %663 = vmatpush1.msra.mxu0 %v159
    %664 = vmatprep.subr.mxu0 0.0
    %665 = vmatpush1.msra.mxu0 %v160
    %666 = vmatprep.subr.mxu0 0.0
    %667 = vmatpush1.msra.mxu0 %v161
    %668 = vmatprep.subr.mxu0 0.0
    %669 = vmatpush1.msra.mxu0 %v162
    %670 = vmatprep.subr.mxu0 0.0
    %671 = vmatpush1.msra.mxu0 %v163
    %672 = vmatprep.subr.mxu0 0.0
    %673 = vmatpush1.msra.mxu0 %v164
    %674 = vmatprep.subr.mxu0 0.0
    %675 = vmatpush1.msra.mxu0 %v165
    %676 = vmatprep.subr.mxu0 0.0
    %677 = vmatpush1.msra.mxu0 %v166
    %678 = vmatprep.subr.mxu0 0.0
    %679 = vmatpush1.msra.mxu0 %v167
    %680 = vmatprep.subr.mxu0 0.0
    %681 = vmatpush1.msra.mxu0 %v168
    %682 = vmatprep.subr.mxu0 0.0
    %683 = vmatpush1.msra.mxu0 %v169
    %684 = vmatprep.subr.mxu0 0.0
    %685 = vmatpush1.msra.mxu0 %v170
    %686 = vmatprep.subr.mxu0 0.0
    %687 = vmatpush1.msra.mxu0 %v171
    %688 = vmatprep.subr.mxu0 0.0
    %689 = vmatpush1.msra.mxu0 %v172
    %690 = vmatprep.subr.mxu0 0.0
    %691 = vmatpush1.msra.mxu0 %v173
    %692 = vmatprep.subr.mxu0 0.0
    %693 = vmatpush1.msra.mxu0 %v174
    %694 = vmatprep.subr.mxu0 0.0
    %695 = vmatpush1.msra.mxu0 %v175
    %696 = vmatprep.subr.mxu0 0.0
    %697 = vmatpush1.msra.mxu0 %v176
    %698 = vmatprep.subr.mxu0 0.0
    %699 = vmatpush1.msra.mxu0 %v177
    %700 = vmatprep.subr.mxu0 0.0
    %701 = vmatpush1.msra.mxu0 %v178
    %702 = vmatprep.subr.mxu0 0.0
    %703 = vmatpush1.msra.mxu0 %v179
    %704 = vmatprep.subr.mxu0 0.0
    %705 = vmatpush1.msra.mxu0 %v180
    %706 = vmatprep.subr.mxu0 0.0
    %707 = vmatpush1.msra.mxu0 %v181
    %708 = vmatprep.subr.mxu0 0.0
    %709 = vmatpush1.msra.mxu0 %v182
    %710 = vmatprep.subr.mxu0 0.0
    %711 = vmatpush1.msra.mxu0 %v183
    %712 = vmatprep.subr.mxu0 0.0
    %713 = vmatpush1.msra.mxu0 %v184
    %714 = vmatprep.subr.mxu0 0.0
    %715 = vmatpush1.msra.mxu0 %v185
    %716 = vmatprep.subr.mxu0 0.0
    %717 = vmatpush1.msra.mxu0 %v186
    %718 = vmatprep.subr.mxu0 0.0
    %719 = vmatpush1.msra.mxu0 %v187
    %720 = vmatprep.subr.mxu0 0.0
    %721 = vmatpush1.msra.mxu0 %v188
    %722 = vmatprep.subr.mxu0 0.0
    %723 = vmatpush1.msra.mxu0 %v189
    %724 = vmatprep.subr.mxu0 0.0
    %725 = vmatpush1.msra.mxu0 %v190
    %726 = vmatprep.mubr.f32.mxu0 %v347
    %727 = vmatmul.mubr.f32.gmra.mrb[0].mxu0 %v339
    %v728 = vpop.f32.mrb[0].mxu0
    %v729 = vadd.f32 %v659, %v728
    %v730 = vpop.f32.mrb[0].mxu0
    %731 = vdwg.mxu0
    %732 = vmatprep.subr.mxu0 0.0
    %733 = vmatpush1.msra.mxu0 %v191
    %734 = vmatprep.subr.mxu0 0.0
    %735 = vmatpush1.msra.mxu0 %v192
    %736 = vmatprep.subr.mxu0 0.0
    %737 = vmatpush1.msra.mxu0 %v193
    %738 = vmatprep.subr.mxu0 0.0
    %739 = vmatpush1.msra.mxu0 %v194
    %740 = vmatprep.subr.mxu0 0.0
    %741 = vmatpush1.msra.mxu0 %v195
    %742 = vmatprep.subr.mxu0 0.0
    %743 = vmatpush1.msra.mxu0 %v196
    %744 = vmatprep.subr.mxu0 0.0
    %745 = vmatpush1.msra.mxu0 %v197
    %746 = vmatprep.subr.mxu0 0.0
    %747 = vmatpush1.msra.mxu0 %v198
    %748 = vmatprep.subr.mxu0 0.0
    %749 = vmatpush1.msra.mxu0 %v199
    %750 = vmatprep.subr.mxu0 0.0
    %751 = vmatpush1.msra.mxu0 %v200
    %752 = vmatprep.subr.mxu0 0.0
    %753 = vmatpush1.msra.mxu0 %v201
    %754 = vmatprep.subr.mxu0 0.0
    %755 = vmatpush1.msra.mxu0 %v202
    %756 = vmatprep.subr.mxu0 0.0
    %757 = vmatpush1.msra.mxu0 %v203
    %758 = vmatprep.subr.mxu0 0.0
    %759 = vmatpush1.msra.mxu0 %v204
    %760 = vmatprep.subr.mxu0 0.0
    %761 = vmatpush1.msra.mxu0 %v205
    %762 = vmatprep.subr.mxu0 0.0
    %763 = vmatpush1.msra.mxu0 %v206
    %764 = vmatprep.subr.mxu0 0.0
    %765 = vmatpush1.msra.mxu0 %v207
    %766 = vmatprep.subr.mxu0 0.0
    %767 = vmatpush1.msra.mxu0 %v208
    %768 = vmatprep.subr.mxu0 0.0
    %769 = vmatpush1.msra.mxu0 %v209
    %770 = vmatprep.subr.mxu0 0.0
    %771 = vmatpush1.msra.mxu0 %v210
    %772 = vmatprep.subr.mxu0 0.0
    %773 = vmatpush1.msra.mxu0 %v211
    %774 = vmatprep.subr.mxu0 0.0
    %775 = vmatpush1.msra.mxu0 %v212
    %776 = vmatprep.subr.mxu0 0.0
    %777 = vmatpush1.msra.mxu0 %v213
    %778 = vmatprep.subr.mxu0 0.0
    %779 = vmatpush1.msra.mxu0 %v214
    %780 = vmatprep.subr.mxu0 0.0
    %781 = vmatpush1.msra.mxu0 %v215
    %782 = vmatprep.subr.mxu0 0.0
    %783 = vmatpush1.msra.mxu0 %v216
    %784 = vmatprep.subr.mxu0 0.0
    %785 = vmatpush1.msra.mxu0 %v217
    %786 = vmatprep.subr.mxu0 0.0
    %787 = vmatpush1.msra.mxu0 %v218
    %788 = vmatprep.subr.mxu0 0.0
    %789 = vmatpush1.msra.mxu0 %v219
    %790 = vmatprep.subr.mxu0 0.0
    %791 = vmatpush1.msra.mxu0 %v220
    %792 = vmatprep.subr.mxu0 0.0
    %793 = vmatpush1.msra.mxu0 %v221
    %794 = vmatprep.subr.mxu0 0.0
    %795 = vmatpush1.msra.mxu0 %v222
    %796 = vmatprep.mubr.f32.mxu0 %v348
    %797 = vmatmul.mubr.f32.gmra.mrb[0].mxu0 %v346
    %v798 = vpop.f32.mrb[0].mxu0
    %v799 = vadd.f32 %v729, %v798
    %v800 = vpop.f32.mrb[0].mxu0
    %801 = vdwg.mxu0
    %802 = vmatprep.subr.mxu0 0.0
    %803 = vmatpush1.msra.mxu0 %v223
    %804 = vmatprep.subr.mxu0 0.0
    %805 = vmatpush1.msra.mxu0 %v224
    %806 = vmatprep.subr.mxu0 0.0
    %807 = vmatpush1.msra.mxu0 %v225
    %808 = vmatprep.subr.mxu0 0.0
    %809 = vmatpush1.msra.mxu0 %v226
    %810 = vmatprep.subr.mxu0 0.0
    %811 = vmatpush1.msra.mxu0 %v227
    %812 = vmatprep.subr.mxu0 0.0
    %813 = vmatpush1.msra.mxu0 %v228
    %814 = vmatprep.subr.mxu0 0.0
    %815 = vmatpush1.msra.mxu0 %v229
    %816 = vmatprep.subr.mxu0 0.0
    %817 = vmatpush1.msra.mxu0 %v230
    %818 = vmatprep.subr.mxu0 0.0
    %819 = vmatpush1.msra.mxu0 %v231
    %820 = vmatprep.subr.mxu0 0.0
    %821 = vmatpush1.msra.mxu0 %v232
    %822 = vmatprep.subr.mxu0 0.0
    %823 = vmatpush1.msra.mxu0 %v233
    %824 = vmatprep.subr.mxu0 0.0
    %825 = vmatpush1.msra.mxu0 %v234
    %826 = vmatprep.subr.mxu0 0.0
    %827 = vmatpush1.msra.mxu0 %v235
    %828 = vmatprep.subr.mxu0 0.0
    %829 = vmatpush1.msra.mxu0 %v236
    %830 = vmatprep.subr.mxu0 0.0
    %831 = vmatpush1.msra.mxu0 %v237
    %832 = vmatprep.subr.mxu0 0.0
    %833 = vmatpush1.msra.mxu0 %v238
    %834 = vmatprep.subr.mxu0 0.0
    %835 = vmatpush1.msra.mxu0 %v239
    %836 = vmatprep.subr.mxu0 0.0
    %837 = vmatpush1.msra.mxu0 %v240
    %838 = vmatprep.subr.mxu0 0.0
    %839 = vmatpush1.msra.mxu0 %v241
    %840 = vmatprep.subr.mxu0 0.0
    %841 = vmatpush1.msra.mxu0 %v242
    %842 = vmatprep.subr.mxu0 0.0
    %843 = vmatpush1.msra.mxu0 %v243
    %844 = vmatprep.subr.mxu0 0.0
    %845 = vmatpush1.msra.mxu0 %v244
    %846 = vmatprep.subr.mxu0 0.0
    %847 = vmatpush1.msra.mxu0 %v245
    %848 = vmatprep.subr.mxu0 0.0
    %849 = vmatpush1.msra.mxu0 %v246
    %850 = vmatprep.subr.mxu0 0.0
    %851 = vmatpush1.msra.mxu0 %v247
    %852 = vmatprep.subr.mxu0 0.0
    %853 = vmatpush1.msra.mxu0 %v248
    %854 = vmatprep.subr.mxu0 0.0
    %855 = vmatpush1.msra.mxu0 %v249
    %856 = vmatprep.subr.mxu0 0.0
    %857 = vmatpush1.msra.mxu0 %v250
    %858 = vmatprep.subr.mxu0 0.0
    %859 = vmatpush1.msra.mxu0 %v251
    %860 = vmatprep.subr.mxu0 0.0
    %861 = vmatpush1.msra.mxu0 %v252
    %862 = vmatprep.subr.mxu0 0.0
    %863 = vmatpush1.msra.mxu0 %v253
    %864 = vmatprep.subr.mxu0 0.0
    %865 = vmatpush1.msra.mxu0 %v254
    %866 = vmatprep.mubr.f32.mxu0 %v364
    %867 = vmatmul.mubr.f32.gmra.mrb[0].mxu0 %v356
    %v868 = vpop.f32.mrb[0].mxu0
    %v869 = vadd.f32 %v799, %v868
    %v870 = vpop.f32.mrb[0].mxu0
    %871 = vdwg.mxu0
    %872 = vmatprep.subr.mxu0 0.0
    %873 = vmatpush1.msra.mxu0 %v255
    %874 = vmatprep.subr.mxu0 0.0
    %875 = vmatpush1.msra.mxu0 %v256
    %876 = vmatprep.subr.mxu0 0.0
    %877 = vmatpush1.msra.mxu0 %v257
    %878 = vmatprep.subr.mxu0 0.0
    %879 = vmatpush1.msra.mxu0 %v258
    %880 = vmatprep.subr.mxu0 0.0
    %881 = vmatpush1.msra.mxu0 %v259
    %882 = vmatprep.subr.mxu0 0.0
    %883 = vmatpush1.msra.mxu0 %v260
    %884 = vmatprep.subr.mxu0 0.0
    %885 = vmatpush1.msra.mxu0 %v261
    %886 = vmatprep.subr.mxu0 0.0
    %887 = vmatpush1.msra.mxu0 %v262
    %888 = vmatprep.subr.mxu0 0.0
    %889 = vmatpush1.msra.mxu0 %v263
    %890 = vmatprep.subr.mxu0 0.0
    %891 = vmatpush1.msra.mxu0 %v264
    %892 = vmatprep.subr.mxu0 0.0
    %893 = vmatpush1.msra.mxu0 %v265
    %894 = vmatprep.subr.mxu0 0.0
    %895 = vmatpush1.msra.mxu0 %v266
    %896 = vmatprep.subr.mxu0 0.0
    %897 = vmatpush1.msra.mxu0 %v267
    %898 = vmatprep.subr.mxu0 0.0
    %899 = vmatpush1.msra.mxu0 %v268
    %900 = vmatprep.subr.mxu0 0.0
    %901 = vmatpush1.msra.mxu0 %v269
    %902 = vmatprep.subr.mxu0 0.0
    %903 = vmatpush1.msra.mxu0 %v270
    %904 = vmatprep.subr.mxu0 0.0
    %905 = vmatpush1.msra.mxu0 %v271
    %906 = vmatprep.subr.mxu0 0.0
    %907 = vmatpush1.msra.mxu0 %v272
    %908 = vmatprep.subr.mxu0 0.0
    %909 = vmatpush1.msra.mxu0 %v273
    %910 = vmatprep.subr.mxu0 0.0
    %911 = vmatpush1.msra.mxu0 %v274
    %912 = vmatprep.subr.mxu0 0.0
    %913 = vmatpush1.msra.mxu0 %v275
    %914 = vmatprep.subr.mxu0 0.0
    %915 = vmatpush1.msra.mxu0 %v276
    %916 = vmatprep.subr.mxu0 0.0
    %917 = vmatpush1.msra.mxu0 %v277
    %918 = vmatprep.subr.mxu0 0.0
    %919 = vmatpush1.msra.mxu0 %v278
    %920 = vmatprep.subr.mxu0 0.0
    %921 = vmatpush1.msra.mxu0 %v279
    %922 = vmatprep.subr.mxu0 0.0
    %923 = vmatpush1.msra.mxu0 %v280
    %924 = vmatprep.subr.mxu0 0.0
    %925 = vmatpush1.msra.mxu0 %v281
    %926 = vmatprep.subr.mxu0 0.0
    %927 = vmatpush1.msra.mxu0 %v282
    %928 = vmatprep.subr.mxu0 0.0
    %929 = vmatpush1.msra.mxu0 %v283
    %930 = vmatprep.subr.mxu0 0.0
    %931 = vmatpush1.msra.mxu0 %v284
    %932 = vmatprep.subr.mxu0 0.0
    %933 = vmatpush1.msra.mxu0 %v285
    %934 = vmatprep.subr.mxu0 0.0
    %935 = vmatpush1.msra.mxu0 %v286
    %936 = vmatprep.mubr.f32.mxu0 %v365
    %937 = vmatmul.mubr.f32.gmra.mrb[0].mxu0 %v363
    %v938 = vpop.f32.mrb[0].mxu0
    %v939 = vadd.f32 %v869, %v938
    %v940 = vpop.f32.mrb[0].mxu0
    %941 = vdwg.mxu0
    %v942 = vmax.f32 %v939, 0.0
    %v943 = vld [vmem:[%s3] sm:$0xff]
    %v944 = vld [vmem:[%s3 + $0x8] sm:$0xff]
    %v945 = vld [vmem:[%s3 + $0x10] sm:$0xff]
    %v946 = vld [vmem:[%s3 + $0x18] sm:$0xff]
    %v947 = vld [vmem:[%s3 + $0x20] sm:$0xff]
    %v948 = vld [vmem:[%s3 + $0x28] sm:$0xff]
    %v949 = vld [vmem:[%s3 + $0x30] sm:$0xff]
    %v950 = vld [vmem:[%s3 + $0x38] sm:$0xff]
    %v951 = vld [vmem:[%s3 + $0x40] sm:$0xff]
    %v952 = vld [vmem:[%s3 + $0x48] sm:$0xff]
    %v953 = vld [vmem:[%s3 + $0x50] sm:$0xff]
    %v954 = vld [vmem:[%s3 + $0x58] sm:$0xff]
    %v955 = vld [vmem:[%s3 + $0x60] sm:$0xff]
    %v956 = vld [vmem:[%s3 + $0x68] sm:$0xff]
    %v957 = vld [vmem:[%s3 + $0x70] sm:$0xff]
    %v958 = vld [vmem:[%s3 + $0x78] sm:$0xff]
    %v959 = vld [vmem:[%s4] sm:$0x1]
    %v961 = vlaneseq
    %v962 = vshrl.u32 %v961, 7
    %v963 = vsub.s32 0, %v962
    %v964 = vrot.slane %v959, %v963
    %966 = vmatprep.subr.mxu0 0.0
    %967 = vmatpush1.msra.mxu0 %v943
    %968 = vmatprep.subr.mxu0 0.0
    %969 = vmatpush1.msra.mxu0 %v944
    %970 = vmatprep.subr.mxu0 0.0
    %971 = vmatpush1.msra.mxu0 %v945
    %972 = vmatprep.subr.mxu0 0.0
    %973 = vmatpush1.msra.mxu0 %v946
    %974 = vmatprep.subr.mxu0 0.0
    %975 = vmatpush1.msra.mxu0 %v947
    %976 = vmatprep.subr.mxu0 0.0
    %977 = vmatpush1.msra.mxu0 %v948
    %978 = vmatprep.subr.mxu0 0.0
    %979 = vmatpush1.msra.mxu0 %v949
    %980 = vmatprep.subr.mxu0 0.0
    %981 = vmatpush1.msra.mxu0 %v950
    %982 = vmatprep.subr.mxu0 0.0
    %983 = vmatpush1.msra.mxu0 %v951
    %984 = vmatprep.subr.mxu0 0.0
    %985 = vmatpush1.msra.mxu0 %v952
    %986 = vmatprep.subr.mxu0 0.0
    %987 = vmatpush1.msra.mxu0 %v953
    %988 = vmatprep.subr.mxu0 0.0
    %989 = vmatpush1.msra.mxu0 %v954
    %990 = vmatprep.subr.mxu0 0.0
    %991 = vmatpush1.msra.mxu0 %v955
    %992 = vmatprep.subr.mxu0 0.0
    %993 = vmatpush1.msra.mxu0 %v956
    %994 = vmatprep.subr.mxu0 0.0
    %995 = vmatpush1.msra.mxu0 %v957
    %996 = vmatprep.subr.mxu0 0.0
    %997 = vmatpush1.msra.mxu0 %v958
    %998 = vmatprep.subr.mxu0 0.0
    %999 = vmatpush1.msra.mxu0 0.0
    %1000 = vmatprep.subr.mxu0 0.0
    %1001 = vmatpush1.msra.mxu0 0.0
    %1002 = vmatprep.subr.mxu0 0.0
    %1003 = vmatpush1.msra.mxu0 0.0
    %1004 = vmatprep.subr.mxu0 0.0
    %1005 = vmatpush1.msra.mxu0 0.0
    %1006 = vmatprep.subr.mxu0 0.0
    %1007 = vmatpush1.msra.mxu0 0.0
    %1008 = vmatprep.subr.mxu0 0.0
    %1009 = vmatpush1.msra.mxu0 0.0
    %1010 = vmatprep.subr.mxu0 0.0
    %1011 = vmatpush1.msra.mxu0 0.0
    %1012 = vmatprep.subr.mxu0 0.0
    %1013 = vmatpush1.msra.mxu0 0.0
    %1014 = vmatprep.subr.mxu0 0.0
    %1015 = vmatpush1.msra.mxu0 0.0
    %1016 = vmatprep.subr.mxu0 0.0
    %1017 = vmatpush1.msra.mxu0 0.0
    %1018 = vmatprep.subr.mxu0 0.0
    %1019 = vmatpush1.msra.mxu0 0.0
    %1020 = vmatprep.subr.mxu0 0.0
    %1021 = vmatpush1.msra.mxu0 0.0
    %1022 = vmatprep.subr.mxu0 0.0
    %1023 = vmatpush1.msra.mxu0 0.0
    %1024 = vmatprep.subr.mxu0 0.0
    %1025 = vmatpush1.msra.mxu0 0.0
    %1026 = vmatprep.subr.mxu0 0.0
    %1027 = vmatpush1.msra.mxu0 0.0
    %1028 = vmatprep.subr.mxu0 0.0
    %1029 = vmatpush1.msra.mxu0 0.0
    %1030 = vmatprep.mubr.f32.mxu0 0.0
    %1031 = vmatmul.mubr.f32.gmra.mrb[0].mxu0 %v942
    %v1032 = vpop.f32.mrb[0].mxu0
    %v1033 = vadd.f32 %v964, %v1032
    %v1034 = vpop.f32.mrb[0].mxu0
    %1035 = vdwg.mxu0
    %v1036 = vmax.f32 %v1033, 0.0
    %v1037 = vld [vmem:[%s5] sm:$0xff]
    %v1038 = vld [vmem:[%s5 + $0x8] sm:$0xff]
    %v1039 = vld [vmem:[%s5 + $0x10] sm:$0xff]
    %v1040 = vld [vmem:[%s5 + $0x18] sm:$0xff]
    %v1041 = vld [vmem:[%s5 + $0x20] sm:$0xff]
    %v1042 = vld [vmem:[%s5 + $0x28] sm:$0xff]
    %v1043 = vld [vmem:[%s5 + $0x30] sm:$0xff]
    %v1044 = vld [vmem:[%s5 + $0x38] sm:$0xff]
    %v1045 = vld [vmem:[%s5 + $0x40] sm:$0xff]
    %v1046 = vld [vmem:[%s5 + $0x48] sm:$0xff]
    %v1047 = vld [vmem:[%s5 + $0x50] sm:$0xff]
    %v1048 = vld [vmem:[%s5 + $0x58] sm:$0xff]
    %v1049 = vld [vmem:[%s5 + $0x60] sm:$0xff]
    %v1050 = vld [vmem:[%s5 + $0x68] sm:$0xff]
    %v1051 = vld [vmem:[%s5 + $0x70] sm:$0xff]
    %v1052 = vld [vmem:[%s5 + $0x78] sm:$0xff]
    %v1053 = vld [vmem:[%s6] sm:$0x1]
    %v1055 = vlaneseq
    %v1056 = vshrl.u32 %v1055, 7
    %v1057 = vsub.s32 0, %v1056
    %v1058 = vrot.slane %v1053, %v1057
    %1060 = vmatprep.subr.mxu0 0.0
    %1061 = vmatpush1.msra.mxu0 %v1037
    %1062 = vmatprep.subr.mxu0 0.0
    %1063 = vmatpush1.msra.mxu0 %v1038
    %1064 = vmatprep.subr.mxu0 0.0
    %1065 = vmatpush1.msra.mxu0 %v1039
    %1066 = vmatprep.subr.mxu0 0.0
    %1067 = vmatpush1.msra.mxu0 %v1040
    %1068 = vmatprep.subr.mxu0 0.0
    %1069 = vmatpush1.msra.mxu0 %v1041
    %1070 = vmatprep.subr.mxu0 0.0
    %1071 = vmatpush1.msra.mxu0 %v1042
    %1072 = vmatprep.subr.mxu0 0.0
    %1073 = vmatpush1.msra.mxu0 %v1043
    %1074 = vmatprep.subr.mxu0 0.0
    %1075 = vmatpush1.msra.mxu0 %v1044
    %1076 = vmatprep.subr.mxu0 0.0
    %1077 = vmatpush1.msra.mxu0 %v1045
    %1078 = vmatprep.subr.mxu0 0.0
    %1079 = vmatpush1.msra.mxu0 %v1046
    %1080 = vmatprep.subr.mxu0 0.0
    %1081 = vmatpush1.msra.mxu0 %v1047
    %1082 = vmatprep.subr.mxu0 0.0
    %1083 = vmatpush1.msra.mxu0 %v1048
    %1084 = vmatprep.subr.mxu0 0.0
    %1085 = vmatpush1.msra.mxu0 %v1049
    %1086 = vmatprep.subr.mxu0 0.0
    %1087 = vmatpush1.msra.mxu0 %v1050
    %1088 = vmatprep.subr.mxu0 0.0
    %1089 = vmatpush1.msra.mxu0 %v1051
    %1090 = vmatprep.subr.mxu0 0.0
    %1091 = vmatpush1.msra.mxu0 %v1052
    %1092 = vmatprep.subr.mxu0 0.0
    %1093 = vmatpush1.msra.mxu0 0.0
    %1094 = vmatprep.subr.mxu0 0.0
    %1095 = vmatpush1.msra.mxu0 0.0
    %1096 = vmatprep.subr.mxu0 0.0
    %1097 = vmatpush1.msra.mxu0 0.0
    %1098 = vmatprep.subr.mxu0 0.0
    %1099 = vmatpush1.msra.mxu0 0.0
    %1100 = vmatprep.subr.mxu0 0.0
    %1101 = vmatpush1.msra.mxu0 0.0
    %1102 = vmatprep.subr.mxu0 0.0
    %1103 = vmatpush1.msra.mxu0 0.0
    %1104 = vmatprep.subr.mxu0 0.0
    %1105 = vmatpush1.msra.mxu0 0.0
    %1106 = vmatprep.subr.mxu0 0.0
    %1107 = vmatpush1.msra.mxu0 0.0
    %1108 = vmatprep.subr.mxu0 0.0
    %1109 = vmatpush1.msra.mxu0 0.0
    %1110 = vmatprep.subr.mxu0 0.0
    %1111 = vmatpush1.msra.mxu0 0.0
    %1112 = vmatprep.subr.mxu0 0.0
    %1113 = vmatpush1.msra.mxu0 0.0
    %1114 = vmatprep.subr.mxu0 0.0
    %1115 = vmatpush1.msra.mxu0 0.0
    %1116 = vmatprep.subr.mxu0 0.0
    %1117 = vmatpush1.msra.mxu0 0.0
    %1118 = vmatprep.subr.mxu0 0.0
    %1119 = vmatpush1.msra.mxu0 0.0
    %1120 = vmatprep.subr.mxu0 0.0
    %1121 = vmatpush1.msra.mxu0 0.0
    %1122 = vmatprep.subr.mxu0 0.0
    %1123 = vmatpush1.msra.mxu0 0.0
    %1124 = vmatprep.mubr.f32.mxu0 0.0
    %1125 = vmatmul.mubr.f32.gmra.mrb[0].mxu0 %v1036
    %v1126 = vpop.f32.mrb[0].mxu0
    %v1127 = vadd.f32 %v1058, %v1126
    %v1128 = vpop.f32.mrb[0].mxu0
    %1129 = vdwg.mxu0
    %v1130 = vlaneseq
    %v1131 = vand.u32 %v1130, 127
    %vm1132 = vcmp.lt.s32.totalorder %v1131, 10
    %v1133 = vsel %vm1132, %v1127, -inf
    %vm1134 = vcmask 1041408
    %v1135 = vsel %vm1134, %v1133, -inf
    %1136 = vmax.xlane.f32.xlu0 %v1135
    %v1137 = vpop.xlane.xlu0 %1136
    %v1138 = vsub.f32 %v1133, %v1137
    %v1139 = vmul.f32 %v1138, 1.442695
    %v1140 = vpow.pop %v1139
    %v1141 = vsel %vm1134, %v1140, 0.0
    %1142 = vadd.xlane.f32.xlu0 %v1141
    %v1143 = vpop.xlane.xlu0 %1142
    %v1144 = vrcp.pop %v1143
    %v1145 = vmul.f32 %v1140, %v1144
    %1146 = vst [vmem:[#allocation2] sm:$0x3] %v1145
    // Predicated region
    $region30: #{dnn_forward.5} parent=1 // pred_check
      _
    $region31: #{dnn_forward.5} parent=1 // pred_check_branch
      %1148 = sbr.rel (0) target = $region33
    $region32: #{dnn_forward.5} parent=1 // pred_region
      %s1150 = ssub.s32 32, 32
      %1151 = vsyncadd [#allocation3], %s1150
      %s1153 = sshll.u32 [#allocation2], 4
      %s1154 = int_to_ptr.vmem [resolvable:$true] %s1153
      %1156 = dma.vmem_to_hbm [thread:$0]  %s1154, 32, %s7, [#allocation3]
    $region33: #{dnn_forward.5} parent=1 // pred_fallthru
      _
    // Predicated region
    $region34: #{dnn_forward.5} parent=1 // pred_check
      _
    $region35: #{dnn_forward.5} parent=1 // pred_check_branch
      %1158 = sbr.rel (0) target = $region37
    $region36: #{dnn_forward.5} parent=1 // pred_region
      %1159 = dma.done [#allocation3], 32
    $region37: #{dnn_forward.5} parent=1 // pred_fallthru
      _
    %1160 = vsyncpa [#allocation3], 1

</llo_original>
